<compile_context>
chip_gen: v7x
topology: tpu7x:2x2x1
jax: 0.10.0
libtpu: 0.0.40
codegen_flags: <defaults>
</compile_context>

<pallas_src>
import functools

import jax
import jax.numpy as jnp
import numpy as np
from jax import lax
from jax.experimental import pallas as pl
from jax.experimental.pallas import tpu as pltpu


def _vmem_spec():
    return pl.BlockSpec(memory_space=pltpu.MemorySpace.VMEM)


# ----------------------- positional table (host constant) --------------------

def _create_embeddings(embed_dim, max_seq):
    """Exact replication of Embeddings.create_embeddings (including its bug)."""
    ret = []
    for pos in range(max_seq):
        temp_sin = []
        for j in range(0, embed_dim, 2):
            temp_sin.append(np.sin(pos / (10 ** 4) ** (2 * (j // 2) / embed_dim)))
        temp_cos = []
        for j in range(1, embed_dim, 2):
            temp_cos.append(np.cos(pos / (10 ** 4) ** (2 * (j // 2) / embed_dim)))
        temp = []
        for _ in range(0, embed_dim):
            # `j` intentionally retains its final value from the cos loop above;
            # this mirrors the reference code, which fills the whole row with a
            # single value.
            if j % 2 == 0:
                temp.append(temp_sin[j // 2])
            else:
                temp.append(temp_cos[j // 2])
        ret.append(temp)
    return np.asarray(ret, dtype=np.float32)


# ------------------------------ fused kernel ---------------------------------

def _transformer_kernel(x_ref, pos_ref, eg_ref, eb_ref,
                        inw_ref, inb_ref, ow_ref, ob_ref,
                        l1g_ref, l1b_ref, f1w_ref, f1b_ref,
                        f2w_ref, f2b_ref, l2g_ref, l2b_ref,
                        fw_ref, fb_ref,
                        o_ref,
                        *, num_layers, num_heads, seq_len, batch, embed_dim):
    L, N, E, H = seq_len, batch, embed_dim, num_heads
    hd = E // H
    scale = 1.0 / float(np.sqrt(hd))

    def layer_norm(y, g, b, eps):
        mean = jnp.mean(y, axis=-1, keepdims=True)
        cent = y - mean
        var = jnp.mean(cent * cent, axis=-1, keepdims=True)
        return cent * lax.rsqrt(var + eps) * g + b

    # ---- Embeddings: positional add + LayerNorm(eps=1e-9) -------------------
    # x rows are batch-major: rows [n*L, (n+1)*L) hold batch item n.
    # Positional add: row n*L + l gets table[l]  (module quirk, see header).
    pos2 = jnp.concatenate([pos_ref[...]] * N, axis=0)            # (N*L, E)
    h = layer_norm(x_ref[...] + pos2, eg_ref[...], eb_ref[...], 1e-9)

    # ---- encoder layers (static unroll; residual stream stays in vregs) -----
    for li in range(num_layers):
        inw = inw_ref[li]        # (E, 3E)   pre-transposed in_proj
        inb = inb_ref[li]        # (1, 3E)
        ow = ow_ref[li]          # (E, E)    pre-transposed out_proj
        ob = ob_ref[li]          # (1, E)

        # Single QKV projection over all N*L rows — one MXU matmul per layer.
        qkv = jnp.dot(h, inw, preferred_element_type=jnp.float32) + inb
        qkv3 = qkv.reshape(N, L, 3 * E)
        q = qkv3[..., 0:E] * scale
        k = qkv3[..., E:2 * E]
        v = qkv3[..., 2 * E:3 * E]

        # Per-head attention, batched over the batch axis (3-D einsums).
        heads = []
        for hh in range(H):
            sl = slice(hh * hd, (hh + 1) * hd)
            s = jnp.einsum('nld,nmd->nlm', q[..., sl], k[..., sl],
                           preferred_element_type=jnp.float32)     # (N, L, L)
            m = jnp.max(s, axis=-1, keepdims=True)
            p = jnp.exp(s - m)
            p = p * pl.reciprocal(jnp.sum(p, axis=-1, keepdims=True), approx=True)
            heads.append(jnp.einsum('nlm,nmd->nld', p, v[..., sl],
                                    preferred_element_type=jnp.float32))
        ctx = jnp.concatenate(heads, axis=-1).reshape(N * L, E)

        # Single out-projection over all N*L rows — one K=E MXU matmul.
        attn = jnp.dot(ctx, ow, preferred_element_type=jnp.float32) + ob

        # residual + LN1 + FFN(ReLU, ReLU) + residual + LN2 (row-wise, 2-D)
        out = layer_norm(attn + h, l1g_ref[li], l1b_ref[li], 1e-5)
        fc = jnp.maximum(jnp.dot(out, f1w_ref[li],
                                 preferred_element_type=jnp.float32) + f1b_ref[li], 0.0)
        fc = jnp.maximum(jnp.dot(fc, f2w_ref[li],
                                 preferred_element_type=jnp.float32) + f2b_ref[li], 0.0)
        h = layer_norm(out + fc, l2g_ref[li], l2b_ref[li], 1e-5)

    # ---- torch.max(x, dim=1): max over the batch axis ----
    xmax = h[0:L, :]
    for n in range(1, N):
        xmax = jnp.maximum(xmax, h[n * L:(n + 1) * L, :])

    # ---- final Linear + LogSoftmax ----
    logits = jnp.dot(xmax, fw_ref[...], preferred_element_type=jnp.float32) + fb_ref[...]
    z = logits - jnp.max(logits, axis=-1, keepdims=True)
    o_ref[...] = z - jnp.log(jnp.sum(jnp.exp(z), axis=-1, keepdims=True))


# ------------------------------ wrapper ---------------------------------------

@functools.partial(jax.jit, static_argnames=("num_heads",))
def transformer_encoder_forward(params, x_lne, *, num_heads):
    L, N, E = x_lne.shape
    nl = params["inw"].shape[0]
    Hs = params["f1w"].shape[-1]
    O = params["fw"].shape[-1]

    # (L, N, E) -> batch-major rows (one small fused transpose on the host;
    # the positional-table tile and all other layout work happen in-kernel).
    x2d = jnp.transpose(x_lne, (1, 0, 2)).reshape(N * L, E)
    pos = params["pos_table"][:L, :E]                               # (L, E)

    kernel = functools.partial(
        _transformer_kernel, num_layers=nl, num_heads=num_heads,
        seq_len=L, batch=N, embed_dim=E)

    inputs = (x2d, pos, params["eg"], params["eb"],
              params["inw"], params["inb"], params["ow"], params["ob"],
              params["l1g"], params["l1b"], params["f1w"], params["f1b"],
              params["f2w"], params["f2b"], params["l2g"], params["l2b"],
              params["fw"], params["fb"])

    hd = E // num_heads
    flops = nl * (2 * N * L * E * 3 * E              # fused qkv projection
                  + num_heads * N * 4 * L * L * hd   # scores + attn@V
                  + 2 * N * L * E * E                # fused out projection
                  + 4 * N * L * E * Hs)              # two FFN matmuls
    flops += 2 * L * E * O
    transcendentals = nl * N * num_heads * L * L + L * O
    bytes_accessed = sum(int(np.prod(a.shape)) * 4 for a in inputs) + L * O * 4

    return pl.pallas_call(
        kernel,
        out_shape=jax.ShapeDtypeStruct((L, O), jnp.float32),
        in_specs=[_vmem_spec()] * len(inputs),
        out_specs=_vmem_spec(),
        cost_estimate=pl.CostEstimate(flops=flops,
                                      transcendentals=transcendentals,
                                      bytes_accessed=bytes_accessed),
    )(*inputs)


# ------------------------------ init -------------------------------------------

def init_transformer_encoder(key, embed_dim, max_seq, num_layers, num_heads,
                             hidden_size, output_size):
    """Deterministic params in kernel-ready layout (weights pre-transposed)."""
    E, Hs, O = embed_dim, hidden_size, output_size
    keys = jax.random.split(key, num_layers * 8 + 2)

    def uni(k, shape, fan_in):
        b = 1.0 / np.sqrt(fan_in)
        return jax.random.uniform(k, shape, jnp.float32, -b, b)

    inw, inb, ow, ob = [], [], [], []
    f1w, f1b, f2w, f2b = [], [], [], []
    l1g, l1b, l2g, l2b = [], [], [], []
    ki = 0
    for _ in range(num_layers):
        inw.append(uni(keys[ki], (E, 3 * E), E)); ki += 1
        inb.append(uni(keys[ki], (1, 3 * E), E)); ki += 1
        ow.append(uni(keys[ki], (E, E), E)); ki += 1
        ob.append(uni(keys[ki], (1, E), E)); ki += 1
        f1w.append(uni(keys[ki], (E, Hs), E)); ki += 1
        f1b.append(uni(keys[ki], (1, Hs), E)); ki += 1
        f2w.append(uni(keys[ki], (Hs, E), Hs)); ki += 1
        f2b.append(uni(keys[ki], (1, E), Hs)); ki += 1
        l1g.append(jnp.ones((1, E), jnp.float32))
        l1b.append(jnp.zeros((1, E), jnp.float32))
        l2g.append(jnp.ones((1, E), jnp.float32))
        l2b.append(jnp.zeros((1, E), jnp.float32))

    return dict(
        pos_table=jnp.asarray(_create_embeddings(E, max_seq)),
        eg=jnp.ones((1, E), jnp.float32), eb=jnp.zeros((1, E), jnp.float32),
        inw=jnp.stack(inw), inb=jnp.stack(inb),
        ow=jnp.stack(ow), ob=jnp.stack(ob),
        l1g=jnp.stack(l1g), l1b=jnp.stack(l1b),
        f1w=jnp.stack(f1w), f1b=jnp.stack(f1b),
        f2w=jnp.stack(f2w), f2b=jnp.stack(f2b),
        l2g=jnp.stack(l2g), l2b=jnp.stack(l2b),
        fw=uni(keys[ki], (E, O), E), fb=uni(keys[ki + 1], (1, O), E),
    )


# ------------------------- pure-JAX reference check ----------------------------

def _reference_forward(params, x, num_heads):
    L, N, E = x.shape
    nl = params["inw"].shape[0]
    hd = E // num_heads

    def ln(y, g, b, eps):
        m = jnp.mean(y, axis=-1, keepdims=True)
        v = jnp.mean((y - m) ** 2, axis=-1, keepdims=True)
        return (y - m) / jnp.sqrt(v + eps) * g + b

    h = x + params["pos_table"][:L, None, :E]
    h = ln(h, params["eg"][0], params["eb"][0], 1e-9)
    for li in range(nl):
        qkv = jnp.einsum("lne,ef->lnf", h, params["inw"][li],
                         precision="highest") + params["inb"][li][0]
        q = (qkv[..., :E] / np.sqrt(hd)).reshape(L, N, num_heads, hd)
        k = qkv[..., E:2 * E].reshape(L, N, num_heads, hd)
        v = qkv[..., 2 * E:].reshape(L, N, num_heads, hd)
        s = jnp.einsum("lnhd,mnhd->nhlm", q, k, precision="highest")
        p = jax.nn.softmax(s, axis=-1)
        ctx = jnp.einsum("nhlm,mnhd->lnhd", p, v,
                         precision="highest").reshape(L, N, E)
        attn = jnp.einsum("lne,ef->lnf", ctx, params["ow"][li],
                          precision="highest") + params["ob"][li][0]
        out = ln(attn + h, params["l1g"][li][0], params["l1b"][li][0], 1e-5)
        fc = jax.nn.relu(jnp.einsum("lne,eh->lnh", out, params["f1w"][li],
                                    precision="highest") + params["f1b"][li][0])
        fc = jax.nn.relu(jnp.einsum("lnh,he->lne", fc, params["f2w"][li],
                                    precision="highest") + params["f2b"][li][0])
        h = ln(out + fc, params["l2g"][li][0], params["l2b"][li][0], 1e-5)
    hm = jnp.max(h, axis=1)
    logits = hm @ params["fw"] + params["fb"][0]
    return jax.nn.log_softmax(logits, axis=-1)


# ---------------------------------- main ----------------------------------------

if __name__ == "__main__":
    key = jax.random.PRNGKey(0)
    pkey, xkey = jax.random.split(key)

    # Shapes implied by the module: x is (seq, batch, embed) for batch_first=False MHA.
    max_seq, batch, embed_dim = 8, 2, 32
    num_layers, num_heads, hidden_size, output_size = 2, 4, 32, 8

    params = init_transformer_encoder(pkey, embed_dim, max_seq, num_layers,
                                      num_heads, hidden_size, output_size)
    x = jax.random.normal(xkey, (max_seq, batch, embed_dim), jnp.float32)

    out = jax.block_until_ready(
        transformer_encoder_forward(params, x, num_heads=num_heads))
    ref = jax.block_until_ready(_reference_forward(params, x, num_heads))

    assert out.shape == ref.shape == (max_seq, output_size), (out.shape, ref.shape)
    np.testing.assert_allclose(np.asarray(out), np.asarray(ref),
                               rtol=1e-2, atol=1e-2)
    print("KERNEL_OK")
</pallas_src>

<mosaic_0001>
module attributes {stable_mosaic.version = 11 : i64} {
  func.func @_transformer_kernel(%arg0: memref<16x32xf32, #tpu.memory_space<vmem>>, %arg1: memref<8x32xf32, #tpu.memory_space<vmem>>, %arg2: memref<1x32xf32, #tpu.memory_space<vmem>>, %arg3: memref<1x32xf32, #tpu.memory_space<vmem>>, %arg4: memref<2x32x96xf32, #tpu.memory_space<vmem>>, %arg5: memref<2x1x96xf32, #tpu.memory_space<vmem>>, %arg6: memref<2x32x32xf32, #tpu.memory_space<vmem>>, %arg7: memref<2x1x32xf32, #tpu.memory_space<vmem>>, %arg8: memref<2x1x32xf32, #tpu.memory_space<vmem>>, %arg9: memref<2x1x32xf32, #tpu.memory_space<vmem>>, %arg10: memref<2x32x32xf32, #tpu.memory_space<vmem>>, %arg11: memref<2x1x32xf32, #tpu.memory_space<vmem>>, %arg12: memref<2x32x32xf32, #tpu.memory_space<vmem>>, %arg13: memref<2x1x32xf32, #tpu.memory_space<vmem>>, %arg14: memref<2x1x32xf32, #tpu.memory_space<vmem>>, %arg15: memref<2x1x32xf32, #tpu.memory_space<vmem>>, %arg16: memref<32x8xf32, #tpu.memory_space<vmem>>, %arg17: memref<1x8xf32, #tpu.memory_space<vmem>>, %arg18: memref<8x8xf32, #tpu.memory_space<vmem>>) attributes {dimension_semantics = [], scalar_prefetch = 0 : i64, scratch_operands = 0 : i64, tpu.core_type = #tpu.core_type<tc>} {
    %c0 = arith.constant 0 : index
    %c0_0 = arith.constant 0 : index
    %0 = vector.load %arg1[%c0, %c0_0] : memref<8x32xf32, #tpu.memory_space<vmem>>, vector<8x32xf32>
    %1 = tpu.concatenate %0, %0 in 0 : vector<8x32xf32>, vector<8x32xf32> -> vector<16x32xf32>
    %c0_1 = arith.constant 0 : index
    %c0_2 = arith.constant 0 : index
    %2 = vector.load %arg0[%c0_1, %c0_2] : memref<16x32xf32, #tpu.memory_space<vmem>>, vector<16x32xf32>
    %3 = arith.addf %2, %1 : vector<16x32xf32>
    %c0_3 = arith.constant 0 : index
    %c0_4 = arith.constant 0 : index
    %4 = vector.load %arg2[%c0_3, %c0_4] : memref<1x32xf32, #tpu.memory_space<vmem>>, vector<1x32xf32>
    %c0_5 = arith.constant 0 : index
    %c0_6 = arith.constant 0 : index
    %5 = vector.load %arg3[%c0_5, %c0_6] : memref<1x32xf32, #tpu.memory_space<vmem>>, vector<1x32xf32>
    %cst = arith.constant dense<0.000000e+00> : vector<16xf32>
    %6 = vector.multi_reduction <add>, %3, %cst [1] : vector<16x32xf32> to vector<16xf32>
    %7 = vector.shape_cast %6 : vector<16xf32> to vector<16x1xf32>
    %cst_7 = arith.constant 3.200000e+01 : f32
    %8 = vector.broadcast %cst_7 : f32 to vector<16x1xf32>
    %9 = arith.divf %7, %8 : vector<16x1xf32>
    %10 = vector.broadcast %9 : vector<16x1xf32> to vector<16x32xf32>
    %11 = arith.subf %3, %10 : vector<16x32xf32>
    %12 = arith.mulf %11, %11 : vector<16x32xf32>
    %cst_8 = arith.constant dense<0.000000e+00> : vector<16xf32>
    %13 = vector.multi_reduction <add>, %12, %cst_8 [1] : vector<16x32xf32> to vector<16xf32>
    %14 = vector.shape_cast %13 : vector<16xf32> to vector<16x1xf32>
    %cst_9 = arith.constant 3.200000e+01 : f32
    %15 = vector.broadcast %cst_9 : f32 to vector<16x1xf32>
    %16 = arith.divf %14, %15 : vector<16x1xf32>
    %cst_10 = arith.constant 9.99999971E-10 : f32
    %17 = vector.broadcast %cst_10 : f32 to vector<16x1xf32>
    %18 = arith.addf %16, %17 : vector<16x1xf32>
    %19 = math.rsqrt %18 : vector<16x1xf32>
    %20 = vector.broadcast %19 : vector<16x1xf32> to vector<16x32xf32>
    %21 = arith.mulf %11, %20 : vector<16x32xf32>
    %22 = vector.broadcast %4 : vector<1x32xf32> to vector<16x32xf32>
    %23 = arith.mulf %21, %22 : vector<16x32xf32>
    %24 = vector.broadcast %5 : vector<1x32xf32> to vector<16x32xf32>
    %25 = arith.addf %23, %24 : vector<16x32xf32>
    %c0_11 = arith.constant 0 : index
    %c0_12 = arith.constant 0 : index
    %c0_13 = arith.constant 0 : index
    %26 = vector.load %arg4[%c0_11, %c0_12, %c0_13] : memref<2x32x96xf32, #tpu.memory_space<vmem>>, vector<1x32x96xf32>
    %27 = vector.shape_cast %26 : vector<1x32x96xf32> to vector<32x96xf32>
    %c0_14 = arith.constant 0 : index
    %c0_15 = arith.constant 0 : index
    %c0_16 = arith.constant 0 : index
    %28 = vector.load %arg5[%c0_14, %c0_15, %c0_16] : memref<2x1x96xf32, #tpu.memory_space<vmem>>, vector<1x1x96xf32>
    %29 = vector.shape_cast %28 : vector<1x1x96xf32> to vector<1x96xf32>
    %c0_17 = arith.constant 0 : index
    %c0_18 = arith.constant 0 : index
    %c0_19 = arith.constant 0 : index
    %30 = vector.load %arg6[%c0_17, %c0_18, %c0_19] : memref<2x32x32xf32, #tpu.memory_space<vmem>>, vector<1x32x32xf32>
    %31 = vector.shape_cast %30 : vector<1x32x32xf32> to vector<32x32xf32>
    %c0_20 = arith.constant 0 : index
    %c0_21 = arith.constant 0 : index
    %c0_22 = arith.constant 0 : index
    %32 = vector.load %arg7[%c0_20, %c0_21, %c0_22] : memref<2x1x32xf32, #tpu.memory_space<vmem>>, vector<1x1x32xf32>
    %33 = vector.shape_cast %32 : vector<1x1x32xf32> to vector<1x32xf32>
    %cst_23 = arith.constant dense<0.000000e+00> : vector<16x96xf32>
    %34 = tpu.matmul %25, %27, %cst_23 {dimension_numbers = #tpu.dot_dimension_numbers<[1], [0], [0], [1], [0, 0, 1, 1], [], []>} : vector<16x32xf32>, vector<32x96xf32>, vector<16x96xf32> -> vector<16x96xf32>
    %35 = vector.broadcast %29 : vector<1x96xf32> to vector<16x96xf32>
    %36 = arith.addf %34, %35 : vector<16x96xf32>
    %37 = vector.shape_cast %36 : vector<16x96xf32> to vector<2x8x96xf32>
    %38 = vector.extract_strided_slice %37 {offsets = [0, 0, 0], sizes = [2, 8, 32], strides = [1, 1, 1]} : vector<2x8x96xf32> to vector<2x8x32xf32>
    %cst_24 = arith.constant 0.353553385 : f32
    %39 = vector.broadcast %cst_24 : f32 to vector<2x8x32xf32>
    %40 = arith.mulf %38, %39 : vector<2x8x32xf32>
    %41 = vector.extract_strided_slice %37 {offsets = [0, 0, 32], sizes = [2, 8, 32], strides = [1, 1, 1]} : vector<2x8x96xf32> to vector<2x8x32xf32>
    %42 = vector.extract_strided_slice %37 {offsets = [0, 0, 64], sizes = [2, 8, 32], strides = [1, 1, 1]} : vector<2x8x96xf32> to vector<2x8x32xf32>
    %43 = vector.extract_strided_slice %40 {offsets = [0, 0, 0], sizes = [2, 8, 8], strides = [1, 1, 1]} : vector<2x8x32xf32> to vector<2x8x8xf32>
    %44 = vector.extract_strided_slice %41 {offsets = [0, 0, 0], sizes = [2, 8, 8], strides = [1, 1, 1]} : vector<2x8x32xf32> to vector<2x8x8xf32>
    "tpu.trace_start"() <{level = 10 : i32, message = "nld,nmd->nlm"}> : () -> ()
    %cst_25 = arith.constant dense<0.000000e+00> : vector<2x8x8xf32>
    %45 = tpu.matmul %43, %44, %cst_25 {dimension_numbers = #tpu.dot_dimension_numbers<[2], [2], [1], [1], [0, 0, 0, 1, 1, 1], [0], [0]>} : vector<2x8x8xf32>, vector<2x8x8xf32>, vector<2x8x8xf32> -> vector<2x8x8xf32>
    "tpu.trace_stop"() : () -> ()
    %cst_26 = arith.constant dense<0xFF800000> : vector<2x8xf32>
    %46 = vector.multi_reduction <maximumf>, %45, %cst_26 [2] : vector<2x8x8xf32> to vector<2x8xf32>
    %47 = vector.shape_cast %46 : vector<2x8xf32> to vector<2x8x1xf32>
    %48 = vector.broadcast %47 : vector<2x8x1xf32> to vector<2x8x8xf32>
    %49 = arith.subf %45, %48 : vector<2x8x8xf32>
    %50 = math.exp %49 : vector<2x8x8xf32>
    %cst_27 = arith.constant dense<0.000000e+00> : vector<2x8xf32>
    %51 = vector.multi_reduction <add>, %50, %cst_27 [2] : vector<2x8x8xf32> to vector<2x8xf32>
    %52 = vector.shape_cast %51 : vector<2x8xf32> to vector<2x8x1xf32>
    %53 = tpu.reciprocal %52 {approx = true} : vector<2x8x1xf32> -> vector<2x8x1xf32>
    %54 = vector.broadcast %53 : vector<2x8x1xf32> to vector<2x8x8xf32>
    %55 = arith.mulf %50, %54 : vector<2x8x8xf32>
    %56 = vector.extract_strided_slice %42 {offsets = [0, 0, 0], sizes = [2, 8, 8], strides = [1, 1, 1]} : vector<2x8x32xf32> to vector<2x8x8xf32>
    "tpu.trace_start"() <{level = 10 : i32, message = "nlm,nmd->nld"}> : () -> ()
    %cst_28 = arith.constant dense<0.000000e+00> : vector<2x8x8xf32>
    %57 = tpu.matmul %55, %56, %cst_28 {dimension_numbers = #tpu.dot_dimension_numbers<[2], [1], [1], [2], [0, 0, 0, 1, 1, 2], [0], [0]>} : vector<2x8x8xf32>, vector<2x8x8xf32>, vector<2x8x8xf32> -> vector<2x8x8xf32>
    "tpu.trace_stop"() : () -> ()
    %58 = vector.extract_strided_slice %40 {offsets = [0, 0, 8], sizes = [2, 8, 8], strides = [1, 1, 1]} : vector<2x8x32xf32> to vector<2x8x8xf32>
    %59 = vector.extract_strided_slice %41 {offsets = [0, 0, 8], sizes = [2, 8, 8], strides = [1, 1, 1]} : vector<2x8x32xf32> to vector<2x8x8xf32>
    "tpu.trace_start"() <{level = 10 : i32, message = "nld,nmd->nlm"}> : () -> ()
    %cst_29 = arith.constant dense<0.000000e+00> : vector<2x8x8xf32>
    %60 = tpu.matmul %58, %59, %cst_29 {dimension_numbers = #tpu.dot_dimension_numbers<[2], [2], [1], [1], [0, 0, 0, 1, 1, 1], [0], [0]>} : vector<2x8x8xf32>, vector<2x8x8xf32>, vector<2x8x8xf32> -> vector<2x8x8xf32>
    "tpu.trace_stop"() : () -> ()
    %cst_30 = arith.constant dense<0xFF800000> : vector<2x8xf32>
    %61 = vector.multi_reduction <maximumf>, %60, %cst_30 [2] : vector<2x8x8xf32> to vector<2x8xf32>
    %62 = vector.shape_cast %61 : vector<2x8xf32> to vector<2x8x1xf32>
    %63 = vector.broadcast %62 : vector<2x8x1xf32> to vector<2x8x8xf32>
    %64 = arith.subf %60, %63 : vector<2x8x8xf32>
    %65 = math.exp %64 : vector<2x8x8xf32>
    %cst_31 = arith.constant dense<0.000000e+00> : vector<2x8xf32>
    %66 = vector.multi_reduction <add>, %65, %cst_31 [2] : vector<2x8x8xf32> to vector<2x8xf32>
    %67 = vector.shape_cast %66 : vector<2x8xf32> to vector<2x8x1xf32>
    %68 = tpu.reciprocal %67 {approx = true} : vector<2x8x1xf32> -> vector<2x8x1xf32>
    %69 = vector.broadcast %68 : vector<2x8x1xf32> to vector<2x8x8xf32>
    %70 = arith.mulf %65, %69 : vector<2x8x8xf32>
    %71 = vector.extract_strided_slice %42 {offsets = [0, 0, 8], sizes = [2, 8, 8], strides = [1, 1, 1]} : vector<2x8x32xf32> to vector<2x8x8xf32>
    "tpu.trace_start"() <{level = 10 : i32, message = "nlm,nmd->nld"}> : () -> ()
    %cst_32 = arith.constant dense<0.000000e+00> : vector<2x8x8xf32>
    %72 = tpu.matmul %70, %71, %cst_32 {dimension_numbers = #tpu.dot_dimension_numbers<[2], [1], [1], [2], [0, 0, 0, 1, 1, 2], [0], [0]>} : vector<2x8x8xf32>, vector<2x8x8xf32>, vector<2x8x8xf32> -> vector<2x8x8xf32>
    "tpu.trace_stop"() : () -> ()
    %73 = vector.extract_strided_slice %40 {offsets = [0, 0, 16], sizes = [2, 8, 8], strides = [1, 1, 1]} : vector<2x8x32xf32> to vector<2x8x8xf32>
    %74 = vector.extract_strided_slice %41 {offsets = [0, 0, 16], sizes = [2, 8, 8], strides = [1, 1, 1]} : vector<2x8x32xf32> to vector<2x8x8xf32>
    "tpu.trace_start"() <{level = 10 : i32, message = "nld,nmd->nlm"}> : () -> ()
    %cst_33 = arith.constant dense<0.000000e+00> : vector<2x8x8xf32>
    %75 = tpu.matmul %73, %74, %cst_33 {dimension_numbers = #tpu.dot_dimension_numbers<[2], [2], [1], [1], [0, 0, 0, 1, 1, 1], [0], [0]>} : vector<2x8x8xf32>, vector<2x8x8xf32>, vector<2x8x8xf32> -> vector<2x8x8xf32>
    "tpu.trace_stop"() : () -> ()
    %cst_34 = arith.constant dense<0xFF800000> : vector<2x8xf32>
    %76 = vector.multi_reduction <maximumf>, %75, %cst_34 [2] : vector<2x8x8xf32> to vector<2x8xf32>
    %77 = vector.shape_cast %76 : vector<2x8xf32> to vector<2x8x1xf32>
    %78 = vector.broadcast %77 : vector<2x8x1xf32> to vector<2x8x8xf32>
    %79 = arith.subf %75, %78 : vector<2x8x8xf32>
    %80 = math.exp %79 : vector<2x8x8xf32>
    %cst_35 = arith.constant dense<0.000000e+00> : vector<2x8xf32>
    %81 = vector.multi_reduction <add>, %80, %cst_35 [2] : vector<2x8x8xf32> to vector<2x8xf32>
    %82 = vector.shape_cast %81 : vector<2x8xf32> to vector<2x8x1xf32>
    %83 = tpu.reciprocal %82 {approx = true} : vector<2x8x1xf32> -> vector<2x8x1xf32>
    %84 = vector.broadcast %83 : vector<2x8x1xf32> to vector<2x8x8xf32>
    %85 = arith.mulf %80, %84 : vector<2x8x8xf32>
    %86 = vector.extract_strided_slice %42 {offsets = [0, 0, 16], sizes = [2, 8, 8], strides = [1, 1, 1]} : vector<2x8x32xf32> to vector<2x8x8xf32>
    "tpu.trace_start"() <{level = 10 : i32, message = "nlm,nmd->nld"}> : () -> ()
    %cst_36 = arith.constant dense<0.000000e+00> : vector<2x8x8xf32>
    %87 = tpu.matmul %85, %86, %cst_36 {dimension_numbers = #tpu.dot_dimension_numbers<[2], [1], [1], [2], [0, 0, 0, 1, 1, 2], [0], [0]>} : vector<2x8x8xf32>, vector<2x8x8xf32>, vector<2x8x8xf32> -> vector<2x8x8xf32>
    "tpu.trace_stop"() : () -> ()
    %88 = vector.extract_strided_slice %40 {offsets = [0, 0, 24], sizes = [2, 8, 8], strides = [1, 1, 1]} : vector<2x8x32xf32> to vector<2x8x8xf32>
    %89 = vector.extract_strided_slice %41 {offsets = [0, 0, 24], sizes = [2, 8, 8], strides = [1, 1, 1]} : vector<2x8x32xf32> to vector<2x8x8xf32>
    "tpu.trace_start"() <{level = 10 : i32, message = "nld,nmd->nlm"}> : () -> ()
    %cst_37 = arith.constant dense<0.000000e+00> : vector<2x8x8xf32>
    %90 = tpu.matmul %88, %89, %cst_37 {dimension_numbers = #tpu.dot_dimension_numbers<[2], [2], [1], [1], [0, 0, 0, 1, 1, 1], [0], [0]>} : vector<2x8x8xf32>, vector<2x8x8xf32>, vector<2x8x8xf32> -> vector<2x8x8xf32>
    "tpu.trace_stop"() : () -> ()
    %cst_38 = arith.constant dense<0xFF800000> : vector<2x8xf32>
    %91 = vector.multi_reduction <maximumf>, %90, %cst_38 [2] : vector<2x8x8xf32> to vector<2x8xf32>
    %92 = vector.shape_cast %91 : vector<2x8xf32> to vector<2x8x1xf32>
    %93 = vector.broadcast %92 : vector<2x8x1xf32> to vector<2x8x8xf32>
    %94 = arith.subf %90, %93 : vector<2x8x8xf32>
    %95 = math.exp %94 : vector<2x8x8xf32>
    %cst_39 = arith.constant dense<0.000000e+00> : vector<2x8xf32>
    %96 = vector.multi_reduction <add>, %95, %cst_39 [2] : vector<2x8x8xf32> to vector<2x8xf32>
    %97 = vector.shape_cast %96 : vector<2x8xf32> to vector<2x8x1xf32>
    %98 = tpu.reciprocal %97 {approx = true} : vector<2x8x1xf32> -> vector<2x8x1xf32>
    %99 = vector.broadcast %98 : vector<2x8x1xf32> to vector<2x8x8xf32>
    %100 = arith.mulf %95, %99 : vector<2x8x8xf32>
    %101 = vector.extract_strided_slice %42 {offsets = [0, 0, 24], sizes = [2, 8, 8], strides = [1, 1, 1]} : vector<2x8x32xf32> to vector<2x8x8xf32>
    "tpu.trace_start"() <{level = 10 : i32, message = "nlm,nmd->nld"}> : () -> ()
    %cst_40 = arith.constant dense<0.000000e+00> : vector<2x8x8xf32>
    %102 = tpu.matmul %100, %101, %cst_40 {dimension_numbers = #tpu.dot_dimension_numbers<[2], [1], [1], [2], [0, 0, 0, 1, 1, 2], [0], [0]>} : vector<2x8x8xf32>, vector<2x8x8xf32>, vector<2x8x8xf32> -> vector<2x8x8xf32>
    "tpu.trace_stop"() : () -> ()
    %103 = tpu.concatenate %57, %72, %87, %102 in 2 : vector<2x8x8xf32>, vector<2x8x8xf32>, vector<2x8x8xf32>, vector<2x8x8xf32> -> vector<2x8x32xf32>
    %104 = vector.shape_cast %103 : vector<2x8x32xf32> to vector<16x32xf32>
    %cst_41 = arith.constant dense<0.000000e+00> : vector<16x32xf32>
    %105 = tpu.matmul %104, %31, %cst_41 {dimension_numbers = #tpu.dot_dimension_numbers<[1], [0], [0], [1], [0, 0, 1, 1], [], []>} : vector<16x32xf32>, vector<32x32xf32>, vector<16x32xf32> -> vector<16x32xf32>
    %106 = vector.broadcast %33 : vector<1x32xf32> to vector<16x32xf32>
    %107 = arith.addf %105, %106 : vector<16x32xf32>
    %108 = arith.addf %107, %25 : vector<16x32xf32>
    %c0_42 = arith.constant 0 : index
    %c0_43 = arith.constant 0 : index
    %c0_44 = arith.constant 0 : index
    %109 = vector.load %arg8[%c0_42, %c0_43, %c0_44] : memref<2x1x32xf32, #tpu.memory_space<vmem>>, vector<1x1x32xf32>
    %110 = vector.shape_cast %109 : vector<1x1x32xf32> to vector<1x32xf32>
    %c0_45 = arith.constant 0 : index
    %c0_46 = arith.constant 0 : index
    %c0_47 = arith.constant 0 : index
    %111 = vector.load %arg9[%c0_45, %c0_46, %c0_47] : memref<2x1x32xf32, #tpu.memory_space<vmem>>, vector<1x1x32xf32>
    %112 = vector.shape_cast %111 : vector<1x1x32xf32> to vector<1x32xf32>
    %cst_48 = arith.constant dense<0.000000e+00> : vector<16xf32>
    %113 = vector.multi_reduction <add>, %108, %cst_48 [1] : vector<16x32xf32> to vector<16xf32>
    %114 = vector.shape_cast %113 : vector<16xf32> to vector<16x1xf32>
    %cst_49 = arith.constant 3.200000e+01 : f32
    %115 = vector.broadcast %cst_49 : f32 to vector<16x1xf32>
    %116 = arith.divf %114, %115 : vector<16x1xf32>
    %117 = vector.broadcast %116 : vector<16x1xf32> to vector<16x32xf32>
    %118 = arith.subf %108, %117 : vector<16x32xf32>
    %119 = arith.mulf %118, %118 : vector<16x32xf32>
    %cst_50 = arith.constant dense<0.000000e+00> : vector<16xf32>
    %120 = vector.multi_reduction <add>, %119, %cst_50 [1] : vector<16x32xf32> to vector<16xf32>
    %121 = vector.shape_cast %120 : vector<16xf32> to vector<16x1xf32>
    %cst_51 = arith.constant 3.200000e+01 : f32
    %122 = vector.broadcast %cst_51 : f32 to vector<16x1xf32>
    %123 = arith.divf %121, %122 : vector<16x1xf32>
    %cst_52 = arith.constant 9.99999974E-6 : f32
    %124 = vector.broadcast %cst_52 : f32 to vector<16x1xf32>
    %125 = arith.addf %123, %124 : vector<16x1xf32>
    %126 = math.rsqrt %125 : vector<16x1xf32>
    %127 = vector.broadcast %126 : vector<16x1xf32> to vector<16x32xf32>
    %128 = arith.mulf %118, %127 : vector<16x32xf32>
    %129 = vector.broadcast %110 : vector<1x32xf32> to vector<16x32xf32>
    %130 = arith.mulf %128, %129 : vector<16x32xf32>
    %131 = vector.broadcast %112 : vector<1x32xf32> to vector<16x32xf32>
    %132 = arith.addf %130, %131 : vector<16x32xf32>
    %c0_53 = arith.constant 0 : index
    %c0_54 = arith.constant 0 : index
    %c0_55 = arith.constant 0 : index
    %133 = vector.load %arg10[%c0_53, %c0_54, %c0_55] : memref<2x32x32xf32, #tpu.memory_space<vmem>>, vector<1x32x32xf32>
    %134 = vector.shape_cast %133 : vector<1x32x32xf32> to vector<32x32xf32>
    %cst_56 = arith.constant dense<0.000000e+00> : vector<16x32xf32>
    %135 = tpu.matmul %132, %134, %cst_56 {dimension_numbers = #tpu.dot_dimension_numbers<[1], [0], [0], [1], [0, 0, 1, 1], [], []>} : vector<16x32xf32>, vector<32x32xf32>, vector<16x32xf32> -> vector<16x32xf32>
    %c0_57 = arith.constant 0 : index
    %c0_58 = arith.constant 0 : index
    %c0_59 = arith.constant 0 : index
    %136 = vector.load %arg11[%c0_57, %c0_58, %c0_59] : memref<2x1x32xf32, #tpu.memory_space<vmem>>, vector<1x1x32xf32>
    %137 = vector.shape_cast %136 : vector<1x1x32xf32> to vector<1x32xf32>
    %138 = vector.broadcast %137 : vector<1x32xf32> to vector<16x32xf32>
    %139 = arith.addf %135, %138 : vector<16x32xf32>
    %cst_60 = arith.constant 0.000000e+00 : f32
    %140 = vector.broadcast %cst_60 : f32 to vector<16x32xf32>
    %141 = arith.maximumf %139, %140 : vector<16x32xf32>
    %c0_61 = arith.constant 0 : index
    %c0_62 = arith.constant 0 : index
    %c0_63 = arith.constant 0 : index
    %142 = vector.load %arg12[%c0_61, %c0_62, %c0_63] : memref<2x32x32xf32, #tpu.memory_space<vmem>>, vector<1x32x32xf32>
    %143 = vector.shape_cast %142 : vector<1x32x32xf32> to vector<32x32xf32>
    %cst_64 = arith.constant dense<0.000000e+00> : vector<16x32xf32>
    %144 = tpu.matmul %141, %143, %cst_64 {dimension_numbers = #tpu.dot_dimension_numbers<[1], [0], [0], [1], [0, 0, 1, 1], [], []>} : vector<16x32xf32>, vector<32x32xf32>, vector<16x32xf32> -> vector<16x32xf32>
    %c0_65 = arith.constant 0 : index
    %c0_66 = arith.constant 0 : index
    %c0_67 = arith.constant 0 : index
    %145 = vector.load %arg13[%c0_65, %c0_66, %c0_67] : memref<2x1x32xf32, #tpu.memory_space<vmem>>, vector<1x1x32xf32>
    %146 = vector.shape_cast %145 : vector<1x1x32xf32> to vector<1x32xf32>
    %147 = vector.broadcast %146 : vector<1x32xf32> to vector<16x32xf32>
    %148 = arith.addf %144, %147 : vector<16x32xf32>
    %cst_68 = arith.constant 0.000000e+00 : f32
    %149 = vector.broadcast %cst_68 : f32 to vector<16x32xf32>
    %150 = arith.maximumf %148, %149 : vector<16x32xf32>
    %151 = arith.addf %132, %150 : vector<16x32xf32>
    %c0_69 = arith.constant 0 : index
    %c0_70 = arith.constant 0 : index
    %c0_71 = arith.constant 0 : index
    %152 = vector.load %arg14[%c0_69, %c0_70, %c0_71] : memref<2x1x32xf32, #tpu.memory_space<vmem>>, vector<1x1x32xf32>
    %153 = vector.shape_cast %152 : vector<1x1x32xf32> to vector<1x32xf32>
    %c0_72 = arith.constant 0 : index
    %c0_73 = arith.constant 0 : index
    %c0_74 = arith.constant 0 : index
    %154 = vector.load %arg15[%c0_72, %c0_73, %c0_74] : memref<2x1x32xf32, #tpu.memory_space<vmem>>, vector<1x1x32xf32>
    %155 = vector.shape_cast %154 : vector<1x1x32xf32> to vector<1x32xf32>
    %cst_75 = arith.constant dense<0.000000e+00> : vector<16xf32>
    %156 = vector.multi_reduction <add>, %151, %cst_75 [1] : vector<16x32xf32> to vector<16xf32>
    %157 = vector.shape_cast %156 : vector<16xf32> to vector<16x1xf32>
    %cst_76 = arith.constant 3.200000e+01 : f32
    %158 = vector.broadcast %cst_76 : f32 to vector<16x1xf32>
    %159 = arith.divf %157, %158 : vector<16x1xf32>
    %160 = vector.broadcast %159 : vector<16x1xf32> to vector<16x32xf32>
    %161 = arith.subf %151, %160 : vector<16x32xf32>
    %162 = arith.mulf %161, %161 : vector<16x32xf32>
    %cst_77 = arith.constant dense<0.000000e+00> : vector<16xf32>
    %163 = vector.multi_reduction <add>, %162, %cst_77 [1] : vector<16x32xf32> to vector<16xf32>
    %164 = vector.shape_cast %163 : vector<16xf32> to vector<16x1xf32>
    %cst_78 = arith.constant 3.200000e+01 : f32
    %165 = vector.broadcast %cst_78 : f32 to vector<16x1xf32>
    %166 = arith.divf %164, %165 : vector<16x1xf32>
    %cst_79 = arith.constant 9.99999974E-6 : f32
    %167 = vector.broadcast %cst_79 : f32 to vector<16x1xf32>
    %168 = arith.addf %166, %167 : vector<16x1xf32>
    %169 = math.rsqrt %168 : vector<16x1xf32>
    %170 = vector.broadcast %169 : vector<16x1xf32> to vector<16x32xf32>
    %171 = arith.mulf %161, %170 : vector<16x32xf32>
    %172 = vector.broadcast %153 : vector<1x32xf32> to vector<16x32xf32>
    %173 = arith.mulf %171, %172 : vector<16x32xf32>
    %174 = vector.broadcast %155 : vector<1x32xf32> to vector<16x32xf32>
    %175 = arith.addf %173, %174 : vector<16x32xf32>
    %c1 = arith.constant 1 : index
    %c0_80 = arith.constant 0 : index
    %c0_81 = arith.constant 0 : index
    %176 = vector.load %arg4[%c1, %c0_80, %c0_81] : memref<2x32x96xf32, #tpu.memory_space<vmem>>, vector<1x32x96xf32>
    %177 = vector.shape_cast %176 : vector<1x32x96xf32> to vector<32x96xf32>
    %c1_82 = arith.constant 1 : index
    %c0_83 = arith.constant 0 : index
    %c0_84 = arith.constant 0 : index
    %178 = vector.load %arg5[%c1_82, %c0_83, %c0_84] : memref<2x1x96xf32, #tpu.memory_space<vmem>>, vector<1x1x96xf32>
    %179 = vector.shape_cast %178 : vector<1x1x96xf32> to vector<1x96xf32>
    %c1_85 = arith.constant 1 : index
    %c0_86 = arith.constant 0 : index
    %c0_87 = arith.constant 0 : index
    %180 = vector.load %arg6[%c1_85, %c0_86, %c0_87] : memref<2x32x32xf32, #tpu.memory_space<vmem>>, vector<1x32x32xf32>
    %181 = vector.shape_cast %180 : vector<1x32x32xf32> to vector<32x32xf32>
    %c1_88 = arith.constant 1 : index
    %c0_89 = arith.constant 0 : index
    %c0_90 = arith.constant 0 : index
    %182 = vector.load %arg7[%c1_88, %c0_89, %c0_90] : memref<2x1x32xf32, #tpu.memory_space<vmem>>, vector<1x1x32xf32>
    %183 = vector.shape_cast %182 : vector<1x1x32xf32> to vector<1x32xf32>
    %cst_91 = arith.constant dense<0.000000e+00> : vector<16x96xf32>
    %184 = tpu.matmul %175, %177, %cst_91 {dimension_numbers = #tpu.dot_dimension_numbers<[1], [0], [0], [1], [0, 0, 1, 1], [], []>} : vector<16x32xf32>, vector<32x96xf32>, vector<16x96xf32> -> vector<16x96xf32>
    %185 = vector.broadcast %179 : vector<1x96xf32> to vector<16x96xf32>
    %186 = arith.addf %184, %185 : vector<16x96xf32>
    %187 = vector.shape_cast %186 : vector<16x96xf32> to vector<2x8x96xf32>
    %188 = vector.extract_strided_slice %187 {offsets = [0, 0, 0], sizes = [2, 8, 32], strides = [1, 1, 1]} : vector<2x8x96xf32> to vector<2x8x32xf32>
    %cst_92 = arith.constant 0.353553385 : f32
    %189 = vector.broadcast %cst_92 : f32 to vector<2x8x32xf32>
    %190 = arith.mulf %188, %189 : vector<2x8x32xf32>
    %191 = vector.extract_strided_slice %187 {offsets = [0, 0, 32], sizes = [2, 8, 32], strides = [1, 1, 1]} : vector<2x8x96xf32> to vector<2x8x32xf32>
    %192 = vector.extract_strided_slice %187 {offsets = [0, 0, 64], sizes = [2, 8, 32], strides = [1, 1, 1]} : vector<2x8x96xf32> to vector<2x8x32xf32>
    %193 = vector.extract_strided_slice %190 {offsets = [0, 0, 0], sizes = [2, 8, 8], strides = [1, 1, 1]} : vector<2x8x32xf32> to vector<2x8x8xf32>
    %194 = vector.extract_strided_slice %191 {offsets = [0, 0, 0], sizes = [2, 8, 8], strides = [1, 1, 1]} : vector<2x8x32xf32> to vector<2x8x8xf32>
    "tpu.trace_start"() <{level = 10 : i32, message = "nld,nmd->nlm"}> : () -> ()
    %cst_93 = arith.constant dense<0.000000e+00> : vector<2x8x8xf32>
    %195 = tpu.matmul %193, %194, %cst_93 {dimension_numbers = #tpu.dot_dimension_numbers<[2], [2], [1], [1], [0, 0, 0, 1, 1, 1], [0], [0]>} : vector<2x8x8xf32>, vector<2x8x8xf32>, vector<2x8x8xf32> -> vector<2x8x8xf32>
    "tpu.trace_stop"() : () -> ()
    %cst_94 = arith.constant dense<0xFF800000> : vector<2x8xf32>
    %196 = vector.multi_reduction <maximumf>, %195, %cst_94 [2] : vector<2x8x8xf32> to vector<2x8xf32>
    %197 = vector.shape_cast %196 : vector<2x8xf32> to vector<2x8x1xf32>
    %198 = vector.broadcast %197 : vector<2x8x1xf32> to vector<2x8x8xf32>
    %199 = arith.subf %195, %198 : vector<2x8x8xf32>
    %200 = math.exp %199 : vector<2x8x8xf32>
    %cst_95 = arith.constant dense<0.000000e+00> : vector<2x8xf32>
    %201 = vector.multi_reduction <add>, %200, %cst_95 [2] : vector<2x8x8xf32> to vector<2x8xf32>
    %202 = vector.shape_cast %201 : vector<2x8xf32> to vector<2x8x1xf32>
    %203 = tpu.reciprocal %202 {approx = true} : vector<2x8x1xf32> -> vector<2x8x1xf32>
    %204 = vector.broadcast %203 : vector<2x8x1xf32> to vector<2x8x8xf32>
    %205 = arith.mulf %200, %204 : vector<2x8x8xf32>
    %206 = vector.extract_strided_slice %192 {offsets = [0, 0, 0], sizes = [2, 8, 8], strides = [1, 1, 1]} : vector<2x8x32xf32> to vector<2x8x8xf32>
    "tpu.trace_start"() <{level = 10 : i32, message = "nlm,nmd->nld"}> : () -> ()
    %cst_96 = arith.constant dense<0.000000e+00> : vector<2x8x8xf32>
    %207 = tpu.matmul %205, %206, %cst_96 {dimension_numbers = #tpu.dot_dimension_numbers<[2], [1], [1], [2], [0, 0, 0, 1, 1, 2], [0], [0]>} : vector<2x8x8xf32>, vector<2x8x8xf32>, vector<2x8x8xf32> -> vector<2x8x8xf32>
    "tpu.trace_stop"() : () -> ()
    %208 = vector.extract_strided_slice %190 {offsets = [0, 0, 8], sizes = [2, 8, 8], strides = [1, 1, 1]} : vector<2x8x32xf32> to vector<2x8x8xf32>
    %209 = vector.extract_strided_slice %191 {offsets = [0, 0, 8], sizes = [2, 8, 8], strides = [1, 1, 1]} : vector<2x8x32xf32> to vector<2x8x8xf32>
    "tpu.trace_start"() <{level = 10 : i32, message = "nld,nmd->nlm"}> : () -> ()
    %cst_97 = arith.constant dense<0.000000e+00> : vector<2x8x8xf32>
    %210 = tpu.matmul %208, %209, %cst_97 {dimension_numbers = #tpu.dot_dimension_numbers<[2], [2], [1], [1], [0, 0, 0, 1, 1, 1], [0], [0]>} : vector<2x8x8xf32>, vector<2x8x8xf32>, vector<2x8x8xf32> -> vector<2x8x8xf32>
    "tpu.trace_stop"() : () -> ()
    %cst_98 = arith.constant dense<0xFF800000> : vector<2x8xf32>
    %211 = vector.multi_reduction <maximumf>, %210, %cst_98 [2] : vector<2x8x8xf32> to vector<2x8xf32>
    %212 = vector.shape_cast %211 : vector<2x8xf32> to vector<2x8x1xf32>
    %213 = vector.broadcast %212 : vector<2x8x1xf32> to vector<2x8x8xf32>
    %214 = arith.subf %210, %213 : vector<2x8x8xf32>
    %215 = math.exp %214 : vector<2x8x8xf32>
    %cst_99 = arith.constant dense<0.000000e+00> : vector<2x8xf32>
    %216 = vector.multi_reduction <add>, %215, %cst_99 [2] : vector<2x8x8xf32> to vector<2x8xf32>
    %217 = vector.shape_cast %216 : vector<2x8xf32> to vector<2x8x1xf32>
    %218 = tpu.reciprocal %217 {approx = true} : vector<2x8x1xf32> -> vector<2x8x1xf32>
    %219 = vector.broadcast %218 : vector<2x8x1xf32> to vector<2x8x8xf32>
    %220 = arith.mulf %215, %219 : vector<2x8x8xf32>
    %221 = vector.extract_strided_slice %192 {offsets = [0, 0, 8], sizes = [2, 8, 8], strides = [1, 1, 1]} : vector<2x8x32xf32> to vector<2x8x8xf32>
    "tpu.trace_start"() <{level = 10 : i32, message = "nlm,nmd->nld"}> : () -> ()
    %cst_100 = arith.constant dense<0.000000e+00> : vector<2x8x8xf32>
    %222 = tpu.matmul %220, %221, %cst_100 {dimension_numbers = #tpu.dot_dimension_numbers<[2], [1], [1], [2], [0, 0, 0, 1, 1, 2], [0], [0]>} : vector<2x8x8xf32>, vector<2x8x8xf32>, vector<2x8x8xf32> -> vector<2x8x8xf32>
    "tpu.trace_stop"() : () -> ()
    %223 = vector.extract_strided_slice %190 {offsets = [0, 0, 16], sizes = [2, 8, 8], strides = [1, 1, 1]} : vector<2x8x32xf32> to vector<2x8x8xf32>
    %224 = vector.extract_strided_slice %191 {offsets = [0, 0, 16], sizes = [2, 8, 8], strides = [1, 1, 1]} : vector<2x8x32xf32> to vector<2x8x8xf32>
    "tpu.trace_start"() <{level = 10 : i32, message = "nld,nmd->nlm"}> : () -> ()
    %cst_101 = arith.constant dense<0.000000e+00> : vector<2x8x8xf32>
    %225 = tpu.matmul %223, %224, %cst_101 {dimension_numbers = #tpu.dot_dimension_numbers<[2], [2], [1], [1], [0, 0, 0, 1, 1, 1], [0], [0]>} : vector<2x8x8xf32>, vector<2x8x8xf32>, vector<2x8x8xf32> -> vector<2x8x8xf32>
    "tpu.trace_stop"() : () -> ()
    %cst_102 = arith.constant dense<0xFF800000> : vector<2x8xf32>
    %226 = vector.multi_reduction <maximumf>, %225, %cst_102 [2] : vector<2x8x8xf32> to vector<2x8xf32>
    %227 = vector.shape_cast %226 : vector<2x8xf32> to vector<2x8x1xf32>
    %228 = vector.broadcast %227 : vector<2x8x1xf32> to vector<2x8x8xf32>
    %229 = arith.subf %225, %228 : vector<2x8x8xf32>
    %230 = math.exp %229 : vector<2x8x8xf32>
    %cst_103 = arith.constant dense<0.000000e+00> : vector<2x8xf32>
    %231 = vector.multi_reduction <add>, %230, %cst_103 [2] : vector<2x8x8xf32> to vector<2x8xf32>
    %232 = vector.shape_cast %231 : vector<2x8xf32> to vector<2x8x1xf32>
    %233 = tpu.reciprocal %232 {approx = true} : vector<2x8x1xf32> -> vector<2x8x1xf32>
    %234 = vector.broadcast %233 : vector<2x8x1xf32> to vector<2x8x8xf32>
    %235 = arith.mulf %230, %234 : vector<2x8x8xf32>
    %236 = vector.extract_strided_slice %192 {offsets = [0, 0, 16], sizes = [2, 8, 8], strides = [1, 1, 1]} : vector<2x8x32xf32> to vector<2x8x8xf32>
    "tpu.trace_start"() <{level = 10 : i32, message = "nlm,nmd->nld"}> : () -> ()
    %cst_104 = arith.constant dense<0.000000e+00> : vector<2x8x8xf32>
    %237 = tpu.matmul %235, %236, %cst_104 {dimension_numbers = #tpu.dot_dimension_numbers<[2], [1], [1], [2], [0, 0, 0, 1, 1, 2], [0], [0]>} : vector<2x8x8xf32>, vector<2x8x8xf32>, vector<2x8x8xf32> -> vector<2x8x8xf32>
    "tpu.trace_stop"() : () -> ()
    %238 = vector.extract_strided_slice %190 {offsets = [0, 0, 24], sizes = [2, 8, 8], strides = [1, 1, 1]} : vector<2x8x32xf32> to vector<2x8x8xf32>
    %239 = vector.extract_strided_slice %191 {offsets = [0, 0, 24], sizes = [2, 8, 8], strides = [1, 1, 1]} : vector<2x8x32xf32> to vector<2x8x8xf32>
    "tpu.trace_start"() <{level = 10 : i32, message = "nld,nmd->nlm"}> : () -> ()
    %cst_105 = arith.constant dense<0.000000e+00> : vector<2x8x8xf32>
    %240 = tpu.matmul %238, %239, %cst_105 {dimension_numbers = #tpu.dot_dimension_numbers<[2], [2], [1], [1], [0, 0, 0, 1, 1, 1], [0], [0]>} : vector<2x8x8xf32>, vector<2x8x8xf32>, vector<2x8x8xf32> -> vector<2x8x8xf32>
    "tpu.trace_stop"() : () -> ()
    %cst_106 = arith.constant dense<0xFF800000> : vector<2x8xf32>
    %241 = vector.multi_reduction <maximumf>, %240, %cst_106 [2] : vector<2x8x8xf32> to vector<2x8xf32>
    %242 = vector.shape_cast %241 : vector<2x8xf32> to vector<2x8x1xf32>
    %243 = vector.broadcast %242 : vector<2x8x1xf32> to vector<2x8x8xf32>
    %244 = arith.subf %240, %243 : vector<2x8x8xf32>
    %245 = math.exp %244 : vector<2x8x8xf32>
    %cst_107 = arith.constant dense<0.000000e+00> : vector<2x8xf32>
    %246 = vector.multi_reduction <add>, %245, %cst_107 [2] : vector<2x8x8xf32> to vector<2x8xf32>
    %247 = vector.shape_cast %246 : vector<2x8xf32> to vector<2x8x1xf32>
    %248 = tpu.reciprocal %247 {approx = true} : vector<2x8x1xf32> -> vector<2x8x1xf32>
    %249 = vector.broadcast %248 : vector<2x8x1xf32> to vector<2x8x8xf32>
    %250 = arith.mulf %245, %249 : vector<2x8x8xf32>
    %251 = vector.extract_strided_slice %192 {offsets = [0, 0, 24], sizes = [2, 8, 8], strides = [1, 1, 1]} : vector<2x8x32xf32> to vector<2x8x8xf32>
    "tpu.trace_start"() <{level = 10 : i32, message = "nlm,nmd->nld"}> : () -> ()
    %cst_108 = arith.constant dense<0.000000e+00> : vector<2x8x8xf32>
    %252 = tpu.matmul %250, %251, %cst_108 {dimension_numbers = #tpu.dot_dimension_numbers<[2], [1], [1], [2], [0, 0, 0, 1, 1, 2], [0], [0]>} : vector<2x8x8xf32>, vector<2x8x8xf32>, vector<2x8x8xf32> -> vector<2x8x8xf32>
    "tpu.trace_stop"() : () -> ()
    %253 = tpu.concatenate %207, %222, %237, %252 in 2 : vector<2x8x8xf32>, vector<2x8x8xf32>, vector<2x8x8xf32>, vector<2x8x8xf32> -> vector<2x8x32xf32>
    %254 = vector.shape_cast %253 : vector<2x8x32xf32> to vector<16x32xf32>
    %cst_109 = arith.constant dense<0.000000e+00> : vector<16x32xf32>
    %255 = tpu.matmul %254, %181, %cst_109 {dimension_numbers = #tpu.dot_dimension_numbers<[1], [0], [0], [1], [0, 0, 1, 1], [], []>} : vector<16x32xf32>, vector<32x32xf32>, vector<16x32xf32> -> vector<16x32xf32>
    %256 = vector.broadcast %183 : vector<1x32xf32> to vector<16x32xf32>
    %257 = arith.addf %255, %256 : vector<16x32xf32>
    %258 = arith.addf %257, %175 : vector<16x32xf32>
    %c1_110 = arith.constant 1 : index
    %c0_111 = arith.constant 0 : index
    %c0_112 = arith.constant 0 : index
    %259 = vector.load %arg8[%c1_110, %c0_111, %c0_112] : memref<2x1x32xf32, #tpu.memory_space<vmem>>, vector<1x1x32xf32>
    %260 = vector.shape_cast %259 : vector<1x1x32xf32> to vector<1x32xf32>
    %c1_113 = arith.constant 1 : index
    %c0_114 = arith.constant 0 : index
    %c0_115 = arith.constant 0 : index
    %261 = vector.load %arg9[%c1_113, %c0_114, %c0_115] : memref<2x1x32xf32, #tpu.memory_space<vmem>>, vector<1x1x32xf32>
    %262 = vector.shape_cast %261 : vector<1x1x32xf32> to vector<1x32xf32>
    %cst_116 = arith.constant dense<0.000000e+00> : vector<16xf32>
    %263 = vector.multi_reduction <add>, %258, %cst_116 [1] : vector<16x32xf32> to vector<16xf32>
    %264 = vector.shape_cast %263 : vector<16xf32> to vector<16x1xf32>
    %cst_117 = arith.constant 3.200000e+01 : f32
    %265 = vector.broadcast %cst_117 : f32 to vector<16x1xf32>
    %266 = arith.divf %264, %265 : vector<16x1xf32>
    %267 = vector.broadcast %266 : vector<16x1xf32> to vector<16x32xf32>
    %268 = arith.subf %258, %267 : vector<16x32xf32>
    %269 = arith.mulf %268, %268 : vector<16x32xf32>
    %cst_118 = arith.constant dense<0.000000e+00> : vector<16xf32>
    %270 = vector.multi_reduction <add>, %269, %cst_118 [1] : vector<16x32xf32> to vector<16xf32>
    %271 = vector.shape_cast %270 : vector<16xf32> to vector<16x1xf32>
    %cst_119 = arith.constant 3.200000e+01 : f32
    %272 = vector.broadcast %cst_119 : f32 to vector<16x1xf32>
    %273 = arith.divf %271, %272 : vector<16x1xf32>
    %cst_120 = arith.constant 9.99999974E-6 : f32
    %274 = vector.broadcast %cst_120 : f32 to vector<16x1xf32>
    %275 = arith.addf %273, %274 : vector<16x1xf32>
    %276 = math.rsqrt %275 : vector<16x1xf32>
    %277 = vector.broadcast %276 : vector<16x1xf32> to vector<16x32xf32>
    %278 = arith.mulf %268, %277 : vector<16x32xf32>
    %279 = vector.broadcast %260 : vector<1x32xf32> to vector<16x32xf32>
    %280 = arith.mulf %278, %279 : vector<16x32xf32>
    %281 = vector.broadcast %262 : vector<1x32xf32> to vector<16x32xf32>
    %282 = arith.addf %280, %281 : vector<16x32xf32>
    %c1_121 = arith.constant 1 : index
    %c0_122 = arith.constant 0 : index
    %c0_123 = arith.constant 0 : index
    %283 = vector.load %arg10[%c1_121, %c0_122, %c0_123] : memref<2x32x32xf32, #tpu.memory_space<vmem>>, vector<1x32x32xf32>
    %284 = vector.shape_cast %283 : vector<1x32x32xf32> to vector<32x32xf32>
    %cst_124 = arith.constant dense<0.000000e+00> : vector<16x32xf32>
    %285 = tpu.matmul %282, %284, %cst_124 {dimension_numbers = #tpu.dot_dimension_numbers<[1], [0], [0], [1], [0, 0, 1, 1], [], []>} : vector<16x32xf32>, vector<32x32xf32>, vector<16x32xf32> -> vector<16x32xf32>
    %c1_125 = arith.constant 1 : index
    %c0_126 = arith.constant 0 : index
    %c0_127 = arith.constant 0 : index
    %286 = vector.load %arg11[%c1_125, %c0_126, %c0_127] : memref<2x1x32xf32, #tpu.memory_space<vmem>>, vector<1x1x32xf32>
    %287 = vector.shape_cast %286 : vector<1x1x32xf32> to vector<1x32xf32>
    %288 = vector.broadcast %287 : vector<1x32xf32> to vector<16x32xf32>
    %289 = arith.addf %285, %288 : vector<16x32xf32>
    %cst_128 = arith.constant 0.000000e+00 : f32
    %290 = vector.broadcast %cst_128 : f32 to vector<16x32xf32>
    %291 = arith.maximumf %289, %290 : vector<16x32xf32>
    %c1_129 = arith.constant 1 : index
    %c0_130 = arith.constant 0 : index
    %c0_131 = arith.constant 0 : index
    %292 = vector.load %arg12[%c1_129, %c0_130, %c0_131] : memref<2x32x32xf32, #tpu.memory_space<vmem>>, vector<1x32x32xf32>
    %293 = vector.shape_cast %292 : vector<1x32x32xf32> to vector<32x32xf32>
    %cst_132 = arith.constant dense<0.000000e+00> : vector<16x32xf32>
    %294 = tpu.matmul %291, %293, %cst_132 {dimension_numbers = #tpu.dot_dimension_numbers<[1], [0], [0], [1], [0, 0, 1, 1], [], []>} : vector<16x32xf32>, vector<32x32xf32>, vector<16x32xf32> -> vector<16x32xf32>
    %c1_133 = arith.constant 1 : index
    %c0_134 = arith.constant 0 : index
    %c0_135 = arith.constant 0 : index
    %295 = vector.load %arg13[%c1_133, %c0_134, %c0_135] : memref<2x1x32xf32, #tpu.memory_space<vmem>>, vector<1x1x32xf32>
    %296 = vector.shape_cast %295 : vector<1x1x32xf32> to vector<1x32xf32>
    %297 = vector.broadcast %296 : vector<1x32xf32> to vector<16x32xf32>
    %298 = arith.addf %294, %297 : vector<16x32xf32>
    %cst_136 = arith.constant 0.000000e+00 : f32
    %299 = vector.broadcast %cst_136 : f32 to vector<16x32xf32>
    %300 = arith.maximumf %298, %299 : vector<16x32xf32>
    %301 = arith.addf %282, %300 : vector<16x32xf32>
    %c1_137 = arith.constant 1 : index
    %c0_138 = arith.constant 0 : index
    %c0_139 = arith.constant 0 : index
    %302 = vector.load %arg14[%c1_137, %c0_138, %c0_139] : memref<2x1x32xf32, #tpu.memory_space<vmem>>, vector<1x1x32xf32>
    %303 = vector.shape_cast %302 : vector<1x1x32xf32> to vector<1x32xf32>
    %c1_140 = arith.constant 1 : index
    %c0_141 = arith.constant 0 : index
    %c0_142 = arith.constant 0 : index
    %304 = vector.load %arg15[%c1_140, %c0_141, %c0_142] : memref<2x1x32xf32, #tpu.memory_space<vmem>>, vector<1x1x32xf32>
    %305 = vector.shape_cast %304 : vector<1x1x32xf32> to vector<1x32xf32>
    %cst_143 = arith.constant dense<0.000000e+00> : vector<16xf32>
    %306 = vector.multi_reduction <add>, %301, %cst_143 [1] : vector<16x32xf32> to vector<16xf32>
    %307 = vector.shape_cast %306 : vector<16xf32> to vector<16x1xf32>
    %cst_144 = arith.constant 3.200000e+01 : f32
    %308 = vector.broadcast %cst_144 : f32 to vector<16x1xf32>
    %309 = arith.divf %307, %308 : vector<16x1xf32>
    %310 = vector.broadcast %309 : vector<16x1xf32> to vector<16x32xf32>
    %311 = arith.subf %301, %310 : vector<16x32xf32>
    %312 = arith.mulf %311, %311 : vector<16x32xf32>
    %cst_145 = arith.constant dense<0.000000e+00> : vector<16xf32>
    %313 = vector.multi_reduction <add>, %312, %cst_145 [1] : vector<16x32xf32> to vector<16xf32>
    %314 = vector.shape_cast %313 : vector<16xf32> to vector<16x1xf32>
    %cst_146 = arith.constant 3.200000e+01 : f32
    %315 = vector.broadcast %cst_146 : f32 to vector<16x1xf32>
    %316 = arith.divf %314, %315 : vector<16x1xf32>
    %cst_147 = arith.constant 9.99999974E-6 : f32
    %317 = vector.broadcast %cst_147 : f32 to vector<16x1xf32>
    %318 = arith.addf %316, %317 : vector<16x1xf32>
    %319 = math.rsqrt %318 : vector<16x1xf32>
    %320 = vector.broadcast %319 : vector<16x1xf32> to vector<16x32xf32>
    %321 = arith.mulf %311, %320 : vector<16x32xf32>
    %322 = vector.broadcast %303 : vector<1x32xf32> to vector<16x32xf32>
    %323 = arith.mulf %321, %322 : vector<16x32xf32>
    %324 = vector.broadcast %305 : vector<1x32xf32> to vector<16x32xf32>
    %325 = arith.addf %323, %324 : vector<16x32xf32>
    %326 = vector.extract_strided_slice %325 {offsets = [0, 0], sizes = [8, 32], strides = [1, 1]} : vector<16x32xf32> to vector<8x32xf32>
    %327 = vector.extract_strided_slice %325 {offsets = [8, 0], sizes = [8, 32], strides = [1, 1]} : vector<16x32xf32> to vector<8x32xf32>
    %328 = arith.maximumf %326, %327 : vector<8x32xf32>
    %c0_148 = arith.constant 0 : index
    %c0_149 = arith.constant 0 : index
    %329 = vector.load %arg16[%c0_148, %c0_149] : memref<32x8xf32, #tpu.memory_space<vmem>>, vector<32x8xf32>
    %cst_150 = arith.constant dense<0.000000e+00> : vector<8x8xf32>
    %330 = tpu.matmul %328, %329, %cst_150 {dimension_numbers = #tpu.dot_dimension_numbers<[1], [0], [0], [1], [0, 0, 1, 1], [], []>} : vector<8x32xf32>, vector<32x8xf32>, vector<8x8xf32> -> vector<8x8xf32>
    %c0_151 = arith.constant 0 : index
    %c0_152 = arith.constant 0 : index
    %331 = vector.load %arg17[%c0_151, %c0_152] : memref<1x8xf32, #tpu.memory_space<vmem>>, vector<1x8xf32>
    %332 = vector.broadcast %331 : vector<1x8xf32> to vector<8x8xf32>
    %333 = arith.addf %330, %332 : vector<8x8xf32>
    %cst_153 = arith.constant dense<0xFF800000> : vector<8xf32>
    %334 = vector.multi_reduction <maximumf>, %333, %cst_153 [1] : vector<8x8xf32> to vector<8xf32>
    %335 = vector.shape_cast %334 : vector<8xf32> to vector<8x1xf32>
    %336 = vector.broadcast %335 : vector<8x1xf32> to vector<8x8xf32>
    %337 = arith.subf %333, %336 : vector<8x8xf32>
    %338 = math.exp %337 : vector<8x8xf32>
    %cst_154 = arith.constant dense<0.000000e+00> : vector<8xf32>
    %339 = vector.multi_reduction <add>, %338, %cst_154 [1] : vector<8x8xf32> to vector<8xf32>
    %340 = vector.shape_cast %339 : vector<8xf32> to vector<8x1xf32>
    %341 = math.log %340 : vector<8x1xf32>
    %342 = vector.broadcast %341 : vector<8x1xf32> to vector<8x8xf32>
    %343 = arith.subf %337, %342 : vector<8x8xf32>
    %c0_155 = arith.constant 0 : index
    %c0_156 = arith.constant 0 : index
    %344 = vector.load %arg18[%c0_155, %c0_156] : memref<8x8xf32, #tpu.memory_space<vmem>>, vector<8x8xf32>
    tpu.vector_store %arg18[%c0_155, %c0_156], %343 {strides = array<i32>} : memref<8x8xf32, #tpu.memory_space<vmem>>, vector<8x8xf32>,
    return
  }
}

</mosaic_0001>

<llo_original>
// kernel: transformer_encoder_forward.1
$region0: #{transformer_encoder_forward.1}
  #allocation0 [shape = 'u32[]', space=smem, size = 0x4, offset = 0x4, fixed_abs, tag = 'smem constant byte address 0x4 - core index']
  #allocation1 [shape = 'u32[144,128]{1,0:T(1,128)}', space=vmem, size = 0x12000, scoped, tag = 'internal scratch']
  %s0 = inlined_call_operand.vmem [shape: f32[16,32], index: 0, kind: input, shape index: {}]
  %s1 = inlined_call_operand.vmem [shape: f32[8,32], index: 1, kind: input, shape index: {}]
  %s2 = inlined_call_operand.hbm [shape: f32[1,32], index: 2, kind: input, shape index: {}]
  %s3 = inlined_call_operand.hbm [shape: f32[1,32], index: 3, kind: input, shape index: {}]
  %s4 = inlined_call_operand.vmem [shape: f32[2,32,96], index: 4, kind: input, shape index: {}]
  %s5 = inlined_call_operand.hbm [shape: f32[2,1,96], index: 5, kind: input, shape index: {}]
  %s6 = inlined_call_operand.vmem [shape: f32[2,32,32], index: 6, kind: input, shape index: {}]
  %s7 = inlined_call_operand.hbm [shape: f32[2,1,32], index: 7, kind: input, shape index: {}]
  %s8 = inlined_call_operand.hbm [shape: f32[2,1,32], index: 8, kind: input, shape index: {}]
  %s9 = inlined_call_operand.hbm [shape: f32[2,1,32], index: 9, kind: input, shape index: {}]
  %s10 = inlined_call_operand.hbm [shape: f32[2,32,32], index: 10, kind: input, shape index: {}]
  %s11 = inlined_call_operand.hbm [shape: f32[2,1,32], index: 11, kind: input, shape index: {}]
  %s12 = inlined_call_operand.hbm [shape: f32[2,32,32], index: 12, kind: input, shape index: {}]
  %s13 = inlined_call_operand.hbm [shape: f32[2,1,32], index: 13, kind: input, shape index: {}]
  %s14 = inlined_call_operand.hbm [shape: f32[2,1,32], index: 14, kind: input, shape index: {}]
  %s15 = inlined_call_operand.hbm [shape: f32[2,1,32], index: 15, kind: input, shape index: {}]
  %s16 = inlined_call_operand.vmem [shape: f32[32,8], index: 16, kind: input, shape index: {}]
  %s17 = inlined_call_operand.hbm [shape: f32[1,8], index: 17, kind: input, shape index: {}]
  %s18 = inlined_call_operand.hbm [shape: f32[8,8], index: 18, kind: output, shape index: {}]
  %s19 = sld [smem:[#allocation0]]
  $region134: #{transformer_encoder_forward.1} parent=0
    _
  %s21 = ssub.s32 1, %s19
  %s22 = scalar_select 0, %s21, %s19
  $region1: #{transformer_encoder_forward.1} parent=0
    #allocation2 [shape = 'u8[512]{0}', space=vmem, size = 0x400, scoped, tag = 'input window, operand 2, single buffered']
    #allocation3 [shape = 's32[1]{0}', space=sflag, size = 0x4, scoped, tag = 'scoped memory for transformer_encoder_forward.1']
    #allocation4 [shape = 's32[1]{0}', space=sflag, size = 0x4, scoped, tag = 'scoped memory for transformer_encoder_forward.1']
    #allocation5 [shape = 'u8[512]{0}', space=vmem, size = 0x400, scoped, tag = 'input window, operand 3, single buffered']
    #allocation6 [shape = 's32[1]{0}', space=sflag, size = 0x4, scoped, tag = 'scoped memory for transformer_encoder_forward.1']
    #allocation7 [shape = 'u8[1024]{0}', space=vmem, size = 0x400, scoped, tag = 'input window, operand 5, single buffered']
    #allocation8 [shape = 'u8[1024]{0}', space=vmem, size = 0x400, scoped, tag = 'input window, operand 7, single buffered']
    #allocation9 [shape = 's32[1]{0}', space=sflag, size = 0x4, scoped, tag = 'scoped memory for transformer_encoder_forward.1']
    #allocation10 [shape = 'u8[1024]{0}', space=vmem, size = 0x400, scoped, tag = 'input window, operand 8, single buffered']
    #allocation11 [shape = 'u8[1024]{0}', space=vmem, size = 0x400, scoped, tag = 'input window, operand 9, single buffered']
    #allocation12 [shape = 's32[1]{0}', space=sflag, size = 0x4, scoped, tag = 'scoped memory for transformer_encoder_forward.1']
    #allocation13 [shape = 'u8[32768]{0}', space=vmem, size = 0x8000, scoped, tag = 'input window, operand 10, single buffered']
    #allocation14 [shape = 'u8[1024]{0}', space=vmem, size = 0x400, scoped, tag = 'input window, operand 11, single buffered']
    #allocation15 [shape = 's32[1]{0}', space=sflag, size = 0x4, scoped, tag = 'scoped memory for transformer_encoder_forward.1']
    #allocation16 [shape = 'u8[32768]{0}', space=vmem, size = 0x8000, scoped, tag = 'input window, operand 12, single buffered']
    #allocation17 [shape = 'u8[1024]{0}', space=vmem, size = 0x400, scoped, tag = 'input window, operand 13, single buffered']
    #allocation18 [shape = 's32[1]{0}', space=sflag, size = 0x4, scoped, tag = 'scoped memory for transformer_encoder_forward.1']
    #allocation19 [shape = 'u8[1024]{0}', space=vmem, size = 0x400, scoped, tag = 'input window, operand 14, single buffered']
    #allocation20 [shape = 'u8[1024]{0}', space=vmem, size = 0x400, scoped, tag = 'input window, operand 15, single buffered']
    #allocation21 [shape = 's32[1]{0}', space=sflag, size = 0x4, scoped, tag = 'scoped memory for transformer_encoder_forward.1']
    #allocation22 [shape = 'u8[512]{0}', space=vmem, size = 0x400, scoped, tag = 'input window, operand 17, single buffered']
    #allocation23 [shape = 'u8[4096]{0}', space=vmem, size = 0x1000, scoped, tag = 'output window, operand 0, single buffered']
    %23 = vsyncpa [#allocation3], 0
    %24 = vsyncpa [#allocation6], 0
    %25 = vsyncpa [#allocation9], 0
    %26 = vsyncpa [#allocation12], 0
    %27 = vsyncpa [#allocation15], 0
    %28 = vsyncpa [#allocation18], 0
    %29 = vsyncpa [#allocation21], 0
    %30 = vsyncpa [#allocation4], 0
    // Predicated region
    $region2: #{transformer_encoder_forward.1} parent=1 // pred_check
      _
    $region3: #{transformer_encoder_forward.1} parent=1 // pred_check_branch
      %32 = sbr.rel (0) target = $region5
    $region4: #{transformer_encoder_forward.1} parent=1 // pred_region
      _
    $region5: #{transformer_encoder_forward.1} parent=1 // pred_fallthru
      _
    // Predicated region
    $region6: #{transformer_encoder_forward.1} parent=1 // pred_check
      _
    $region7: #{transformer_encoder_forward.1} parent=1 // pred_check_branch
      %34 = sbr.rel (0) target = $region9
    $region8: #{transformer_encoder_forward.1} parent=1 // pred_region
      _
    $region9: #{transformer_encoder_forward.1} parent=1 // pred_fallthru
      _
    // Predicated region
    $region10: #{transformer_encoder_forward.1} parent=1 // pred_check
      _
    $region11: #{transformer_encoder_forward.1} parent=1 // pred_check_branch
      %36 = sbr.rel (0) target = $region13
    $region12: #{transformer_encoder_forward.1} parent=1 // pred_region
      %s38 = ssub.s32 16, 16
      %39 = vsyncadd [#allocation3], %s38
      %s41 = sshll.u32 [#allocation2], 4
      %s42 = int_to_ptr.vmem [resolvable:$true] %s41
      %44 = dma.hbm_to_vmem [thread:$0]  %s2, 16, %s42, [#allocation3]
    $region13: #{transformer_encoder_forward.1} parent=1 // pred_fallthru
      _
    // Predicated region
    $region14: #{transformer_encoder_forward.1} parent=1 // pred_check
      _
    $region15: #{transformer_encoder_forward.1} parent=1 // pred_check_branch
      %46 = sbr.rel (0) target = $region17
    $region16: #{transformer_encoder_forward.1} parent=1 // pred_region
      %s48 = ssub.s32 16, 16
      %49 = vsyncadd [#allocation6], %s48
      %s51 = sshll.u32 [#allocation5], 4
      %s52 = int_to_ptr.vmem [resolvable:$true] %s51
      %54 = dma.hbm_to_vmem [thread:$0]  %s3, 16, %s52, [#allocation6]
    $region17: #{transformer_encoder_forward.1} parent=1 // pred_fallthru
      _
    // Predicated region
    $region18: #{transformer_encoder_forward.1} parent=1 // pred_check
      _
    $region19: #{transformer_encoder_forward.1} parent=1 // pred_check_branch
      %56 = sbr.rel (0) target = $region21
    $region20: #{transformer_encoder_forward.1} parent=1 // pred_region
      _
    $region21: #{transformer_encoder_forward.1} parent=1 // pred_fallthru
      _
    // Predicated region
    $region22: #{transformer_encoder_forward.1} parent=1 // pred_check
      _
    $region23: #{transformer_encoder_forward.1} parent=1 // pred_check_branch
      %58 = sbr.rel (0) target = $region25
    $region24: #{transformer_encoder_forward.1} parent=1 // pred_region
      %s60 = ssub.s32 32, 32
      %61 = vsyncadd [#allocation6], %s60
      %s62 = sshll.u32 [#allocation7], 4
      %s63 = int_to_ptr.vmem [resolvable:$true] %s62
      %68 = dma.hbm_to_vmem [thread:$0]  %s5, 32, %s63, [#allocation6], 16, 16, 1
    $region25: #{transformer_encoder_forward.1} parent=1 // pred_fallthru
      _
    // Predicated region
    $region26: #{transformer_encoder_forward.1} parent=1 // pred_check
      _
    $region27: #{transformer_encoder_forward.1} parent=1 // pred_check_branch
      %70 = sbr.rel (0) target = $region29
    $region28: #{transformer_encoder_forward.1} parent=1 // pred_region
      _
    $region29: #{transformer_encoder_forward.1} parent=1 // pred_fallthru
      _
    // Predicated region
    $region30: #{transformer_encoder_forward.1} parent=1 // pred_check
      _
    $region31: #{transformer_encoder_forward.1} parent=1 // pred_check_branch
      %72 = sbr.rel (0) target = $region33
    $region32: #{transformer_encoder_forward.1} parent=1 // pred_region
      %s74 = ssub.s32 32, 32
      %75 = vsyncadd [#allocation9], %s74
      %s76 = sshll.u32 [#allocation8], 4
      %s77 = int_to_ptr.vmem [resolvable:$true] %s76
      %82 = dma.hbm_to_vmem [thread:$0]  %s7, 32, %s77, [#allocation9], 16, 16, 1
    $region33: #{transformer_encoder_forward.1} parent=1 // pred_fallthru
      _
    // Predicated region
    $region34: #{transformer_encoder_forward.1} parent=1 // pred_check
      _
    $region35: #{transformer_encoder_forward.1} parent=1 // pred_check_branch
      %84 = sbr.rel (0) target = $region37
    $region36: #{transformer_encoder_forward.1} parent=1 // pred_region
      %s86 = ssub.s32 32, 32
      %87 = vsyncadd [#allocation9], %s86
      %s88 = sshll.u32 [#allocation10], 4
      %s89 = int_to_ptr.vmem [resolvable:$true] %s88
      %94 = dma.hbm_to_vmem [thread:$0]  %s8, 32, %s89, [#allocation9], 16, 16, 1
    $region37: #{transformer_encoder_forward.1} parent=1 // pred_fallthru
      _
    // Predicated region
    $region38: #{transformer_encoder_forward.1} parent=1 // pred_check
      _
    $region39: #{transformer_encoder_forward.1} parent=1 // pred_check_branch
      %96 = sbr.rel (0) target = $region41
    $region40: #{transformer_encoder_forward.1} parent=1 // pred_region
      %s98 = ssub.s32 32, 32
      %99 = vsyncadd [#allocation12], %s98
      %s100 = sshll.u32 [#allocation11], 4
      %s101 = int_to_ptr.vmem [resolvable:$true] %s100
      %106 = dma.hbm_to_vmem [thread:$0]  %s9, 32, %s101, [#allocation12], 16, 16, 1
    $region41: #{transformer_encoder_forward.1} parent=1 // pred_fallthru
      _
    // Predicated region
    $region42: #{transformer_encoder_forward.1} parent=1 // pred_check
      _
    $region43: #{transformer_encoder_forward.1} parent=1 // pred_check_branch
      %108 = sbr.rel (0) target = $region45
    $region44: #{transformer_encoder_forward.1} parent=1 // pred_region
      %s110 = ssub.s32 1024, 1024
      %111 = vsyncadd [#allocation12], %s110
      %s112 = sshll.u32 [#allocation13], 4
      %s113 = int_to_ptr.vmem [resolvable:$true] %s112
      %118 = dma.hbm_to_vmem [thread:$0]  %s10, 1024, %s113, [#allocation12], 128, 128, 8
    $region45: #{transformer_encoder_forward.1} parent=1 // pred_fallthru
      _
    // Predicated region
    $region46: #{transformer_encoder_forward.1} parent=1 // pred_check
      _
    $region47: #{transformer_encoder_forward.1} parent=1 // pred_check_branch
      %120 = sbr.rel (0) target = $region49
    $region48: #{transformer_encoder_forward.1} parent=1 // pred_region
      %s122 = ssub.s32 32, 32
      %123 = vsyncadd [#allocation15], %s122
      %s124 = sshll.u32 [#allocation14], 4
      %s125 = int_to_ptr.vmem [resolvable:$true] %s124
      %130 = dma.hbm_to_vmem [thread:$0]  %s11, 32, %s125, [#allocation15], 16, 16, 1
    $region49: #{transformer_encoder_forward.1} parent=1 // pred_fallthru
      _
    // Predicated region
    $region50: #{transformer_encoder_forward.1} parent=1 // pred_check
      _
    $region51: #{transformer_encoder_forward.1} parent=1 // pred_check_branch
      %132 = sbr.rel (0) target = $region53
    $region52: #{transformer_encoder_forward.1} parent=1 // pred_region
      %s134 = ssub.s32 1024, 1024
      %135 = vsyncadd [#allocation15], %s134
      %s136 = sshll.u32 [#allocation16], 4
      %s137 = int_to_ptr.vmem [resolvable:$true] %s136
      %142 = dma.hbm_to_vmem [thread:$0]  %s12, 1024, %s137, [#allocation15], 128, 128, 8
    $region53: #{transformer_encoder_forward.1} parent=1 // pred_fallthru
      _
    // Predicated region
    $region54: #{transformer_encoder_forward.1} parent=1 // pred_check
      _
    $region55: #{transformer_encoder_forward.1} parent=1 // pred_check_branch
      %144 = sbr.rel (0) target = $region57
    $region56: #{transformer_encoder_forward.1} parent=1 // pred_region
      %s146 = ssub.s32 32, 32
      %147 = vsyncadd [#allocation18], %s146
      %s148 = sshll.u32 [#allocation17], 4
      %s149 = int_to_ptr.vmem [resolvable:$true] %s148
      %154 = dma.hbm_to_vmem [thread:$0]  %s13, 32, %s149, [#allocation18], 16, 16, 1
    $region57: #{transformer_encoder_forward.1} parent=1 // pred_fallthru
      _
    // Predicated region
    $region58: #{transformer_encoder_forward.1} parent=1 // pred_check
      _
    $region59: #{transformer_encoder_forward.1} parent=1 // pred_check_branch
      %156 = sbr.rel (0) target = $region61
    $region60: #{transformer_encoder_forward.1} parent=1 // pred_region
      %s158 = ssub.s32 32, 32
      %159 = vsyncadd [#allocation18], %s158
      %s160 = sshll.u32 [#allocation19], 4
      %s161 = int_to_ptr.vmem [resolvable:$true] %s160
      %166 = dma.hbm_to_vmem [thread:$0]  %s14, 32, %s161, [#allocation18], 16, 16, 1
    $region61: #{transformer_encoder_forward.1} parent=1 // pred_fallthru
      _
    // Predicated region
    $region62: #{transformer_encoder_forward.1} parent=1 // pred_check
      _
    $region63: #{transformer_encoder_forward.1} parent=1 // pred_check_branch
      %168 = sbr.rel (0) target = $region65
    $region64: #{transformer_encoder_forward.1} parent=1 // pred_region
      %s170 = ssub.s32 32, 32
      %171 = vsyncadd [#allocation21], %s170
      %s172 = sshll.u32 [#allocation20], 4
      %s173 = int_to_ptr.vmem [resolvable:$true] %s172
      %178 = dma.hbm_to_vmem [thread:$0]  %s15, 32, %s173, [#allocation21], 16, 16, 1
    $region65: #{transformer_encoder_forward.1} parent=1 // pred_fallthru
      _
    // Predicated region
    $region66: #{transformer_encoder_forward.1} parent=1 // pred_check
      _
    $region67: #{transformer_encoder_forward.1} parent=1 // pred_check_branch
      %180 = sbr.rel (0) target = $region69
    $region68: #{transformer_encoder_forward.1} parent=1 // pred_region
      _
    $region69: #{transformer_encoder_forward.1} parent=1 // pred_fallthru
      _
    // Predicated region
    $region70: #{transformer_encoder_forward.1} parent=1 // pred_check
      _
    $region71: #{transformer_encoder_forward.1} parent=1 // pred_check_branch
      %182 = sbr.rel (0) target = $region73
    $region72: #{transformer_encoder_forward.1} parent=1 // pred_region
      %s184 = ssub.s32 16, 16
      %185 = vsyncadd [#allocation21], %s184
      %s187 = sshll.u32 [#allocation22], 4
      %s188 = int_to_ptr.vmem [resolvable:$true] %s187
      %190 = dma.hbm_to_vmem [thread:$0]  %s17, 16, %s188, [#allocation21]
    $region73: #{transformer_encoder_forward.1} parent=1 // pred_fallthru
      _
    // Predicated region
    $region74: #{transformer_encoder_forward.1} parent=1 // pred_check
      _
    $region75: #{transformer_encoder_forward.1} parent=1 // pred_check_branch
      %192 = sbr.rel (0) target = $region77
    $region76: #{transformer_encoder_forward.1} parent=1 // pred_region
      %193 = dma.done [#allocation3], 16
    $region77: #{transformer_encoder_forward.1} parent=1 // pred_fallthru
      _
    // Predicated region
    $region78: #{transformer_encoder_forward.1} parent=1 // pred_check
      _
    $region79: #{transformer_encoder_forward.1} parent=1 // pred_check_branch
      %195 = sbr.rel (0) target = $region81
    $region80: #{transformer_encoder_forward.1} parent=1 // pred_region
      %196 = dma.done [#allocation6], 16
    $region81: #{transformer_encoder_forward.1} parent=1 // pred_fallthru
      _
    // Predicated region
    $region82: #{transformer_encoder_forward.1} parent=1 // pred_check
      _
    $region83: #{transformer_encoder_forward.1} parent=1 // pred_check_branch
      %198 = sbr.rel (0) target = $region85
    $region84: #{transformer_encoder_forward.1} parent=1 // pred_region
      %199 = dma.done [#allocation6], 32
    $region85: #{transformer_encoder_forward.1} parent=1 // pred_fallthru
      _
    // Predicated region
    $region86: #{transformer_encoder_forward.1} parent=1 // pred_check
      _
    $region87: #{transformer_encoder_forward.1} parent=1 // pred_check_branch
      %201 = sbr.rel (0) target = $region89
    $region88: #{transformer_encoder_forward.1} parent=1 // pred_region
      %202 = dma.done [#allocation9], 32
    $region89: #{transformer_encoder_forward.1} parent=1 // pred_fallthru
      _
    // Predicated region
    $region90: #{transformer_encoder_forward.1} parent=1 // pred_check
      _
    $region91: #{transformer_encoder_forward.1} parent=1 // pred_check_branch
      %204 = sbr.rel (0) target = $region93
    $region92: #{transformer_encoder_forward.1} parent=1 // pred_region
      %205 = dma.done [#allocation9], 32
    $region93: #{transformer_encoder_forward.1} parent=1 // pred_fallthru
      _
    // Predicated region
    $region94: #{transformer_encoder_forward.1} parent=1 // pred_check
      _
    $region95: #{transformer_encoder_forward.1} parent=1 // pred_check_branch
      %207 = sbr.rel (0) target = $region97
    $region96: #{transformer_encoder_forward.1} parent=1 // pred_region
      %208 = dma.done [#allocation12], 32
    $region97: #{transformer_encoder_forward.1} parent=1 // pred_fallthru
      _
    // Predicated region
    $region98: #{transformer_encoder_forward.1} parent=1 // pred_check
      _
    $region99: #{transformer_encoder_forward.1} parent=1 // pred_check_branch
      %210 = sbr.rel (0) target = $region101
    $region100: #{transformer_encoder_forward.1} parent=1 // pred_region
      %211 = dma.done [#allocation12], 1024
    $region101: #{transformer_encoder_forward.1} parent=1 // pred_fallthru
      _
    // Predicated region
    $region102: #{transformer_encoder_forward.1} parent=1 // pred_check
      _
    $region103: #{transformer_encoder_forward.1} parent=1 // pred_check_branch
      %213 = sbr.rel (0) target = $region105
    $region104: #{transformer_encoder_forward.1} parent=1 // pred_region
      %214 = dma.done [#allocation15], 32
    $region105: #{transformer_encoder_forward.1} parent=1 // pred_fallthru
      _
    // Predicated region
    $region106: #{transformer_encoder_forward.1} parent=1 // pred_check
      _
    $region107: #{transformer_encoder_forward.1} parent=1 // pred_check_branch
      %216 = sbr.rel (0) target = $region109
    $region108: #{transformer_encoder_forward.1} parent=1 // pred_region
      %217 = dma.done [#allocation15], 1024
    $region109: #{transformer_encoder_forward.1} parent=1 // pred_fallthru
      _
    // Predicated region
    $region110: #{transformer_encoder_forward.1} parent=1 // pred_check
      _
    $region111: #{transformer_encoder_forward.1} parent=1 // pred_check_branch
      %219 = sbr.rel (0) target = $region113
    $region112: #{transformer_encoder_forward.1} parent=1 // pred_region
      %220 = dma.done [#allocation18], 32
    $region113: #{transformer_encoder_forward.1} parent=1 // pred_fallthru
      _
    // Predicated region
    $region114: #{transformer_encoder_forward.1} parent=1 // pred_check
      _
    $region115: #{transformer_encoder_forward.1} parent=1 // pred_check_branch
      %222 = sbr.rel (0) target = $region117
    $region116: #{transformer_encoder_forward.1} parent=1 // pred_region
      %223 = dma.done [#allocation18], 32
    $region117: #{transformer_encoder_forward.1} parent=1 // pred_fallthru
      _
    // Predicated region
    $region118: #{transformer_encoder_forward.1} parent=1 // pred_check
      _
    $region119: #{transformer_encoder_forward.1} parent=1 // pred_check_branch
      %225 = sbr.rel (0) target = $region121
    $region120: #{transformer_encoder_forward.1} parent=1 // pred_region
      %226 = dma.done [#allocation21], 32
    $region121: #{transformer_encoder_forward.1} parent=1 // pred_fallthru
      _
    // Predicated region
    $region122: #{transformer_encoder_forward.1} parent=1 // pred_check
      _
    $region123: #{transformer_encoder_forward.1} parent=1 // pred_check_branch
      %228 = sbr.rel (0) target = $region125
    $region124: #{transformer_encoder_forward.1} parent=1 // pred_region
      %229 = dma.done [#allocation21], 16
    $region125: #{transformer_encoder_forward.1} parent=1 // pred_fallthru
      _
    %v230 = vld [vmem:[%s1] sm:$0xff]
    %v231 = vld [vmem:[%s0] sm:$0xff]
    %v232 = vld [vmem:[%s0 + $0x8] sm:$0xff]
    %v233 = vadd.f32 %v231, %v230
    %v234 = vadd.f32 %v232, %v230
    %v235 = vld [vmem:[#allocation2] sm:$0x1]
    %v236 = vld [vmem:[#allocation5] sm:$0x1]
    %vm237 = vcmask 261120
    %v238 = vsel %vm237, %v233, 0.0
    %239 = vadd.xlane.f32.xlu0 %v238
    %v240 = vpop.xlane.xlu0 %239
    %v241 = vsel %vm237, %v234, 0.0
    %242 = vadd.xlane.f32.xlu0 %v241
    %v243 = vpop.xlane.xlu0 %242
    %v244 = vrcp.pop 32.0
    %v245 = vmul.f32 %v240, %v244
    %v246 = vmul.f32 %v243, %v244
    %v247 = vsub.f32 %v233, %v245
    %v248 = vsub.f32 %v234, %v246
    %v249 = vmul.f32 %v247, %v247
    %v250 = vmul.f32 %v248, %v248
    %v251 = vsel %vm237, %v249, 0.0
    %252 = vadd.xlane.f32.xlu0 %v251
    %v253 = vpop.xlane.xlu0 %252
    %v254 = vsel %vm237, %v250, 0.0
    %255 = vadd.xlane.f32.xlu0 %v254
    %v256 = vpop.xlane.xlu0 %255
    %v257 = vmul.f32 %v253, %v244
    %v258 = vmul.f32 %v256, %v244
    %v259 = vadd.f32 %v257, 1e-09
    %v260 = vadd.f32 %v258, 1e-09
    %v261 = vrsqrt.pop %v259
    %v262 = vrsqrt.pop %v260
    %v263 = vmul.f32 %v247, %v261
    %v264 = vmul.f32 %v248, %v262
    %v266 = vlaneseq
    %v267 = vshrl.u32 %v266, 7
    %v268 = vsub.s32 0, %v267
    %v269 = vrot.slane %v235, %v268
    %v271 = vmul.f32 %v263, %v269
    %v272 = vmul.f32 %v264, %v269
    %v274 = vlaneseq
    %v275 = vshrl.u32 %v274, 7
    %v276 = vsub.s32 0, %v275
    %v277 = vrot.slane %v236, %v276
    %v279 = vadd.f32 %v271, %v277
    %v280 = vadd.f32 %v272, %v277
    %v281 = vld [vmem:[%s4] sm:$0xff]
    %v282 = vld [vmem:[%s4 + $0x8] sm:$0xff]
    %v283 = vld [vmem:[%s4 + $0x10] sm:$0xff]
    %v284 = vld [vmem:[%s4 + $0x18] sm:$0xff]
    %v285 = vld [vmem:[#allocation7] sm:$0x1]
    %v286 = vld [vmem:[%s6] sm:$0xff]
    %v287 = vld [vmem:[%s6 + $0x8] sm:$0xff]
    %v288 = vld [vmem:[%s6 + $0x10] sm:$0xff]
    %v289 = vld [vmem:[%s6 + $0x18] sm:$0xff]
    %v290 = vld [vmem:[#allocation8] sm:$0x1]
    %v292 = vlaneseq
    %v293 = vshrl.u32 %v292, 7
    %v294 = vsub.s32 0, %v293
    %v295 = vrot.slane %v285, %v294
    %v298 = vsel %vm237, %v279, 0
    %v301 = vsel %vm237, %v280, 0
    %303 = vmatprep.subr.mxu0 0.0
    %304 = vmatpush1.msra.mxu0 %v281
    %305 = vmatprep.subr.mxu0 0.0
    %306 = vmatpush1.msra.mxu0 %v282
    %307 = vmatprep.subr.mxu0 0.0
    %308 = vmatpush1.msra.mxu0 %v283
    %309 = vmatprep.subr.mxu0 0.0
    %310 = vmatpush1.msra.mxu0 %v284
    %311 = vmatprep.subr.mxu0 0.0
    %312 = vmatpush1.msra.mxu0 0.0
    %313 = vmatprep.subr.mxu0 0.0
    %314 = vmatpush1.msra.mxu0 0.0
    %315 = vmatprep.subr.mxu0 0.0
    %316 = vmatpush1.msra.mxu0 0.0
    %317 = vmatprep.subr.mxu0 0.0
    %318 = vmatpush1.msra.mxu0 0.0
    %319 = vmatprep.subr.mxu0 0.0
    %320 = vmatpush1.msra.mxu0 0.0
    %321 = vmatprep.subr.mxu0 0.0
    %322 = vmatpush1.msra.mxu0 0.0
    %323 = vmatprep.subr.mxu0 0.0
    %324 = vmatpush1.msra.mxu0 0.0
    %325 = vmatprep.subr.mxu0 0.0
    %326 = vmatpush1.msra.mxu0 0.0
    %327 = vmatprep.subr.mxu0 0.0
    %328 = vmatpush1.msra.mxu0 0.0
    %329 = vmatprep.subr.mxu0 0.0
    %330 = vmatpush1.msra.mxu0 0.0
    %331 = vmatprep.subr.mxu0 0.0
    %332 = vmatpush1.msra.mxu0 0.0
    %333 = vmatprep.subr.mxu0 0.0
    %334 = vmatpush1.msra.mxu0 0.0
    %335 = vmatprep.subr.mxu0 0.0
    %336 = vmatpush1.msra.mxu0 0.0
    %337 = vmatprep.subr.mxu0 0.0
    %338 = vmatpush1.msra.mxu0 0.0
    %339 = vmatprep.subr.mxu0 0.0
    %340 = vmatpush1.msra.mxu0 0.0
    %341 = vmatprep.subr.mxu0 0.0
    %342 = vmatpush1.msra.mxu0 0.0
    %343 = vmatprep.subr.mxu0 0.0
    %344 = vmatpush1.msra.mxu0 0.0
    %345 = vmatprep.subr.mxu0 0.0
    %346 = vmatpush1.msra.mxu0 0.0
    %347 = vmatprep.subr.mxu0 0.0
    %348 = vmatpush1.msra.mxu0 0.0
    %349 = vmatprep.subr.mxu0 0.0
    %350 = vmatpush1.msra.mxu0 0.0
    %351 = vmatprep.subr.mxu0 0.0
    %352 = vmatpush1.msra.mxu0 0.0
    %353 = vmatprep.subr.mxu0 0.0
    %354 = vmatpush1.msra.mxu0 0.0
    %355 = vmatprep.subr.mxu0 0.0
    %356 = vmatpush1.msra.mxu0 0.0
    %357 = vmatprep.subr.mxu0 0.0
    %358 = vmatpush1.msra.mxu0 0.0
    %359 = vmatprep.subr.mxu0 0.0
    %360 = vmatpush1.msra.mxu0 0.0
    %361 = vmatprep.subr.mxu0 0.0
    %362 = vmatpush1.msra.mxu0 0.0
    %363 = vmatprep.subr.mxu0 0.0
    %364 = vmatpush1.msra.mxu0 0.0
    %365 = vmatprep.subr.mxu0 0.0
    %366 = vmatpush1.msra.mxu0 0.0
    %367 = vmatprep.mubr.f32.mxu0 0.0
    %368 = vmatmul.mubr.f32.gmra.mrb[0].mxu0 %v298
    %v369 = vpop.f32.mrb[0].mxu0
    %v370 = vadd.f32 %v295, %v369
    %v371 = vpop.f32.mrb[0].mxu0
    %372 = vmatprep.mubr.f32.mxu0 0.0
    %373 = vmatmul.mubr.f32.gmra.mrb[0].mxu0 %v301
    %v374 = vpop.f32.mrb[0].mxu0
    %v375 = vadd.f32 %v295, %v374
    %v376 = vpop.f32.mrb[0].mxu0
    %377 = vdwg.mxu0
    %v378 = vmul.f32 %v370, 0.35355338
    %v379 = vmul.f32 %v375, 0.35355338
    %381 = vrot.lane.b32.xlu0 %v370, 96
    %v382 = vpop.permute.xlu0 %381
    %vm383 = vcmask 64512
    %v385 = vsel %vm383, %v378, 0
    %v387 = vsel %vm383, %v382, 0
    %389 = vmatprep.subr.mxu0 0.0
    %390 = vmatpush1.xpose.msra.mxu0 %v387
    %391 = vmatprep.subr.mxu0 0.0
    %392 = vmatpush1.xpose.msra.mxu0 0.0
    %393 = vmatprep.subr.mxu0 0.0
    %394 = vmatpush1.xpose.msra.mxu0 0.0
    %395 = vmatprep.subr.mxu0 0.0
    %396 = vmatpush1.xpose.msra.mxu0 0.0
    %397 = vmatprep.subr.mxu0 0.0
    %398 = vmatpush1.xpose.msra.mxu0 0.0
    %399 = vmatprep.subr.mxu0 0.0
    %400 = vmatpush1.xpose.msra.mxu0 0.0
    %401 = vmatprep.subr.mxu0 0.0
    %402 = vmatpush1.xpose.msra.mxu0 0.0
    %403 = vmatprep.subr.mxu0 0.0
    %404 = vmatpush1.xpose.msra.mxu0 0.0
    %405 = vmatprep.subr.mxu0 0.0
    %406 = vmatpush1.xpose.msra.mxu0 0.0
    %407 = vmatprep.subr.mxu0 0.0
    %408 = vmatpush1.xpose.msra.mxu0 0.0
    %409 = vmatprep.subr.mxu0 0.0
    %410 = vmatpush1.xpose.msra.mxu0 0.0
    %411 = vmatprep.subr.mxu0 0.0
    %412 = vmatpush1.xpose.msra.mxu0 0.0
    %413 = vmatprep.subr.mxu0 0.0
    %414 = vmatpush1.xpose.msra.mxu0 0.0
    %415 = vmatprep.subr.mxu0 0.0
    %416 = vmatpush1.xpose.msra.mxu0 0.0
    %417 = vmatprep.subr.mxu0 0.0
    %418 = vmatpush1.xpose.msra.mxu0 0.0
    %419 = vmatprep.subr.mxu0 0.0
    %420 = vmatpush1.xpose.msra.mxu0 0.0
    %421 = vmatprep.subr.mxu0 0.0
    %422 = vmatpush1.xpose.msra.mxu0 0.0
    %423 = vmatprep.subr.mxu0 0.0
    %424 = vmatpush1.xpose.msra.mxu0 0.0
    %425 = vmatprep.subr.mxu0 0.0
    %426 = vmatpush1.xpose.msra.mxu0 0.0
    %427 = vmatprep.subr.mxu0 0.0
    %428 = vmatpush1.xpose.msra.mxu0 0.0
    %429 = vmatprep.subr.mxu0 0.0
    %430 = vmatpush1.xpose.msra.mxu0 0.0
    %431 = vmatprep.subr.mxu0 0.0
    %432 = vmatpush1.xpose.msra.mxu0 0.0
    %433 = vmatprep.subr.mxu0 0.0
    %434 = vmatpush1.xpose.msra.mxu0 0.0
    %435 = vmatprep.subr.mxu0 0.0
    %436 = vmatpush1.xpose.msra.mxu0 0.0
    %437 = vmatprep.subr.mxu0 0.0
    %438 = vmatpush1.xpose.msra.mxu0 0.0
    %439 = vmatprep.subr.mxu0 0.0
    %440 = vmatpush1.xpose.msra.mxu0 0.0
    %441 = vmatprep.subr.mxu0 0.0
    %442 = vmatpush1.xpose.msra.mxu0 0.0
    %443 = vmatprep.subr.mxu0 0.0
    %444 = vmatpush1.xpose.msra.mxu0 0.0
    %445 = vmatprep.subr.mxu0 0.0
    %446 = vmatpush1.xpose.msra.mxu0 0.0
    %447 = vmatprep.subr.mxu0 0.0
    %448 = vmatpush1.xpose.msra.mxu0 0.0
    %449 = vmatprep.subr.mxu0 0.0
    %450 = vmatpush1.xpose.msra.mxu0 0.0
    %451 = vmatprep.subr.mxu0 0.0
    %452 = vmatpush1.xpose.msra.mxu0 0.0
    %453 = vmatprep.mubr.f32.mxu0 0.0
    %454 = vmatmul.mubr.f32.gmra.mrb[0].mxu0 %v385
    %v455 = vpop.f32.mrb[0].mxu0
    %v456 = vadd.f32 0.0, %v455
    %v457 = vpop.f32.mrb[0].mxu0
    %458 = vdwg.mxu0
    %460 = vrot.lane.b32.xlu0 %v375, 96
    %v461 = vpop.permute.xlu0 %460
    %v463 = vsel %vm383, %v379, 0
    %v465 = vsel %vm383, %v461, 0
    %467 = vmatprep.subr.mxu0 0.0
    %468 = vmatpush1.xpose.msra.mxu0 %v465
    %469 = vmatprep.subr.mxu0 0.0
    %470 = vmatpush1.xpose.msra.mxu0 0.0
    %471 = vmatprep.subr.mxu0 0.0
    %472 = vmatpush1.xpose.msra.mxu0 0.0
    %473 = vmatprep.subr.mxu0 0.0
    %474 = vmatpush1.xpose.msra.mxu0 0.0
    %475 = vmatprep.subr.mxu0 0.0
    %476 = vmatpush1.xpose.msra.mxu0 0.0
    %477 = vmatprep.subr.mxu0 0.0
    %478 = vmatpush1.xpose.msra.mxu0 0.0
    %479 = vmatprep.subr.mxu0 0.0
    %480 = vmatpush1.xpose.msra.mxu0 0.0
    %481 = vmatprep.subr.mxu0 0.0
    %482 = vmatpush1.xpose.msra.mxu0 0.0
    %483 = vmatprep.subr.mxu0 0.0
    %484 = vmatpush1.xpose.msra.mxu0 0.0
    %485 = vmatprep.subr.mxu0 0.0
    %486 = vmatpush1.xpose.msra.mxu0 0.0
    %487 = vmatprep.subr.mxu0 0.0
    %488 = vmatpush1.xpose.msra.mxu0 0.0
    %489 = vmatprep.subr.mxu0 0.0
    %490 = vmatpush1.xpose.msra.mxu0 0.0
    %491 = vmatprep.subr.mxu0 0.0
    %492 = vmatpush1.xpose.msra.mxu0 0.0
    %493 = vmatprep.subr.mxu0 0.0
    %494 = vmatpush1.xpose.msra.mxu0 0.0
    %495 = vmatprep.subr.mxu0 0.0
    %496 = vmatpush1.xpose.msra.mxu0 0.0
    %497 = vmatprep.subr.mxu0 0.0
    %498 = vmatpush1.xpose.msra.mxu0 0.0
    %499 = vmatprep.subr.mxu0 0.0
    %500 = vmatpush1.xpose.msra.mxu0 0.0
    %501 = vmatprep.subr.mxu0 0.0
    %502 = vmatpush1.xpose.msra.mxu0 0.0
    %503 = vmatprep.subr.mxu0 0.0
    %504 = vmatpush1.xpose.msra.mxu0 0.0
    %505 = vmatprep.subr.mxu0 0.0
    %506 = vmatpush1.xpose.msra.mxu0 0.0
    %507 = vmatprep.subr.mxu0 0.0
    %508 = vmatpush1.xpose.msra.mxu0 0.0
    %509 = vmatprep.subr.mxu0 0.0
    %510 = vmatpush1.xpose.msra.mxu0 0.0
    %511 = vmatprep.subr.mxu0 0.0
    %512 = vmatpush1.xpose.msra.mxu0 0.0
    %513 = vmatprep.subr.mxu0 0.0
    %514 = vmatpush1.xpose.msra.mxu0 0.0
    %515 = vmatprep.subr.mxu0 0.0
    %516 = vmatpush1.xpose.msra.mxu0 0.0
    %517 = vmatprep.subr.mxu0 0.0
    %518 = vmatpush1.xpose.msra.mxu0 0.0
    %519 = vmatprep.subr.mxu0 0.0
    %520 = vmatpush1.xpose.msra.mxu0 0.0
    %521 = vmatprep.subr.mxu0 0.0
    %522 = vmatpush1.xpose.msra.mxu0 0.0
    %523 = vmatprep.subr.mxu0 0.0
    %524 = vmatpush1.xpose.msra.mxu0 0.0
    %525 = vmatprep.subr.mxu0 0.0
    %526 = vmatpush1.xpose.msra.mxu0 0.0
    %527 = vmatprep.subr.mxu0 0.0
    %528 = vmatpush1.xpose.msra.mxu0 0.0
    %529 = vmatprep.subr.mxu0 0.0
    %530 = vmatpush1.xpose.msra.mxu0 0.0
    %531 = vmatprep.mubr.f32.mxu0 0.0
    %532 = vmatmul.mubr.f32.gmra.mrb[0].mxu0 %v463
    %v533 = vpop.f32.mrb[0].mxu0
    %v534 = vadd.f32 0.0, %v533
    %v535 = vpop.f32.mrb[0].mxu0
    %536 = vdwg.mxu0
    %v537 = vsel %vm383, %v456, -inf
    %538 = vmax.xlane.f32.xlu0 %v537
    %v539 = vpop.xlane.xlu0 %538
    %v540 = vsel %vm383, %v534, -inf
    %541 = vmax.xlane.f32.xlu0 %v540
    %v542 = vpop.xlane.xlu0 %541
    %v543 = vsub.f32 %v456, %v539
    %v544 = vsub.f32 %v534, %v542
    %v545 = vmul.f32 %v543, 1.442695
    %v546 = vpow.pop %v545
    %v547 = vmul.f32 %v544, 1.442695
    %v548 = vpow.pop %v547
    %v549 = vsel %vm383, %v546, 0.0
    %550 = vadd.xlane.f32.xlu0 %v549
    %v551 = vpop.xlane.xlu0 %550
    %v552 = vsel %vm383, %v548, 0.0
    %553 = vadd.xlane.f32.xlu0 %v552
    %v554 = vpop.xlane.xlu0 %553
    %v555 = vrcp.pop %v551
    %v556 = vrcp.pop %v554
    %v557 = vmul.f32 %v546, %v555
    %v558 = vmul.f32 %v548, %v556
    %559 = vrot.lane.b32.xlu0 %v370, 64
    %v560 = vpop.permute.xlu0 %559
    %v563 = vsel %vm383, %v557, 0
    %565 = vmatprep.subr.mxu0 0.0
    %566 = vmatpush1.msra.mxu0 %v560
    %567 = vmatprep.subr.mxu0 0.0
    %568 = vmatpush1.msra.mxu0 0.0
    %569 = vmatprep.subr.mxu0 0.0
    %570 = vmatpush1.msra.mxu0 0.0
    %571 = vmatprep.subr.mxu0 0.0
    %572 = vmatpush1.msra.mxu0 0.0
    %573 = vmatprep.subr.mxu0 0.0
    %574 = vmatpush1.msra.mxu0 0.0
    %575 = vmatprep.subr.mxu0 0.0
    %576 = vmatpush1.msra.mxu0 0.0
    %577 = vmatprep.subr.mxu0 0.0
    %578 = vmatpush1.msra.mxu0 0.0
    %579 = vmatprep.subr.mxu0 0.0
    %580 = vmatpush1.msra.mxu0 0.0
    %581 = vmatprep.subr.mxu0 0.0
    %582 = vmatpush1.msra.mxu0 0.0
    %583 = vmatprep.subr.mxu0 0.0
    %584 = vmatpush1.msra.mxu0 0.0
    %585 = vmatprep.subr.mxu0 0.0
    %586 = vmatpush1.msra.mxu0 0.0
    %587 = vmatprep.subr.mxu0 0.0
    %588 = vmatpush1.msra.mxu0 0.0
    %589 = vmatprep.subr.mxu0 0.0
    %590 = vmatpush1.msra.mxu0 0.0
    %591 = vmatprep.subr.mxu0 0.0
    %592 = vmatpush1.msra.mxu0 0.0
    %593 = vmatprep.subr.mxu0 0.0
    %594 = vmatpush1.msra.mxu0 0.0
    %595 = vmatprep.subr.mxu0 0.0
    %596 = vmatpush1.msra.mxu0 0.0
    %597 = vmatprep.subr.mxu0 0.0
    %598 = vmatpush1.msra.mxu0 0.0
    %599 = vmatprep.subr.mxu0 0.0
    %600 = vmatpush1.msra.mxu0 0.0
    %601 = vmatprep.subr.mxu0 0.0
    %602 = vmatpush1.msra.mxu0 0.0
    %603 = vmatprep.subr.mxu0 0.0
    %604 = vmatpush1.msra.mxu0 0.0
    %605 = vmatprep.subr.mxu0 0.0
    %606 = vmatpush1.msra.mxu0 0.0
    %607 = vmatprep.subr.mxu0 0.0
    %608 = vmatpush1.msra.mxu0 0.0
    %609 = vmatprep.subr.mxu0 0.0
    %610 = vmatpush1.msra.mxu0 0.0
    %611 = vmatprep.subr.mxu0 0.0
    %612 = vmatpush1.msra.mxu0 0.0
    %613 = vmatprep.subr.mxu0 0.0
    %614 = vmatpush1.msra.mxu0 0.0
    %615 = vmatprep.subr.mxu0 0.0
    %616 = vmatpush1.msra.mxu0 0.0
    %617 = vmatprep.subr.mxu0 0.0
    %618 = vmatpush1.msra.mxu0 0.0
    %619 = vmatprep.subr.mxu0 0.0
    %620 = vmatpush1.msra.mxu0 0.0
    %621 = vmatprep.subr.mxu0 0.0
    %622 = vmatpush1.msra.mxu0 0.0
    %623 = vmatprep.subr.mxu0 0.0
    %624 = vmatpush1.msra.mxu0 0.0
    %625 = vmatprep.subr.mxu0 0.0
    %626 = vmatpush1.msra.mxu0 0.0
    %627 = vmatprep.subr.mxu0 0.0
    %628 = vmatpush1.msra.mxu0 0.0
    %629 = vmatprep.mubr.f32.mxu0 0.0
    %630 = vmatmul.mubr.f32.gmra.mrb[0].mxu0 %v563
    %v631 = vpop.f32.mrb[0].mxu0
    %v632 = vadd.f32 0.0, %v631
    %v633 = vpop.f32.mrb[0].mxu0
    %634 = vdwg.mxu0
    %635 = vrot.lane.b32.xlu0 %v375, 64
    %v636 = vpop.permute.xlu0 %635
    %v639 = vsel %vm383, %v558, 0
    %641 = vmatprep.subr.mxu0 0.0
    %642 = vmatpush1.msra.mxu0 %v636
    %643 = vmatprep.subr.mxu0 0.0
    %644 = vmatpush1.msra.mxu0 0.0
    %645 = vmatprep.subr.mxu0 0.0
    %646 = vmatpush1.msra.mxu0 0.0
    %647 = vmatprep.subr.mxu0 0.0
    %648 = vmatpush1.msra.mxu0 0.0
    %649 = vmatprep.subr.mxu0 0.0
    %650 = vmatpush1.msra.mxu0 0.0
    %651 = vmatprep.subr.mxu0 0.0
    %652 = vmatpush1.msra.mxu0 0.0
    %653 = vmatprep.subr.mxu0 0.0
    %654 = vmatpush1.msra.mxu0 0.0
    %655 = vmatprep.subr.mxu0 0.0
    %656 = vmatpush1.msra.mxu0 0.0
    %657 = vmatprep.subr.mxu0 0.0
    %658 = vmatpush1.msra.mxu0 0.0
    %659 = vmatprep.subr.mxu0 0.0
    %660 = vmatpush1.msra.mxu0 0.0
    %661 = vmatprep.subr.mxu0 0.0
    %662 = vmatpush1.msra.mxu0 0.0
    %663 = vmatprep.subr.mxu0 0.0
    %664 = vmatpush1.msra.mxu0 0.0
    %665 = vmatprep.subr.mxu0 0.0
    %666 = vmatpush1.msra.mxu0 0.0
    %667 = vmatprep.subr.mxu0 0.0
    %668 = vmatpush1.msra.mxu0 0.0
    %669 = vmatprep.subr.mxu0 0.0
    %670 = vmatpush1.msra.mxu0 0.0
    %671 = vmatprep.subr.mxu0 0.0
    %672 = vmatpush1.msra.mxu0 0.0
    %673 = vmatprep.subr.mxu0 0.0
    %674 = vmatpush1.msra.mxu0 0.0
    %675 = vmatprep.subr.mxu0 0.0
    %676 = vmatpush1.msra.mxu0 0.0
    %677 = vmatprep.subr.mxu0 0.0
    %678 = vmatpush1.msra.mxu0 0.0
    %679 = vmatprep.subr.mxu0 0.0
    %680 = vmatpush1.msra.mxu0 0.0
    %681 = vmatprep.subr.mxu0 0.0
    %682 = vmatpush1.msra.mxu0 0.0
    %683 = vmatprep.subr.mxu0 0.0
    %684 = vmatpush1.msra.mxu0 0.0
    %685 = vmatprep.subr.mxu0 0.0
    %686 = vmatpush1.msra.mxu0 0.0
    %687 = vmatprep.subr.mxu0 0.0
    %688 = vmatpush1.msra.mxu0 0.0
    %689 = vmatprep.subr.mxu0 0.0
    %690 = vmatpush1.msra.mxu0 0.0
    %691 = vmatprep.subr.mxu0 0.0
    %692 = vmatpush1.msra.mxu0 0.0
    %693 = vmatprep.subr.mxu0 0.0
    %694 = vmatpush1.msra.mxu0 0.0
    %695 = vmatprep.subr.mxu0 0.0
    %696 = vmatpush1.msra.mxu0 0.0
    %697 = vmatprep.subr.mxu0 0.0
    %698 = vmatpush1.msra.mxu0 0.0
    %699 = vmatprep.subr.mxu0 0.0
    %700 = vmatpush1.msra.mxu0 0.0
    %701 = vmatprep.subr.mxu0 0.0
    %702 = vmatpush1.msra.mxu0 0.0
    %703 = vmatprep.subr.mxu0 0.0
    %704 = vmatpush1.msra.mxu0 0.0
    %705 = vmatprep.mubr.f32.mxu0 0.0
    %706 = vmatmul.mubr.f32.gmra.mrb[0].mxu0 %v639
    %v707 = vpop.f32.mrb[0].mxu0
    %v708 = vadd.f32 0.0, %v707
    %v709 = vpop.f32.mrb[0].mxu0
    %710 = vdwg.mxu0
    %711 = vrot.lane.b32.xlu0 %v378, 120
    %v712 = vpop.permute.xlu0 %711
    %713 = vrot.lane.b32.xlu0 %v370, 88
    %v714 = vpop.permute.xlu0 %713
    %v715 = vsel %vm383, %v712, 0
    %v717 = vsel %vm383, %v714, 0
    %719 = vmatprep.subr.mxu0 0.0
    %720 = vmatpush1.xpose.msra.mxu0 %v717
    %721 = vmatprep.subr.mxu0 0.0
    %722 = vmatpush1.xpose.msra.mxu0 0.0
    %723 = vmatprep.subr.mxu0 0.0
    %724 = vmatpush1.xpose.msra.mxu0 0.0
    %725 = vmatprep.subr.mxu0 0.0
    %726 = vmatpush1.xpose.msra.mxu0 0.0
    %727 = vmatprep.subr.mxu0 0.0
    %728 = vmatpush1.xpose.msra.mxu0 0.0
    %729 = vmatprep.subr.mxu0 0.0
    %730 = vmatpush1.xpose.msra.mxu0 0.0
    %731 = vmatprep.subr.mxu0 0.0
    %732 = vmatpush1.xpose.msra.mxu0 0.0
    %733 = vmatprep.subr.mxu0 0.0
    %734 = vmatpush1.xpose.msra.mxu0 0.0
    %735 = vmatprep.subr.mxu0 0.0
    %736 = vmatpush1.xpose.msra.mxu0 0.0
    %737 = vmatprep.subr.mxu0 0.0
    %738 = vmatpush1.xpose.msra.mxu0 0.0
    %739 = vmatprep.subr.mxu0 0.0
    %740 = vmatpush1.xpose.msra.mxu0 0.0
    %741 = vmatprep.subr.mxu0 0.0
    %742 = vmatpush1.xpose.msra.mxu0 0.0
    %743 = vmatprep.subr.mxu0 0.0
    %744 = vmatpush1.xpose.msra.mxu0 0.0
    %745 = vmatprep.subr.mxu0 0.0
    %746 = vmatpush1.xpose.msra.mxu0 0.0
    %747 = vmatprep.subr.mxu0 0.0
    %748 = vmatpush1.xpose.msra.mxu0 0.0
    %749 = vmatprep.subr.mxu0 0.0
    %750 = vmatpush1.xpose.msra.mxu0 0.0
    %751 = vmatprep.subr.mxu0 0.0
    %752 = vmatpush1.xpose.msra.mxu0 0.0
    %753 = vmatprep.subr.mxu0 0.0
    %754 = vmatpush1.xpose.msra.mxu0 0.0
    %755 = vmatprep.subr.mxu0 0.0
    %756 = vmatpush1.xpose.msra.mxu0 0.0
    %757 = vmatprep.subr.mxu0 0.0
    %758 = vmatpush1.xpose.msra.mxu0 0.0
    %759 = vmatprep.subr.mxu0 0.0
    %760 = vmatpush1.xpose.msra.mxu0 0.0
    %761 = vmatprep.subr.mxu0 0.0
    %762 = vmatpush1.xpose.msra.mxu0 0.0
    %763 = vmatprep.subr.mxu0 0.0
    %764 = vmatpush1.xpose.msra.mxu0 0.0
    %765 = vmatprep.subr.mxu0 0.0
    %766 = vmatpush1.xpose.msra.mxu0 0.0
    %767 = vmatprep.subr.mxu0 0.0
    %768 = vmatpush1.xpose.msra.mxu0 0.0
    %769 = vmatprep.subr.mxu0 0.0
    %770 = vmatpush1.xpose.msra.mxu0 0.0
    %771 = vmatprep.subr.mxu0 0.0
    %772 = vmatpush1.xpose.msra.mxu0 0.0
    %773 = vmatprep.subr.mxu0 0.0
    %774 = vmatpush1.xpose.msra.mxu0 0.0
    %775 = vmatprep.subr.mxu0 0.0
    %776 = vmatpush1.xpose.msra.mxu0 0.0
    %777 = vmatprep.subr.mxu0 0.0
    %778 = vmatpush1.xpose.msra.mxu0 0.0
    %779 = vmatprep.subr.mxu0 0.0
    %780 = vmatpush1.xpose.msra.mxu0 0.0
    %781 = vmatprep.subr.mxu0 0.0
    %782 = vmatpush1.xpose.msra.mxu0 0.0
    %783 = vmatprep.mubr.f32.mxu0 0.0
    %784 = vmatmul.mubr.f32.gmra.mrb[0].mxu0 %v715
    %v785 = vpop.f32.mrb[0].mxu0
    %v786 = vadd.f32 0.0, %v785
    %v787 = vpop.f32.mrb[0].mxu0
    %788 = vdwg.mxu0
    %789 = vrot.lane.b32.xlu0 %v379, 120
    %v790 = vpop.permute.xlu0 %789
    %791 = vrot.lane.b32.xlu0 %v375, 88
    %v792 = vpop.permute.xlu0 %791
    %v793 = vsel %vm383, %v790, 0
    %v795 = vsel %vm383, %v792, 0
    %797 = vmatprep.subr.mxu0 0.0
    %798 = vmatpush1.xpose.msra.mxu0 %v795
    %799 = vmatprep.subr.mxu0 0.0
    %800 = vmatpush1.xpose.msra.mxu0 0.0
    %801 = vmatprep.subr.mxu0 0.0
    %802 = vmatpush1.xpose.msra.mxu0 0.0
    %803 = vmatprep.subr.mxu0 0.0
    %804 = vmatpush1.xpose.msra.mxu0 0.0
    %805 = vmatprep.subr.mxu0 0.0
    %806 = vmatpush1.xpose.msra.mxu0 0.0
    %807 = vmatprep.subr.mxu0 0.0
    %808 = vmatpush1.xpose.msra.mxu0 0.0
    %809 = vmatprep.subr.mxu0 0.0
    %810 = vmatpush1.xpose.msra.mxu0 0.0
    %811 = vmatprep.subr.mxu0 0.0
    %812 = vmatpush1.xpose.msra.mxu0 0.0
    %813 = vmatprep.subr.mxu0 0.0
    %814 = vmatpush1.xpose.msra.mxu0 0.0
    %815 = vmatprep.subr.mxu0 0.0
    %816 = vmatpush1.xpose.msra.mxu0 0.0
    %817 = vmatprep.subr.mxu0 0.0
    %818 = vmatpush1.xpose.msra.mxu0 0.0
    %819 = vmatprep.subr.mxu0 0.0
    %820 = vmatpush1.xpose.msra.mxu0 0.0
    %821 = vmatprep.subr.mxu0 0.0
    %822 = vmatpush1.xpose.msra.mxu0 0.0
    %823 = vmatprep.subr.mxu0 0.0
    %824 = vmatpush1.xpose.msra.mxu0 0.0
    %825 = vmatprep.subr.mxu0 0.0
    %826 = vmatpush1.xpose.msra.mxu0 0.0
    %827 = vmatprep.subr.mxu0 0.0
    %828 = vmatpush1.xpose.msra.mxu0 0.0
    %829 = vmatprep.subr.mxu0 0.0
    %830 = vmatpush1.xpose.msra.mxu0 0.0
    %831 = vmatprep.subr.mxu0 0.0
    %832 = vmatpush1.xpose.msra.mxu0 0.0
    %833 = vmatprep.subr.mxu0 0.0
    %834 = vmatpush1.xpose.msra.mxu0 0.0
    %835 = vmatprep.subr.mxu0 0.0
    %836 = vmatpush1.xpose.msra.mxu0 0.0
    %837 = vmatprep.subr.mxu0 0.0
    %838 = vmatpush1.xpose.msra.mxu0 0.0
    %839 = vmatprep.subr.mxu0 0.0
    %840 = vmatpush1.xpose.msra.mxu0 0.0
    %841 = vmatprep.subr.mxu0 0.0
    %842 = vmatpush1.xpose.msra.mxu0 0.0
    %843 = vmatprep.subr.mxu0 0.0
    %844 = vmatpush1.xpose.msra.mxu0 0.0
    %845 = vmatprep.subr.mxu0 0.0
    %846 = vmatpush1.xpose.msra.mxu0 0.0
    %847 = vmatprep.subr.mxu0 0.0
    %848 = vmatpush1.xpose.msra.mxu0 0.0
    %849 = vmatprep.subr.mxu0 0.0
    %850 = vmatpush1.xpose.msra.mxu0 0.0
    %851 = vmatprep.subr.mxu0 0.0
    %852 = vmatpush1.xpose.msra.mxu0 0.0
    %853 = vmatprep.subr.mxu0 0.0
    %854 = vmatpush1.xpose.msra.mxu0 0.0
    %855 = vmatprep.subr.mxu0 0.0
    %856 = vmatpush1.xpose.msra.mxu0 0.0
    %857 = vmatprep.subr.mxu0 0.0
    %858 = vmatpush1.xpose.msra.mxu0 0.0
    %859 = vmatprep.subr.mxu0 0.0
    %860 = vmatpush1.xpose.msra.mxu0 0.0
    %861 = vmatprep.mubr.f32.mxu0 0.0
    %862 = vmatmul.mubr.f32.gmra.mrb[0].mxu0 %v793
    %v863 = vpop.f32.mrb[0].mxu0
    %v864 = vadd.f32 0.0, %v863
    %v865 = vpop.f32.mrb[0].mxu0
    %866 = vdwg.mxu0
    %v867 = vsel %vm383, %v786, -inf
    %868 = vmax.xlane.f32.xlu0 %v867
    %v869 = vpop.xlane.xlu0 %868
    %v870 = vsel %vm383, %v864, -inf
    %871 = vmax.xlane.f32.xlu0 %v870
    %v872 = vpop.xlane.xlu0 %871
    %v873 = vsub.f32 %v786, %v869
    %v874 = vsub.f32 %v864, %v872
    %v875 = vmul.f32 %v873, 1.442695
    %v876 = vpow.pop %v875
    %v877 = vmul.f32 %v874, 1.442695
    %v878 = vpow.pop %v877
    %v879 = vsel %vm383, %v876, 0.0
    %880 = vadd.xlane.f32.xlu0 %v879
    %v881 = vpop.xlane.xlu0 %880
    %v882 = vsel %vm383, %v878, 0.0
    %883 = vadd.xlane.f32.xlu0 %v882
    %v884 = vpop.xlane.xlu0 %883
    %v885 = vrcp.pop %v881
    %v886 = vrcp.pop %v884
    %v887 = vmul.f32 %v876, %v885
    %v888 = vmul.f32 %v878, %v886
    %889 = vrot.lane.b32.xlu0 %v370, 56
    %v890 = vpop.permute.xlu0 %889
    %v893 = vsel %vm383, %v887, 0
    %895 = vmatprep.subr.mxu0 0.0
    %896 = vmatpush1.msra.mxu0 %v890
    %897 = vmatprep.subr.mxu0 0.0
    %898 = vmatpush1.msra.mxu0 0.0
    %899 = vmatprep.subr.mxu0 0.0
    %900 = vmatpush1.msra.mxu0 0.0
    %901 = vmatprep.subr.mxu0 0.0
    %902 = vmatpush1.msra.mxu0 0.0
    %903 = vmatprep.subr.mxu0 0.0
    %904 = vmatpush1.msra.mxu0 0.0
    %905 = vmatprep.subr.mxu0 0.0
    %906 = vmatpush1.msra.mxu0 0.0
    %907 = vmatprep.subr.mxu0 0.0
    %908 = vmatpush1.msra.mxu0 0.0
    %909 = vmatprep.subr.mxu0 0.0
    %910 = vmatpush1.msra.mxu0 0.0
    %911 = vmatprep.subr.mxu0 0.0
    %912 = vmatpush1.msra.mxu0 0.0
    %913 = vmatprep.subr.mxu0 0.0
    %914 = vmatpush1.msra.mxu0 0.0
    %915 = vmatprep.subr.mxu0 0.0
    %916 = vmatpush1.msra.mxu0 0.0
    %917 = vmatprep.subr.mxu0 0.0
    %918 = vmatpush1.msra.mxu0 0.0
    %919 = vmatprep.subr.mxu0 0.0
    %920 = vmatpush1.msra.mxu0 0.0
    %921 = vmatprep.subr.mxu0 0.0
    %922 = vmatpush1.msra.mxu0 0.0
    %923 = vmatprep.subr.mxu0 0.0
    %924 = vmatpush1.msra.mxu0 0.0
    %925 = vmatprep.subr.mxu0 0.0
    %926 = vmatpush1.msra.mxu0 0.0
    %927 = vmatprep.subr.mxu0 0.0
    %928 = vmatpush1.msra.mxu0 0.0
    %929 = vmatprep.subr.mxu0 0.0
    %930 = vmatpush1.msra.mxu0 0.0
    %931 = vmatprep.subr.mxu0 0.0
    %932 = vmatpush1.msra.mxu0 0.0
    %933 = vmatprep.subr.mxu0 0.0
    %934 = vmatpush1.msra.mxu0 0.0
    %935 = vmatprep.subr.mxu0 0.0
    %936 = vmatpush1.msra.mxu0 0.0
    %937 = vmatprep.subr.mxu0 0.0
    %938 = vmatpush1.msra.mxu0 0.0
    %939 = vmatprep.subr.mxu0 0.0
    %940 = vmatpush1.msra.mxu0 0.0
    %941 = vmatprep.subr.mxu0 0.0
    %942 = vmatpush1.msra.mxu0 0.0
    %943 = vmatprep.subr.mxu0 0.0
    %944 = vmatpush1.msra.mxu0 0.0
    %945 = vmatprep.subr.mxu0 0.0
    %946 = vmatpush1.msra.mxu0 0.0
    %947 = vmatprep.subr.mxu0 0.0
    %948 = vmatpush1.msra.mxu0 0.0
    %949 = vmatprep.subr.mxu0 0.0
    %950 = vmatpush1.msra.mxu0 0.0
    %951 = vmatprep.subr.mxu0 0.0
    %952 = vmatpush1.msra.mxu0 0.0
    %953 = vmatprep.subr.mxu0 0.0
    %954 = vmatpush1.msra.mxu0 0.0
    %955 = vmatprep.subr.mxu0 0.0
    %956 = vmatpush1.msra.mxu0 0.0
    %957 = vmatprep.subr.mxu0 0.0
    %958 = vmatpush1.msra.mxu0 0.0
    %959 = vmatprep.mubr.f32.mxu0 0.0
    %960 = vmatmul.mubr.f32.gmra.mrb[0].mxu0 %v893
    %v961 = vpop.f32.mrb[0].mxu0
    %v962 = vadd.f32 0.0, %v961
    %v963 = vpop.f32.mrb[0].mxu0
    %964 = vdwg.mxu0
    %965 = vrot.lane.b32.xlu0 %v375, 56
    %v966 = vpop.permute.xlu0 %965
    %v969 = vsel %vm383, %v888, 0
    %971 = vmatprep.subr.mxu0 0.0
    %972 = vmatpush1.msra.mxu0 %v966
    %973 = vmatprep.subr.mxu0 0.0
    %974 = vmatpush1.msra.mxu0 0.0
    %975 = vmatprep.subr.mxu0 0.0
    %976 = vmatpush1.msra.mxu0 0.0
    %977 = vmatprep.subr.mxu0 0.0
    %978 = vmatpush1.msra.mxu0 0.0
    %979 = vmatprep.subr.mxu0 0.0
    %980 = vmatpush1.msra.mxu0 0.0
    %981 = vmatprep.subr.mxu0 0.0
    %982 = vmatpush1.msra.mxu0 0.0
    %983 = vmatprep.subr.mxu0 0.0
    %984 = vmatpush1.msra.mxu0 0.0
    %985 = vmatprep.subr.mxu0 0.0
    %986 = vmatpush1.msra.mxu0 0.0
    %987 = vmatprep.subr.mxu0 0.0
    %988 = vmatpush1.msra.mxu0 0.0
    %989 = vmatprep.subr.mxu0 0.0
    %990 = vmatpush1.msra.mxu0 0.0
    %991 = vmatprep.subr.mxu0 0.0
    %992 = vmatpush1.msra.mxu0 0.0
    %993 = vmatprep.subr.mxu0 0.0
    %994 = vmatpush1.msra.mxu0 0.0
    %995 = vmatprep.subr.mxu0 0.0
    %996 = vmatpush1.msra.mxu0 0.0
    %997 = vmatprep.subr.mxu0 0.0
    %998 = vmatpush1.msra.mxu0 0.0
    %999 = vmatprep.subr.mxu0 0.0
    %1000 = vmatpush1.msra.mxu0 0.0
    %1001 = vmatprep.subr.mxu0 0.0
    %1002 = vmatpush1.msra.mxu0 0.0
    %1003 = vmatprep.subr.mxu0 0.0
    %1004 = vmatpush1.msra.mxu0 0.0
    %1005 = vmatprep.subr.mxu0 0.0
    %1006 = vmatpush1.msra.mxu0 0.0
    %1007 = vmatprep.subr.mxu0 0.0
    %1008 = vmatpush1.msra.mxu0 0.0
    %1009 = vmatprep.subr.mxu0 0.0
    %1010 = vmatpush1.msra.mxu0 0.0
    %1011 = vmatprep.subr.mxu0 0.0
    %1012 = vmatpush1.msra.mxu0 0.0
    %1013 = vmatprep.subr.mxu0 0.0
    %1014 = vmatpush1.msra.mxu0 0.0
    %1015 = vmatprep.subr.mxu0 0.0
    %1016 = vmatpush1.msra.mxu0 0.0
    %1017 = vmatprep.subr.mxu0 0.0
    %1018 = vmatpush1.msra.mxu0 0.0
    %1019 = vmatprep.subr.mxu0 0.0
    %1020 = vmatpush1.msra.mxu0 0.0
    %1021 = vmatprep.subr.mxu0 0.0
    %1022 = vmatpush1.msra.mxu0 0.0
    %1023 = vmatprep.subr.mxu0 0.0
    %1024 = vmatpush1.msra.mxu0 0.0
    %1025 = vmatprep.subr.mxu0 0.0
    %1026 = vmatpush1.msra.mxu0 0.0
    %1027 = vmatprep.subr.mxu0 0.0
    %1028 = vmatpush1.msra.mxu0 0.0
    %1029 = vmatprep.subr.mxu0 0.0
    %1030 = vmatpush1.msra.mxu0 0.0
    %1031 = vmatprep.subr.mxu0 0.0
    %1032 = vmatpush1.msra.mxu0 0.0
    %1033 = vmatprep.subr.mxu0 0.0
    %1034 = vmatpush1.msra.mxu0 0.0
    %1035 = vmatprep.mubr.f32.mxu0 0.0
    %1036 = vmatmul.mubr.f32.gmra.mrb[0].mxu0 %v969
    %v1037 = vpop.f32.mrb[0].mxu0
    %v1038 = vadd.f32 0.0, %v1037
    %v1039 = vpop.f32.mrb[0].mxu0
    %1040 = vdwg.mxu0
    %1041 = vrot.lane.b32.xlu0 %v378, 112
    %v1042 = vpop.permute.xlu0 %1041
    %1043 = vrot.lane.b32.xlu0 %v370, 80
    %v1044 = vpop.permute.xlu0 %1043
    %v1045 = vsel %vm383, %v1042, 0
    %v1047 = vsel %vm383, %v1044, 0
    %1049 = vmatprep.subr.mxu0 0.0
    %1050 = vmatpush1.xpose.msra.mxu0 %v1047
    %1051 = vmatprep.subr.mxu0 0.0
    %1052 = vmatpush1.xpose.msra.mxu0 0.0
    %1053 = vmatprep.subr.mxu0 0.0
    %1054 = vmatpush1.xpose.msra.mxu0 0.0
    %1055 = vmatprep.subr.mxu0 0.0
    %1056 = vmatpush1.xpose.msra.mxu0 0.0
    %1057 = vmatprep.subr.mxu0 0.0
    %1058 = vmatpush1.xpose.msra.mxu0 0.0
    %1059 = vmatprep.subr.mxu0 0.0
    %1060 = vmatpush1.xpose.msra.mxu0 0.0
    %1061 = vmatprep.subr.mxu0 0.0
    %1062 = vmatpush1.xpose.msra.mxu0 0.0
    %1063 = vmatprep.subr.mxu0 0.0
    %1064 = vmatpush1.xpose.msra.mxu0 0.0
    %1065 = vmatprep.subr.mxu0 0.0
    %1066 = vmatpush1.xpose.msra.mxu0 0.0
    %1067 = vmatprep.subr.mxu0 0.0
    %1068 = vmatpush1.xpose.msra.mxu0 0.0
    %1069 = vmatprep.subr.mxu0 0.0
    %1070 = vmatpush1.xpose.msra.mxu0 0.0
    %1071 = vmatprep.subr.mxu0 0.0
    %1072 = vmatpush1.xpose.msra.mxu0 0.0
    %1073 = vmatprep.subr.mxu0 0.0
    %1074 = vmatpush1.xpose.msra.mxu0 0.0
    %1075 = vmatprep.subr.mxu0 0.0
    %1076 = vmatpush1.xpose.msra.mxu0 0.0
    %1077 = vmatprep.subr.mxu0 0.0
    %1078 = vmatpush1.xpose.msra.mxu0 0.0
    %1079 = vmatprep.subr.mxu0 0.0
    %1080 = vmatpush1.xpose.msra.mxu0 0.0
    %1081 = vmatprep.subr.mxu0 0.0
    %1082 = vmatpush1.xpose.msra.mxu0 0.0
    %1083 = vmatprep.subr.mxu0 0.0
    %1084 = vmatpush1.xpose.msra.mxu0 0.0
    %1085 = vmatprep.subr.mxu0 0.0
    %1086 = vmatpush1.xpose.msra.mxu0 0.0
    %1087 = vmatprep.subr.mxu0 0.0
    %1088 = vmatpush1.xpose.msra.mxu0 0.0
    %1089 = vmatprep.subr.mxu0 0.0
    %1090 = vmatpush1.xpose.msra.mxu0 0.0
    %1091 = vmatprep.subr.mxu0 0.0
    %1092 = vmatpush1.xpose.msra.mxu0 0.0
    %1093 = vmatprep.subr.mxu0 0.0
    %1094 = vmatpush1.xpose.msra.mxu0 0.0
    %1095 = vmatprep.subr.mxu0 0.0
    %1096 = vmatpush1.xpose.msra.mxu0 0.0
    %1097 = vmatprep.subr.mxu0 0.0
    %1098 = vmatpush1.xpose.msra.mxu0 0.0
    %1099 = vmatprep.subr.mxu0 0.0
    %1100 = vmatpush1.xpose.msra.mxu0 0.0
    %1101 = vmatprep.subr.mxu0 0.0
    %1102 = vmatpush1.xpose.msra.mxu0 0.0
    %1103 = vmatprep.subr.mxu0 0.0
    %1104 = vmatpush1.xpose.msra.mxu0 0.0
    %1105 = vmatprep.subr.mxu0 0.0
    %1106 = vmatpush1.xpose.msra.mxu0 0.0
    %1107 = vmatprep.subr.mxu0 0.0
    %1108 = vmatpush1.xpose.msra.mxu0 0.0
    %1109 = vmatprep.subr.mxu0 0.0
    %1110 = vmatpush1.xpose.msra.mxu0 0.0
    %1111 = vmatprep.subr.mxu0 0.0
    %1112 = vmatpush1.xpose.msra.mxu0 0.0
    %1113 = vmatprep.mubr.f32.mxu0 0.0
    %1114 = vmatmul.mubr.f32.gmra.mrb[0].mxu0 %v1045
    %v1115 = vpop.f32.mrb[0].mxu0
    %v1116 = vadd.f32 0.0, %v1115
    %v1117 = vpop.f32.mrb[0].mxu0
    %1118 = vdwg.mxu0
    %1119 = vrot.lane.b32.xlu0 %v379, 112
    %v1120 = vpop.permute.xlu0 %1119
    %1121 = vrot.lane.b32.xlu0 %v375, 80
    %v1122 = vpop.permute.xlu0 %1121
    %v1123 = vsel %vm383, %v1120, 0
    %v1125 = vsel %vm383, %v1122, 0
    %1127 = vmatprep.subr.mxu0 0.0
    %1128 = vmatpush1.xpose.msra.mxu0 %v1125
    %1129 = vmatprep.subr.mxu0 0.0
    %1130 = vmatpush1.xpose.msra.mxu0 0.0
    %1131 = vmatprep.subr.mxu0 0.0
    %1132 = vmatpush1.xpose.msra.mxu0 0.0
    %1133 = vmatprep.subr.mxu0 0.0
    %1134 = vmatpush1.xpose.msra.mxu0 0.0
    %1135 = vmatprep.subr.mxu0 0.0
    %1136 = vmatpush1.xpose.msra.mxu0 0.0
    %1137 = vmatprep.subr.mxu0 0.0
    %1138 = vmatpush1.xpose.msra.mxu0 0.0
    %1139 = vmatprep.subr.mxu0 0.0
    %1140 = vmatpush1.xpose.msra.mxu0 0.0
    %1141 = vmatprep.subr.mxu0 0.0
    %1142 = vmatpush1.xpose.msra.mxu0 0.0
    %1143 = vmatprep.subr.mxu0 0.0
    %1144 = vmatpush1.xpose.msra.mxu0 0.0
    %1145 = vmatprep.subr.mxu0 0.0
    %1146 = vmatpush1.xpose.msra.mxu0 0.0
    %1147 = vmatprep.subr.mxu0 0.0
    %1148 = vmatpush1.xpose.msra.mxu0 0.0
    %1149 = vmatprep.subr.mxu0 0.0
    %1150 = vmatpush1.xpose.msra.mxu0 0.0
    %1151 = vmatprep.subr.mxu0 0.0
    %1152 = vmatpush1.xpose.msra.mxu0 0.0
    %1153 = vmatprep.subr.mxu0 0.0
    %1154 = vmatpush1.xpose.msra.mxu0 0.0
    %1155 = vmatprep.subr.mxu0 0.0
    %1156 = vmatpush1.xpose.msra.mxu0 0.0
    %1157 = vmatprep.subr.mxu0 0.0
    %1158 = vmatpush1.xpose.msra.mxu0 0.0
    %1159 = vmatprep.subr.mxu0 0.0
    %1160 = vmatpush1.xpose.msra.mxu0 0.0
    %1161 = vmatprep.subr.mxu0 0.0
    %1162 = vmatpush1.xpose.msra.mxu0 0.0
    %1163 = vmatprep.subr.mxu0 0.0
    %1164 = vmatpush1.xpose.msra.mxu0 0.0
    %1165 = vmatprep.subr.mxu0 0.0
    %1166 = vmatpush1.xpose.msra.mxu0 0.0
    %1167 = vmatprep.subr.mxu0 0.0
    %1168 = vmatpush1.xpose.msra.mxu0 0.0
    %1169 = vmatprep.subr.mxu0 0.0
    %1170 = vmatpush1.xpose.msra.mxu0 0.0
    %1171 = vmatprep.subr.mxu0 0.0
    %1172 = vmatpush1.xpose.msra.mxu0 0.0
    %1173 = vmatprep.subr.mxu0 0.0
    %1174 = vmatpush1.xpose.msra.mxu0 0.0
    %1175 = vmatprep.subr.mxu0 0.0
    %1176 = vmatpush1.xpose.msra.mxu0 0.0
    %1177 = vmatprep.subr.mxu0 0.0
    %1178 = vmatpush1.xpose.msra.mxu0 0.0
    %1179 = vmatprep.subr.mxu0 0.0
    %1180 = vmatpush1.xpose.msra.mxu0 0.0
    %1181 = vmatprep.subr.mxu0 0.0
    %1182 = vmatpush1.xpose.msra.mxu0 0.0
    %1183 = vmatprep.subr.mxu0 0.0
    %1184 = vmatpush1.xpose.msra.mxu0 0.0
    %1185 = vmatprep.subr.mxu0 0.0
    %1186 = vmatpush1.xpose.msra.mxu0 0.0
    %1187 = vmatprep.subr.mxu0 0.0
    %1188 = vmatpush1.xpose.msra.mxu0 0.0
    %1189 = vmatprep.subr.mxu0 0.0
    %1190 = vmatpush1.xpose.msra.mxu0 0.0
    %1191 = vmatprep.mubr.f32.mxu0 0.0
    %1192 = vmatmul.mubr.f32.gmra.mrb[0].mxu0 %v1123
    %v1193 = vpop.f32.mrb[0].mxu0
    %v1194 = vadd.f32 0.0, %v1193
    %v1195 = vpop.f32.mrb[0].mxu0
    %1196 = vdwg.mxu0
    %v1197 = vsel %vm383, %v1116, -inf
    %1198 = vmax.xlane.f32.xlu0 %v1197
    %v1199 = vpop.xlane.xlu0 %1198
    %v1200 = vsel %vm383, %v1194, -inf
    %1201 = vmax.xlane.f32.xlu0 %v1200
    %v1202 = vpop.xlane.xlu0 %1201
    %v1203 = vsub.f32 %v1116, %v1199
    %v1204 = vsub.f32 %v1194, %v1202
    %v1205 = vmul.f32 %v1203, 1.442695
    %v1206 = vpow.pop %v1205
    %v1207 = vmul.f32 %v1204, 1.442695
    %v1208 = vpow.pop %v1207
    %v1209 = vsel %vm383, %v1206, 0.0
    %1210 = vadd.xlane.f32.xlu0 %v1209
    %v1211 = vpop.xlane.xlu0 %1210
    %v1212 = vsel %vm383, %v1208, 0.0
    %1213 = vadd.xlane.f32.xlu0 %v1212
    %v1214 = vpop.xlane.xlu0 %1213
    %v1215 = vrcp.pop %v1211
    %v1216 = vrcp.pop %v1214
    %v1217 = vmul.f32 %v1206, %v1215
    %v1218 = vmul.f32 %v1208, %v1216
    %1219 = vrot.lane.b32.xlu0 %v370, 48
    %v1220 = vpop.permute.xlu0 %1219
    %v1223 = vsel %vm383, %v1217, 0
    %1225 = vmatprep.subr.mxu0 0.0
    %1226 = vmatpush1.msra.mxu0 %v1220
    %1227 = vmatprep.subr.mxu0 0.0
    %1228 = vmatpush1.msra.mxu0 0.0
    %1229 = vmatprep.subr.mxu0 0.0
    %1230 = vmatpush1.msra.mxu0 0.0
    %1231 = vmatprep.subr.mxu0 0.0
    %1232 = vmatpush1.msra.mxu0 0.0
    %1233 = vmatprep.subr.mxu0 0.0
    %1234 = vmatpush1.msra.mxu0 0.0
    %1235 = vmatprep.subr.mxu0 0.0
    %1236 = vmatpush1.msra.mxu0 0.0
    %1237 = vmatprep.subr.mxu0 0.0
    %1238 = vmatpush1.msra.mxu0 0.0
    %1239 = vmatprep.subr.mxu0 0.0
    %1240 = vmatpush1.msra.mxu0 0.0
    %1241 = vmatprep.subr.mxu0 0.0
    %1242 = vmatpush1.msra.mxu0 0.0
    %1243 = vmatprep.subr.mxu0 0.0
    %1244 = vmatpush1.msra.mxu0 0.0
    %1245 = vmatprep.subr.mxu0 0.0
    %1246 = vmatpush1.msra.mxu0 0.0
    %1247 = vmatprep.subr.mxu0 0.0
    %1248 = vmatpush1.msra.mxu0 0.0
    %1249 = vmatprep.subr.mxu0 0.0
    %1250 = vmatpush1.msra.mxu0 0.0
    %1251 = vmatprep.subr.mxu0 0.0
    %1252 = vmatpush1.msra.mxu0 0.0
    %1253 = vmatprep.subr.mxu0 0.0
    %1254 = vmatpush1.msra.mxu0 0.0
    %1255 = vmatprep.subr.mxu0 0.0
    %1256 = vmatpush1.msra.mxu0 0.0
    %1257 = vmatprep.subr.mxu0 0.0
    %1258 = vmatpush1.msra.mxu0 0.0
    %1259 = vmatprep.subr.mxu0 0.0
    %1260 = vmatpush1.msra.mxu0 0.0
    %1261 = vmatprep.subr.mxu0 0.0
    %1262 = vmatpush1.msra.mxu0 0.0
    %1263 = vmatprep.subr.mxu0 0.0
    %1264 = vmatpush1.msra.mxu0 0.0
    %1265 = vmatprep.subr.mxu0 0.0
    %1266 = vmatpush1.msra.mxu0 0.0
    %1267 = vmatprep.subr.mxu0 0.0
    %1268 = vmatpush1.msra.mxu0 0.0
    %1269 = vmatprep.subr.mxu0 0.0
    %1270 = vmatpush1.msra.mxu0 0.0
    %1271 = vmatprep.subr.mxu0 0.0
    %1272 = vmatpush1.msra.mxu0 0.0
    %1273 = vmatprep.subr.mxu0 0.0
    %1274 = vmatpush1.msra.mxu0 0.0
    %1275 = vmatprep.subr.mxu0 0.0
    %1276 = vmatpush1.msra.mxu0 0.0
    %1277 = vmatprep.subr.mxu0 0.0
    %1278 = vmatpush1.msra.mxu0 0.0
    %1279 = vmatprep.subr.mxu0 0.0
    %1280 = vmatpush1.msra.mxu0 0.0
    %1281 = vmatprep.subr.mxu0 0.0
    %1282 = vmatpush1.msra.mxu0 0.0
    %1283 = vmatprep.subr.mxu0 0.0
    %1284 = vmatpush1.msra.mxu0 0.0
    %1285 = vmatprep.subr.mxu0 0.0
    %1286 = vmatpush1.msra.mxu0 0.0
    %1287 = vmatprep.subr.mxu0 0.0
    %1288 = vmatpush1.msra.mxu0 0.0
    %1289 = vmatprep.mubr.f32.mxu0 0.0
    %1290 = vmatmul.mubr.f32.gmra.mrb[0].mxu0 %v1223
    %v1291 = vpop.f32.mrb[0].mxu0
    %v1292 = vadd.f32 0.0, %v1291
    %v1293 = vpop.f32.mrb[0].mxu0
    %1294 = vdwg.mxu0
    %1295 = vrot.lane.b32.xlu0 %v375, 48
    %v1296 = vpop.permute.xlu0 %1295
    %v1299 = vsel %vm383, %v1218, 0
    %1301 = vmatprep.subr.mxu0 0.0
    %1302 = vmatpush1.msra.mxu0 %v1296
    %1303 = vmatprep.subr.mxu0 0.0
    %1304 = vmatpush1.msra.mxu0 0.0
    %1305 = vmatprep.subr.mxu0 0.0
    %1306 = vmatpush1.msra.mxu0 0.0
    %1307 = vmatprep.subr.mxu0 0.0
    %1308 = vmatpush1.msra.mxu0 0.0
    %1309 = vmatprep.subr.mxu0 0.0
    %1310 = vmatpush1.msra.mxu0 0.0
    %1311 = vmatprep.subr.mxu0 0.0
    %1312 = vmatpush1.msra.mxu0 0.0
    %1313 = vmatprep.subr.mxu0 0.0
    %1314 = vmatpush1.msra.mxu0 0.0
    %1315 = vmatprep.subr.mxu0 0.0
    %1316 = vmatpush1.msra.mxu0 0.0
    %1317 = vmatprep.subr.mxu0 0.0
    %1318 = vmatpush1.msra.mxu0 0.0
    %1319 = vmatprep.subr.mxu0 0.0
    %1320 = vmatpush1.msra.mxu0 0.0
    %1321 = vmatprep.subr.mxu0 0.0
    %1322 = vmatpush1.msra.mxu0 0.0
    %1323 = vmatprep.subr.mxu0 0.0
    %1324 = vmatpush1.msra.mxu0 0.0
    %1325 = vmatprep.subr.mxu0 0.0
    %1326 = vmatpush1.msra.mxu0 0.0
    %1327 = vmatprep.subr.mxu0 0.0
    %1328 = vmatpush1.msra.mxu0 0.0
    %1329 = vmatprep.subr.mxu0 0.0
    %1330 = vmatpush1.msra.mxu0 0.0
    %1331 = vmatprep.subr.mxu0 0.0
    %1332 = vmatpush1.msra.mxu0 0.0
    %1333 = vmatprep.subr.mxu0 0.0
    %1334 = vmatpush1.msra.mxu0 0.0
    %1335 = vmatprep.subr.mxu0 0.0
    %1336 = vmatpush1.msra.mxu0 0.0
    %1337 = vmatprep.subr.mxu0 0.0
    %1338 = vmatpush1.msra.mxu0 0.0
    %1339 = vmatprep.subr.mxu0 0.0
    %1340 = vmatpush1.msra.mxu0 0.0
    %1341 = vmatprep.subr.mxu0 0.0
    %1342 = vmatpush1.msra.mxu0 0.0
    %1343 = vmatprep.subr.mxu0 0.0
    %1344 = vmatpush1.msra.mxu0 0.0
    %1345 = vmatprep.subr.mxu0 0.0
    %1346 = vmatpush1.msra.mxu0 0.0
    %1347 = vmatprep.subr.mxu0 0.0
    %1348 = vmatpush1.msra.mxu0 0.0
    %1349 = vmatprep.subr.mxu0 0.0
    %1350 = vmatpush1.msra.mxu0 0.0
    %1351 = vmatprep.subr.mxu0 0.0
    %1352 = vmatpush1.msra.mxu0 0.0
    %1353 = vmatprep.subr.mxu0 0.0
    %1354 = vmatpush1.msra.mxu0 0.0
    %1355 = vmatprep.subr.mxu0 0.0
    %1356 = vmatpush1.msra.mxu0 0.0
    %1357 = vmatprep.subr.mxu0 0.0
    %1358 = vmatpush1.msra.mxu0 0.0
    %1359 = vmatprep.subr.mxu0 0.0
    %1360 = vmatpush1.msra.mxu0 0.0
    %1361 = vmatprep.subr.mxu0 0.0
    %1362 = vmatpush1.msra.mxu0 0.0
    %1363 = vmatprep.subr.mxu0 0.0
    %1364 = vmatpush1.msra.mxu0 0.0
    %1365 = vmatprep.mubr.f32.mxu0 0.0
    %1366 = vmatmul.mubr.f32.gmra.mrb[0].mxu0 %v1299
    %v1367 = vpop.f32.mrb[0].mxu0
    %v1368 = vadd.f32 0.0, %v1367
    %v1369 = vpop.f32.mrb[0].mxu0
    %1370 = vdwg.mxu0
    %1371 = vrot.lane.b32.xlu0 %v378, 104
    %v1372 = vpop.permute.xlu0 %1371
    %1373 = vrot.lane.b32.xlu0 %v370, 72
    %v1374 = vpop.permute.xlu0 %1373
    %v1375 = vsel %vm383, %v1372, 0
    %v1377 = vsel %vm383, %v1374, 0
    %1379 = vmatprep.subr.mxu0 0.0
    %1380 = vmatpush1.xpose.msra.mxu0 %v1377
    %1381 = vmatprep.subr.mxu0 0.0
    %1382 = vmatpush1.xpose.msra.mxu0 0.0
    %1383 = vmatprep.subr.mxu0 0.0
    %1384 = vmatpush1.xpose.msra.mxu0 0.0
    %1385 = vmatprep.subr.mxu0 0.0
    %1386 = vmatpush1.xpose.msra.mxu0 0.0
    %1387 = vmatprep.subr.mxu0 0.0
    %1388 = vmatpush1.xpose.msra.mxu0 0.0
    %1389 = vmatprep.subr.mxu0 0.0
    %1390 = vmatpush1.xpose.msra.mxu0 0.0
    %1391 = vmatprep.subr.mxu0 0.0
    %1392 = vmatpush1.xpose.msra.mxu0 0.0
    %1393 = vmatprep.subr.mxu0 0.0
    %1394 = vmatpush1.xpose.msra.mxu0 0.0
    %1395 = vmatprep.subr.mxu0 0.0
    %1396 = vmatpush1.xpose.msra.mxu0 0.0
    %1397 = vmatprep.subr.mxu0 0.0
    %1398 = vmatpush1.xpose.msra.mxu0 0.0
    %1399 = vmatprep.subr.mxu0 0.0
    %1400 = vmatpush1.xpose.msra.mxu0 0.0
    %1401 = vmatprep.subr.mxu0 0.0
    %1402 = vmatpush1.xpose.msra.mxu0 0.0
    %1403 = vmatprep.subr.mxu0 0.0
    %1404 = vmatpush1.xpose.msra.mxu0 0.0
    %1405 = vmatprep.subr.mxu0 0.0
    %1406 = vmatpush1.xpose.msra.mxu0 0.0
    %1407 = vmatprep.subr.mxu0 0.0
    %1408 = vmatpush1.xpose.msra.mxu0 0.0
    %1409 = vmatprep.subr.mxu0 0.0
    %1410 = vmatpush1.xpose.msra.mxu0 0.0
    %1411 = vmatprep.subr.mxu0 0.0
    %1412 = vmatpush1.xpose.msra.mxu0 0.0
    %1413 = vmatprep.subr.mxu0 0.0
    %1414 = vmatpush1.xpose.msra.mxu0 0.0
    %1415 = vmatprep.subr.mxu0 0.0
    %1416 = vmatpush1.xpose.msra.mxu0 0.0
    %1417 = vmatprep.subr.mxu0 0.0
    %1418 = vmatpush1.xpose.msra.mxu0 0.0
    %1419 = vmatprep.subr.mxu0 0.0
    %1420 = vmatpush1.xpose.msra.mxu0 0.0
    %1421 = vmatprep.subr.mxu0 0.0
    %1422 = vmatpush1.xpose.msra.mxu0 0.0
    %1423 = vmatprep.subr.mxu0 0.0
    %1424 = vmatpush1.xpose.msra.mxu0 0.0
    %1425 = vmatprep.subr.mxu0 0.0
    %1426 = vmatpush1.xpose.msra.mxu0 0.0
    %1427 = vmatprep.subr.mxu0 0.0
    %1428 = vmatpush1.xpose.msra.mxu0 0.0
    %1429 = vmatprep.subr.mxu0 0.0
    %1430 = vmatpush1.xpose.msra.mxu0 0.0
    %1431 = vmatprep.subr.mxu0 0.0
    %1432 = vmatpush1.xpose.msra.mxu0 0.0
    %1433 = vmatprep.subr.mxu0 0.0
    %1434 = vmatpush1.xpose.msra.mxu0 0.0
    %1435 = vmatprep.subr.mxu0 0.0
    %1436 = vmatpush1.xpose.msra.mxu0 0.0
    %1437 = vmatprep.subr.mxu0 0.0
    %1438 = vmatpush1.xpose.msra.mxu0 0.0
    %1439 = vmatprep.subr.mxu0 0.0
    %1440 = vmatpush1.xpose.msra.mxu0 0.0
    %1441 = vmatprep.subr.mxu0 0.0
    %1442 = vmatpush1.xpose.msra.mxu0 0.0
    %1443 = vmatprep.mubr.f32.mxu0 0.0
    %1444 = vmatmul.mubr.f32.gmra.mrb[0].mxu0 %v1375
    %v1445 = vpop.f32.mrb[0].mxu0
    %v1446 = vadd.f32 0.0, %v1445
    %v1447 = vpop.f32.mrb[0].mxu0
    %1448 = vdwg.mxu0
    %1449 = vrot.lane.b32.xlu0 %v379, 104
    %v1450 = vpop.permute.xlu0 %1449
    %1451 = vrot.lane.b32.xlu0 %v375, 72
    %v1452 = vpop.permute.xlu0 %1451
    %v1453 = vsel %vm383, %v1450, 0
    %v1455 = vsel %vm383, %v1452, 0
    %1457 = vmatprep.subr.mxu0 0.0
    %1458 = vmatpush1.xpose.msra.mxu0 %v1455
    %1459 = vmatprep.subr.mxu0 0.0
    %1460 = vmatpush1.xpose.msra.mxu0 0.0
    %1461 = vmatprep.subr.mxu0 0.0
    %1462 = vmatpush1.xpose.msra.mxu0 0.0
    %1463 = vmatprep.subr.mxu0 0.0
    %1464 = vmatpush1.xpose.msra.mxu0 0.0
    %1465 = vmatprep.subr.mxu0 0.0
    %1466 = vmatpush1.xpose.msra.mxu0 0.0
    %1467 = vmatprep.subr.mxu0 0.0
    %1468 = vmatpush1.xpose.msra.mxu0 0.0
    %1469 = vmatprep.subr.mxu0 0.0
    %1470 = vmatpush1.xpose.msra.mxu0 0.0
    %1471 = vmatprep.subr.mxu0 0.0
    %1472 = vmatpush1.xpose.msra.mxu0 0.0
    %1473 = vmatprep.subr.mxu0 0.0
    %1474 = vmatpush1.xpose.msra.mxu0 0.0
    %1475 = vmatprep.subr.mxu0 0.0
    %1476 = vmatpush1.xpose.msra.mxu0 0.0
    %1477 = vmatprep.subr.mxu0 0.0
    %1478 = vmatpush1.xpose.msra.mxu0 0.0
    %1479 = vmatprep.subr.mxu0 0.0
    %1480 = vmatpush1.xpose.msra.mxu0 0.0
    %1481 = vmatprep.subr.mxu0 0.0
    %1482 = vmatpush1.xpose.msra.mxu0 0.0
    %1483 = vmatprep.subr.mxu0 0.0
    %1484 = vmatpush1.xpose.msra.mxu0 0.0
    %1485 = vmatprep.subr.mxu0 0.0
    %1486 = vmatpush1.xpose.msra.mxu0 0.0
    %1487 = vmatprep.subr.mxu0 0.0
    %1488 = vmatpush1.xpose.msra.mxu0 0.0
    %1489 = vmatprep.subr.mxu0 0.0
    %1490 = vmatpush1.xpose.msra.mxu0 0.0
    %1491 = vmatprep.subr.mxu0 0.0
    %1492 = vmatpush1.xpose.msra.mxu0 0.0
    %1493 = vmatprep.subr.mxu0 0.0
    %1494 = vmatpush1.xpose.msra.mxu0 0.0
    %1495 = vmatprep.subr.mxu0 0.0
    %1496 = vmatpush1.xpose.msra.mxu0 0.0
    %1497 = vmatprep.subr.mxu0 0.0
    %1498 = vmatpush1.xpose.msra.mxu0 0.0
    %1499 = vmatprep.subr.mxu0 0.0
    %1500 = vmatpush1.xpose.msra.mxu0 0.0
    %1501 = vmatprep.subr.mxu0 0.0
    %1502 = vmatpush1.xpose.msra.mxu0 0.0
    %1503 = vmatprep.subr.mxu0 0.0
    %1504 = vmatpush1.xpose.msra.mxu0 0.0
    %1505 = vmatprep.subr.mxu0 0.0
    %1506 = vmatpush1.xpose.msra.mxu0 0.0
    %1507 = vmatprep.subr.mxu0 0.0
    %1508 = vmatpush1.xpose.msra.mxu0 0.0
    %1509 = vmatprep.subr.mxu0 0.0
    %1510 = vmatpush1.xpose.msra.mxu0 0.0
    %1511 = vmatprep.subr.mxu0 0.0
    %1512 = vmatpush1.xpose.msra.mxu0 0.0
    %1513 = vmatprep.subr.mxu0 0.0
    %1514 = vmatpush1.xpose.msra.mxu0 0.0
    %1515 = vmatprep.subr.mxu0 0.0
    %1516 = vmatpush1.xpose.msra.mxu0 0.0
    %1517 = vmatprep.subr.mxu0 0.0
    %1518 = vmatpush1.xpose.msra.mxu0 0.0
    %1519 = vmatprep.subr.mxu0 0.0
    %1520 = vmatpush1.xpose.msra.mxu0 0.0
    %1521 = vmatprep.mubr.f32.mxu0 0.0
    %1522 = vmatmul.mubr.f32.gmra.mrb[0].mxu0 %v1453
    %v1523 = vpop.f32.mrb[0].mxu0
    %v1524 = vadd.f32 0.0, %v1523
    %v1525 = vpop.f32.mrb[0].mxu0
    %1526 = vdwg.mxu0
    %v1527 = vsel %vm383, %v1446, -inf
    %1528 = vmax.xlane.f32.xlu0 %v1527
    %v1529 = vpop.xlane.xlu0 %1528
    %v1530 = vsel %vm383, %v1524, -inf
    %1531 = vmax.xlane.f32.xlu0 %v1530
    %v1532 = vpop.xlane.xlu0 %1531
    %v1533 = vsub.f32 %v1446, %v1529
    %v1534 = vsub.f32 %v1524, %v1532
    %v1535 = vmul.f32 %v1533, 1.442695
    %v1536 = vpow.pop %v1535
    %v1537 = vmul.f32 %v1534, 1.442695
    %v1538 = vpow.pop %v1537
    %v1539 = vsel %vm383, %v1536, 0.0
    %1540 = vadd.xlane.f32.xlu0 %v1539
    %v1541 = vpop.xlane.xlu0 %1540
    %v1542 = vsel %vm383, %v1538, 0.0
    %1543 = vadd.xlane.f32.xlu0 %v1542
    %v1544 = vpop.xlane.xlu0 %1543
    %v1545 = vrcp.pop %v1541
    %v1546 = vrcp.pop %v1544
    %v1547 = vmul.f32 %v1536, %v1545
    %v1548 = vmul.f32 %v1538, %v1546
    %1549 = vrot.lane.b32.xlu0 %v370, 40
    %v1550 = vpop.permute.xlu0 %1549
    %v1553 = vsel %vm383, %v1547, 0
    %1555 = vmatprep.subr.mxu0 0.0
    %1556 = vmatpush1.msra.mxu0 %v1550
    %1557 = vmatprep.subr.mxu0 0.0
    %1558 = vmatpush1.msra.mxu0 0.0
    %1559 = vmatprep.subr.mxu0 0.0
    %1560 = vmatpush1.msra.mxu0 0.0
    %1561 = vmatprep.subr.mxu0 0.0
    %1562 = vmatpush1.msra.mxu0 0.0
    %1563 = vmatprep.subr.mxu0 0.0
    %1564 = vmatpush1.msra.mxu0 0.0
    %1565 = vmatprep.subr.mxu0 0.0
    %1566 = vmatpush1.msra.mxu0 0.0
    %1567 = vmatprep.subr.mxu0 0.0
    %1568 = vmatpush1.msra.mxu0 0.0
    %1569 = vmatprep.subr.mxu0 0.0
    %1570 = vmatpush1.msra.mxu0 0.0
    %1571 = vmatprep.subr.mxu0 0.0
    %1572 = vmatpush1.msra.mxu0 0.0
    %1573 = vmatprep.subr.mxu0 0.0
    %1574 = vmatpush1.msra.mxu0 0.0
    %1575 = vmatprep.subr.mxu0 0.0
    %1576 = vmatpush1.msra.mxu0 0.0
    %1577 = vmatprep.subr.mxu0 0.0
    %1578 = vmatpush1.msra.mxu0 0.0
    %1579 = vmatprep.subr.mxu0 0.0
    %1580 = vmatpush1.msra.mxu0 0.0
    %1581 = vmatprep.subr.mxu0 0.0
    %1582 = vmatpush1.msra.mxu0 0.0
    %1583 = vmatprep.subr.mxu0 0.0
    %1584 = vmatpush1.msra.mxu0 0.0
    %1585 = vmatprep.subr.mxu0 0.0
    %1586 = vmatpush1.msra.mxu0 0.0
    %1587 = vmatprep.subr.mxu0 0.0
    %1588 = vmatpush1.msra.mxu0 0.0
    %1589 = vmatprep.subr.mxu0 0.0
    %1590 = vmatpush1.msra.mxu0 0.0
    %1591 = vmatprep.subr.mxu0 0.0
    %1592 = vmatpush1.msra.mxu0 0.0
    %1593 = vmatprep.subr.mxu0 0.0
    %1594 = vmatpush1.msra.mxu0 0.0
    %1595 = vmatprep.subr.mxu0 0.0
    %1596 = vmatpush1.msra.mxu0 0.0
    %1597 = vmatprep.subr.mxu0 0.0
    %1598 = vmatpush1.msra.mxu0 0.0
    %1599 = vmatprep.subr.mxu0 0.0
    %1600 = vmatpush1.msra.mxu0 0.0
    %1601 = vmatprep.subr.mxu0 0.0
    %1602 = vmatpush1.msra.mxu0 0.0
    %1603 = vmatprep.subr.mxu0 0.0
    %1604 = vmatpush1.msra.mxu0 0.0
    %1605 = vmatprep.subr.mxu0 0.0
    %1606 = vmatpush1.msra.mxu0 0.0
    %1607 = vmatprep.subr.mxu0 0.0
    %1608 = vmatpush1.msra.mxu0 0.0
    %1609 = vmatprep.subr.mxu0 0.0
    %1610 = vmatpush1.msra.mxu0 0.0
    %1611 = vmatprep.subr.mxu0 0.0
    %1612 = vmatpush1.msra.mxu0 0.0
    %1613 = vmatprep.subr.mxu0 0.0
    %1614 = vmatpush1.msra.mxu0 0.0
    %1615 = vmatprep.subr.mxu0 0.0
    %1616 = vmatpush1.msra.mxu0 0.0
    %1617 = vmatprep.subr.mxu0 0.0
    %1618 = vmatpush1.msra.mxu0 0.0
    %1619 = vmatprep.mubr.f32.mxu0 0.0
    %1620 = vmatmul.mubr.f32.gmra.mrb[0].mxu0 %v1553
    %v1621 = vpop.f32.mrb[0].mxu0
    %v1622 = vadd.f32 0.0, %v1621
    %v1623 = vpop.f32.mrb[0].mxu0
    %1624 = vdwg.mxu0
    %1625 = vrot.lane.b32.xlu0 %v375, 40
    %v1626 = vpop.permute.xlu0 %1625
    %v1629 = vsel %vm383, %v1548, 0
    %1631 = vmatprep.subr.mxu0 0.0
    %1632 = vmatpush1.msra.mxu0 %v1626
    %1633 = vmatprep.subr.mxu0 0.0
    %1634 = vmatpush1.msra.mxu0 0.0
    %1635 = vmatprep.subr.mxu0 0.0
    %1636 = vmatpush1.msra.mxu0 0.0
    %1637 = vmatprep.subr.mxu0 0.0
    %1638 = vmatpush1.msra.mxu0 0.0
    %1639 = vmatprep.subr.mxu0 0.0
    %1640 = vmatpush1.msra.mxu0 0.0
    %1641 = vmatprep.subr.mxu0 0.0
    %1642 = vmatpush1.msra.mxu0 0.0
    %1643 = vmatprep.subr.mxu0 0.0
    %1644 = vmatpush1.msra.mxu0 0.0
    %1645 = vmatprep.subr.mxu0 0.0
    %1646 = vmatpush1.msra.mxu0 0.0
    %1647 = vmatprep.subr.mxu0 0.0
    %1648 = vmatpush1.msra.mxu0 0.0
    %1649 = vmatprep.subr.mxu0 0.0
    %1650 = vmatpush1.msra.mxu0 0.0
    %1651 = vmatprep.subr.mxu0 0.0
    %1652 = vmatpush1.msra.mxu0 0.0
    %1653 = vmatprep.subr.mxu0 0.0
    %1654 = vmatpush1.msra.mxu0 0.0
    %1655 = vmatprep.subr.mxu0 0.0
    %1656 = vmatpush1.msra.mxu0 0.0
    %1657 = vmatprep.subr.mxu0 0.0
    %1658 = vmatpush1.msra.mxu0 0.0
    %1659 = vmatprep.subr.mxu0 0.0
    %1660 = vmatpush1.msra.mxu0 0.0
    %1661 = vmatprep.subr.mxu0 0.0
    %1662 = vmatpush1.msra.mxu0 0.0
    %1663 = vmatprep.subr.mxu0 0.0
    %1664 = vmatpush1.msra.mxu0 0.0
    %1665 = vmatprep.subr.mxu0 0.0
    %1666 = vmatpush1.msra.mxu0 0.0
    %1667 = vmatprep.subr.mxu0 0.0
    %1668 = vmatpush1.msra.mxu0 0.0
    %1669 = vmatprep.subr.mxu0 0.0
    %1670 = vmatpush1.msra.mxu0 0.0
    %1671 = vmatprep.subr.mxu0 0.0
    %1672 = vmatpush1.msra.mxu0 0.0
    %1673 = vmatprep.subr.mxu0 0.0
    %1674 = vmatpush1.msra.mxu0 0.0
    %1675 = vmatprep.subr.mxu0 0.0
    %1676 = vmatpush1.msra.mxu0 0.0
    %1677 = vmatprep.subr.mxu0 0.0
    %1678 = vmatpush1.msra.mxu0 0.0
    %1679 = vmatprep.subr.mxu0 0.0
    %1680 = vmatpush1.msra.mxu0 0.0
    %1681 = vmatprep.subr.mxu0 0.0
    %1682 = vmatpush1.msra.mxu0 0.0
    %1683 = vmatprep.subr.mxu0 0.0
    %1684 = vmatpush1.msra.mxu0 0.0
    %1685 = vmatprep.subr.mxu0 0.0
    %1686 = vmatpush1.msra.mxu0 0.0
    %1687 = vmatprep.subr.mxu0 0.0
    %1688 = vmatpush1.msra.mxu0 0.0
    %1689 = vmatprep.subr.mxu0 0.0
    %1690 = vmatpush1.msra.mxu0 0.0
    %1691 = vmatprep.subr.mxu0 0.0
    %1692 = vmatpush1.msra.mxu0 0.0
    %1693 = vmatprep.subr.mxu0 0.0
    %1694 = vmatpush1.msra.mxu0 0.0
    %1695 = vmatprep.mubr.f32.mxu0 0.0
    %1696 = vmatmul.mubr.f32.gmra.mrb[0].mxu0 %v1629
    %v1697 = vpop.f32.mrb[0].mxu0
    %v1698 = vadd.f32 0.0, %v1697
    %v1699 = vpop.f32.mrb[0].mxu0
    %1700 = vdwg.mxu0
    %1703 = vrot.lane.b32.xlu0 %v962, 8
    %v1704 = vpop.permute.xlu0 %1703
    %1705 = vrot.lane.b32.xlu0 %v1038, 8
    %v1706 = vpop.permute.xlu0 %1705
    %1711 = vrot.lane.b32.xlu0 %v1292, 16
    %v1712 = vpop.permute.xlu0 %1711
    %1713 = vrot.lane.b32.xlu0 %v1368, 16
    %v1714 = vpop.permute.xlu0 %1713
    %1719 = vrot.lane.b32.xlu0 %v1622, 24
    %v1720 = vpop.permute.xlu0 %1719
    %1721 = vrot.lane.b32.xlu0 %v1698, 24
    %v1722 = vpop.permute.xlu0 %1721
    %v1725 = vsel %vm383, %v632, %v1704
    %v1726 = vsel %vm383, %v708, %v1706
    %vm1727 = vcmask 130048
    %v1728 = vsel %vm1727, %v1725, %v1712
    %v1729 = vsel %vm1727, %v1726, %v1714
    %vm1730 = vcmask 195584
    %v1731 = vsel %vm1730, %v1728, %v1720
    %v1732 = vsel %vm1730, %v1729, %v1722
    %v1734 = vlaneseq
    %v1735 = vshrl.u32 %v1734, 7
    %v1736 = vsub.s32 0, %v1735
    %v1737 = vrot.slane %v290, %v1736
    %v1740 = vsel %vm237, %v1731, 0
    %v1743 = vsel %vm237, %v1732, 0
    %1745 = vmatprep.subr.mxu0 0.0
    %1746 = vmatpush1.msra.mxu0 %v286
    %1747 = vmatprep.subr.mxu0 0.0
    %1748 = vmatpush1.msra.mxu0 %v287
    %1749 = vmatprep.subr.mxu0 0.0
    %1750 = vmatpush1.msra.mxu0 %v288
    %1751 = vmatprep.subr.mxu0 0.0
    %1752 = vmatpush1.msra.mxu0 %v289
    %1753 = vmatprep.subr.mxu0 0.0
    %1754 = vmatpush1.msra.mxu0 0.0
    %1755 = vmatprep.subr.mxu0 0.0
    %1756 = vmatpush1.msra.mxu0 0.0
    %1757 = vmatprep.subr.mxu0 0.0
    %1758 = vmatpush1.msra.mxu0 0.0
    %1759 = vmatprep.subr.mxu0 0.0
    %1760 = vmatpush1.msra.mxu0 0.0
    %1761 = vmatprep.subr.mxu0 0.0
    %1762 = vmatpush1.msra.mxu0 0.0
    %1763 = vmatprep.subr.mxu0 0.0
    %1764 = vmatpush1.msra.mxu0 0.0
    %1765 = vmatprep.subr.mxu0 0.0
    %1766 = vmatpush1.msra.mxu0 0.0
    %1767 = vmatprep.subr.mxu0 0.0
    %1768 = vmatpush1.msra.mxu0 0.0
    %1769 = vmatprep.subr.mxu0 0.0
    %1770 = vmatpush1.msra.mxu0 0.0
    %1771 = vmatprep.subr.mxu0 0.0
    %1772 = vmatpush1.msra.mxu0 0.0
    %1773 = vmatprep.subr.mxu0 0.0
    %1774 = vmatpush1.msra.mxu0 0.0
    %1775 = vmatprep.subr.mxu0 0.0
    %1776 = vmatpush1.msra.mxu0 0.0
    %1777 = vmatprep.subr.mxu0 0.0
    %1778 = vmatpush1.msra.mxu0 0.0
    %1779 = vmatprep.subr.mxu0 0.0
    %1780 = vmatpush1.msra.mxu0 0.0
    %1781 = vmatprep.subr.mxu0 0.0
    %1782 = vmatpush1.msra.mxu0 0.0
    %1783 = vmatprep.subr.mxu0 0.0
    %1784 = vmatpush1.msra.mxu0 0.0
    %1785 = vmatprep.subr.mxu0 0.0
    %1786 = vmatpush1.msra.mxu0 0.0
    %1787 = vmatprep.subr.mxu0 0.0
    %1788 = vmatpush1.msra.mxu0 0.0
    %1789 = vmatprep.subr.mxu0 0.0
    %1790 = vmatpush1.msra.mxu0 0.0
    %1791 = vmatprep.subr.mxu0 0.0
    %1792 = vmatpush1.msra.mxu0 0.0
    %1793 = vmatprep.subr.mxu0 0.0
    %1794 = vmatpush1.msra.mxu0 0.0
    %1795 = vmatprep.subr.mxu0 0.0
    %1796 = vmatpush1.msra.mxu0 0.0
    %1797 = vmatprep.subr.mxu0 0.0
    %1798 = vmatpush1.msra.mxu0 0.0
    %1799 = vmatprep.subr.mxu0 0.0
    %1800 = vmatpush1.msra.mxu0 0.0
    %1801 = vmatprep.subr.mxu0 0.0
    %1802 = vmatpush1.msra.mxu0 0.0
    %1803 = vmatprep.subr.mxu0 0.0
    %1804 = vmatpush1.msra.mxu0 0.0
    %1805 = vmatprep.subr.mxu0 0.0
    %1806 = vmatpush1.msra.mxu0 0.0
    %1807 = vmatprep.subr.mxu0 0.0
    %1808 = vmatpush1.msra.mxu0 0.0
    %1809 = vmatprep.mubr.f32.mxu0 0.0
    %1810 = vmatmul.mubr.f32.gmra.mrb[0].mxu0 %v1740
    %v1811 = vpop.f32.mrb[0].mxu0
    %v1812 = vadd.f32 %v1737, %v1811
    %v1813 = vpop.f32.mrb[0].mxu0
    %1814 = vmatprep.mubr.f32.mxu0 0.0
    %1815 = vmatmul.mubr.f32.gmra.mrb[0].mxu0 %v1743
    %v1816 = vpop.f32.mrb[0].mxu0
    %v1817 = vadd.f32 %v1737, %v1816
    %v1818 = vpop.f32.mrb[0].mxu0
    %1819 = vdwg.mxu0
    %v1820 = vadd.f32 %v1812, %v279
    %v1821 = vadd.f32 %v1817, %v280
    %v1822 = vld [vmem:[#allocation10] sm:$0x1]
    %v1823 = vld [vmem:[#allocation11] sm:$0x1]
    %v1824 = vsel %vm237, %v1820, 0.0
    %1825 = vadd.xlane.f32.xlu0 %v1824
    %v1826 = vpop.xlane.xlu0 %1825
    %v1827 = vsel %vm237, %v1821, 0.0
    %1828 = vadd.xlane.f32.xlu0 %v1827
    %v1829 = vpop.xlane.xlu0 %1828
    %v1830 = vmul.f32 %v1826, %v244
    %v1831 = vmul.f32 %v1829, %v244
    %v1832 = vsub.f32 %v1820, %v1830
    %v1833 = vsub.f32 %v1821, %v1831
    %v1834 = vmul.f32 %v1832, %v1832
    %v1835 = vmul.f32 %v1833, %v1833
    %v1836 = vsel %vm237, %v1834, 0.0
    %1837 = vadd.xlane.f32.xlu0 %v1836
    %v1838 = vpop.xlane.xlu0 %1837
    %v1839 = vsel %vm237, %v1835, 0.0
    %1840 = vadd.xlane.f32.xlu0 %v1839
    %v1841 = vpop.xlane.xlu0 %1840
    %v1842 = vmul.f32 %v1838, %v244
    %v1843 = vmul.f32 %v1841, %v244
    %v1844 = vadd.f32 %v1842, 1e-05
    %v1845 = vadd.f32 %v1843, 1e-05
    %v1846 = vrsqrt.pop %v1844
    %v1847 = vrsqrt.pop %v1845
    %v1848 = vmul.f32 %v1832, %v1846
    %v1849 = vmul.f32 %v1833, %v1847
    %v1851 = vlaneseq
    %v1852 = vshrl.u32 %v1851, 7
    %v1853 = vsub.s32 0, %v1852
    %v1854 = vrot.slane %v1822, %v1853
    %v1856 = vmul.f32 %v1848, %v1854
    %v1857 = vmul.f32 %v1849, %v1854
    %v1859 = vlaneseq
    %v1860 = vshrl.u32 %v1859, 7
    %v1861 = vsub.s32 0, %v1860
    %v1862 = vrot.slane %v1823, %v1861
    %v1864 = vadd.f32 %v1856, %v1862
    %v1865 = vadd.f32 %v1857, %v1862
    %v1866 = vld [vmem:[#allocation13] sm:$0xff]
    %v1867 = vld [vmem:[#allocation13 + $0x8] sm:$0xff]
    %v1868 = vld [vmem:[#allocation13 + $0x10] sm:$0xff]
    %v1869 = vld [vmem:[#allocation13 + $0x18] sm:$0xff]
    %v1870 = vld [vmem:[#allocation14] sm:$0x1]
    %v1872 = vlaneseq
    %v1873 = vshrl.u32 %v1872, 7
    %v1874 = vsub.s32 0, %v1873
    %v1875 = vrot.slane %v1870, %v1874
    %v1878 = vsel %vm237, %v1864, 0
    %v1881 = vsel %vm237, %v1865, 0
    %1883 = vmatprep.subr.mxu0 0.0
    %1884 = vmatpush1.msra.mxu0 %v1866
    %1885 = vmatprep.subr.mxu0 0.0
    %1886 = vmatpush1.msra.mxu0 %v1867
    %1887 = vmatprep.subr.mxu0 0.0
    %1888 = vmatpush1.msra.mxu0 %v1868
    %1889 = vmatprep.subr.mxu0 0.0
    %1890 = vmatpush1.msra.mxu0 %v1869
    %1891 = vmatprep.subr.mxu0 0.0
    %1892 = vmatpush1.msra.mxu0 0.0
    %1893 = vmatprep.subr.mxu0 0.0
    %1894 = vmatpush1.msra.mxu0 0.0
    %1895 = vmatprep.subr.mxu0 0.0
    %1896 = vmatpush1.msra.mxu0 0.0
    %1897 = vmatprep.subr.mxu0 0.0
    %1898 = vmatpush1.msra.mxu0 0.0
    %1899 = vmatprep.subr.mxu0 0.0
    %1900 = vmatpush1.msra.mxu0 0.0
    %1901 = vmatprep.subr.mxu0 0.0
    %1902 = vmatpush1.msra.mxu0 0.0
    %1903 = vmatprep.subr.mxu0 0.0
    %1904 = vmatpush1.msra.mxu0 0.0
    %1905 = vmatprep.subr.mxu0 0.0
    %1906 = vmatpush1.msra.mxu0 0.0
    %1907 = vmatprep.subr.mxu0 0.0
    %1908 = vmatpush1.msra.mxu0 0.0
    %1909 = vmatprep.subr.mxu0 0.0
    %1910 = vmatpush1.msra.mxu0 0.0
    %1911 = vmatprep.subr.mxu0 0.0
    %1912 = vmatpush1.msra.mxu0 0.0
    %1913 = vmatprep.subr.mxu0 0.0
    %1914 = vmatpush1.msra.mxu0 0.0
    %1915 = vmatprep.subr.mxu0 0.0
    %1916 = vmatpush1.msra.mxu0 0.0
    %1917 = vmatprep.subr.mxu0 0.0
    %1918 = vmatpush1.msra.mxu0 0.0
    %1919 = vmatprep.subr.mxu0 0.0
    %1920 = vmatpush1.msra.mxu0 0.0
    %1921 = vmatprep.subr.mxu0 0.0
    %1922 = vmatpush1.msra.mxu0 0.0
    %1923 = vmatprep.subr.mxu0 0.0
    %1924 = vmatpush1.msra.mxu0 0.0
    %1925 = vmatprep.subr.mxu0 0.0
    %1926 = vmatpush1.msra.mxu0 0.0
    %1927 = vmatprep.subr.mxu0 0.0
    %1928 = vmatpush1.msra.mxu0 0.0
    %1929 = vmatprep.subr.mxu0 0.0
    %1930 = vmatpush1.msra.mxu0 0.0
    %1931 = vmatprep.subr.mxu0 0.0
    %1932 = vmatpush1.msra.mxu0 0.0
    %1933 = vmatprep.subr.mxu0 0.0
    %1934 = vmatpush1.msra.mxu0 0.0
    %1935 = vmatprep.subr.mxu0 0.0
    %1936 = vmatpush1.msra.mxu0 0.0
    %1937 = vmatprep.subr.mxu0 0.0
    %1938 = vmatpush1.msra.mxu0 0.0
    %1939 = vmatprep.subr.mxu0 0.0
    %1940 = vmatpush1.msra.mxu0 0.0
    %1941 = vmatprep.subr.mxu0 0.0
    %1942 = vmatpush1.msra.mxu0 0.0
    %1943 = vmatprep.subr.mxu0 0.0
    %1944 = vmatpush1.msra.mxu0 0.0
    %1945 = vmatprep.subr.mxu0 0.0
    %1946 = vmatpush1.msra.mxu0 0.0
    %1947 = vmatprep.mubr.f32.mxu0 0.0
    %1948 = vmatmul.mubr.f32.gmra.mrb[0].mxu0 %v1878
    %v1949 = vpop.f32.mrb[0].mxu0
    %v1950 = vadd.f32 %v1875, %v1949
    %v1951 = vpop.f32.mrb[0].mxu0
    %1952 = vmatprep.mubr.f32.mxu0 0.0
    %1953 = vmatmul.mubr.f32.gmra.mrb[0].mxu0 %v1881
    %v1954 = vpop.f32.mrb[0].mxu0
    %v1955 = vadd.f32 %v1875, %v1954
    %v1956 = vpop.f32.mrb[0].mxu0
    %1957 = vdwg.mxu0
    %v1958 = vmax.f32 %v1950, 0.0
    %v1959 = vmax.f32 %v1955, 0.0
    %v1960 = vld [vmem:[#allocation16] sm:$0xff]
    %v1961 = vld [vmem:[#allocation16 + $0x8] sm:$0xff]
    %v1962 = vld [vmem:[#allocation16 + $0x10] sm:$0xff]
    %v1963 = vld [vmem:[#allocation16 + $0x18] sm:$0xff]
    %v1964 = vld [vmem:[#allocation17] sm:$0x1]
    %v1966 = vlaneseq
    %v1967 = vshrl.u32 %v1966, 7
    %v1968 = vsub.s32 0, %v1967
    %v1969 = vrot.slane %v1964, %v1968
    %v1972 = vsel %vm237, %v1958, 0
    %v1975 = vsel %vm237, %v1959, 0
    %1977 = vmatprep.subr.mxu0 0.0
    %1978 = vmatpush1.msra.mxu0 %v1960
    %1979 = vmatprep.subr.mxu0 0.0
    %1980 = vmatpush1.msra.mxu0 %v1961
    %1981 = vmatprep.subr.mxu0 0.0
    %1982 = vmatpush1.msra.mxu0 %v1962
    %1983 = vmatprep.subr.mxu0 0.0
    %1984 = vmatpush1.msra.mxu0 %v1963
    %1985 = vmatprep.subr.mxu0 0.0
    %1986 = vmatpush1.msra.mxu0 0.0
    %1987 = vmatprep.subr.mxu0 0.0
    %1988 = vmatpush1.msra.mxu0 0.0
    %1989 = vmatprep.subr.mxu0 0.0
    %1990 = vmatpush1.msra.mxu0 0.0
    %1991 = vmatprep.subr.mxu0 0.0
    %1992 = vmatpush1.msra.mxu0 0.0
    %1993 = vmatprep.subr.mxu0 0.0
    %1994 = vmatpush1.msra.mxu0 0.0
    %1995 = vmatprep.subr.mxu0 0.0
    %1996 = vmatpush1.msra.mxu0 0.0
    %1997 = vmatprep.subr.mxu0 0.0
    %1998 = vmatpush1.msra.mxu0 0.0
    %1999 = vmatprep.subr.mxu0 0.0
    %2000 = vmatpush1.msra.mxu0 0.0
    %2001 = vmatprep.subr.mxu0 0.0
    %2002 = vmatpush1.msra.mxu0 0.0
    %2003 = vmatprep.subr.mxu0 0.0
    %2004 = vmatpush1.msra.mxu0 0.0
    %2005 = vmatprep.subr.mxu0 0.0
    %2006 = vmatpush1.msra.mxu0 0.0
    %2007 = vmatprep.subr.mxu0 0.0
    %2008 = vmatpush1.msra.mxu0 0.0
    %2009 = vmatprep.subr.mxu0 0.0
    %2010 = vmatpush1.msra.mxu0 0.0
    %2011 = vmatprep.subr.mxu0 0.0
    %2012 = vmatpush1.msra.mxu0 0.0
    %2013 = vmatprep.subr.mxu0 0.0
    %2014 = vmatpush1.msra.mxu0 0.0
    %2015 = vmatprep.subr.mxu0 0.0
    %2016 = vmatpush1.msra.mxu0 0.0
    %2017 = vmatprep.subr.mxu0 0.0
    %2018 = vmatpush1.msra.mxu0 0.0
    %2019 = vmatprep.subr.mxu0 0.0
    %2020 = vmatpush1.msra.mxu0 0.0
    %2021 = vmatprep.subr.mxu0 0.0
    %2022 = vmatpush1.msra.mxu0 0.0
    %2023 = vmatprep.subr.mxu0 0.0
    %2024 = vmatpush1.msra.mxu0 0.0
    %2025 = vmatprep.subr.mxu0 0.0
    %2026 = vmatpush1.msra.mxu0 0.0
    %2027 = vmatprep.subr.mxu0 0.0
    %2028 = vmatpush1.msra.mxu0 0.0
    %2029 = vmatprep.subr.mxu0 0.0
    %2030 = vmatpush1.msra.mxu0 0.0
    %2031 = vmatprep.subr.mxu0 0.0
    %2032 = vmatpush1.msra.mxu0 0.0
    %2033 = vmatprep.subr.mxu0 0.0
    %2034 = vmatpush1.msra.mxu0 0.0
    %2035 = vmatprep.subr.mxu0 0.0
    %2036 = vmatpush1.msra.mxu0 0.0
    %2037 = vmatprep.subr.mxu0 0.0
    %2038 = vmatpush1.msra.mxu0 0.0
    %2039 = vmatprep.subr.mxu0 0.0
    %2040 = vmatpush1.msra.mxu0 0.0
    %2041 = vmatprep.mubr.f32.mxu0 0.0
    %2042 = vmatmul.mubr.f32.gmra.mrb[0].mxu0 %v1972
    %v2043 = vpop.f32.mrb[0].mxu0
    %v2044 = vadd.f32 %v1969, %v2043
    %v2045 = vpop.f32.mrb[0].mxu0
    %2046 = vmatprep.mubr.f32.mxu0 0.0
    %2047 = vmatmul.mubr.f32.gmra.mrb[0].mxu0 %v1975
    %v2048 = vpop.f32.mrb[0].mxu0
    %v2049 = vadd.f32 %v1969, %v2048
    %v2050 = vpop.f32.mrb[0].mxu0
    %2051 = vdwg.mxu0
    %v2052 = vmax.f32 %v2044, 0.0
    %v2053 = vmax.f32 %v2049, 0.0
    %v2054 = vadd.f32 %v1864, %v2052
    %v2055 = vadd.f32 %v1865, %v2053
    %v2056 = vld [vmem:[#allocation19] sm:$0x1]
    %v2057 = vld [vmem:[#allocation20] sm:$0x1]
    %v2058 = vsel %vm237, %v2054, 0.0
    %2059 = vadd.xlane.f32.xlu0 %v2058
    %v2060 = vpop.xlane.xlu0 %2059
    %v2061 = vsel %vm237, %v2055, 0.0
    %2062 = vadd.xlane.f32.xlu0 %v2061
    %v2063 = vpop.xlane.xlu0 %2062
    %v2064 = vmul.f32 %v2060, %v244
    %v2065 = vmul.f32 %v2063, %v244
    %v2066 = vsub.f32 %v2054, %v2064
    %v2067 = vsub.f32 %v2055, %v2065
    %v2068 = vmul.f32 %v2066, %v2066
    %v2069 = vmul.f32 %v2067, %v2067
    %v2070 = vsel %vm237, %v2068, 0.0
    %2071 = vadd.xlane.f32.xlu0 %v2070
    %v2072 = vpop.xlane.xlu0 %2071
    %v2073 = vsel %vm237, %v2069, 0.0
    %2074 = vadd.xlane.f32.xlu0 %v2073
    %v2075 = vpop.xlane.xlu0 %2074
    %v2076 = vmul.f32 %v2072, %v244
    %v2077 = vmul.f32 %v2075, %v244
    %v2078 = vadd.f32 %v2076, 1e-05
    %v2079 = vadd.f32 %v2077, 1e-05
    %v2080 = vrsqrt.pop %v2078
    %v2081 = vrsqrt.pop %v2079
    %v2082 = vmul.f32 %v2066, %v2080
    %v2083 = vmul.f32 %v2067, %v2081
    %v2085 = vlaneseq
    %v2086 = vshrl.u32 %v2085, 7
    %v2087 = vsub.s32 0, %v2086
    %v2088 = vrot.slane %v2056, %v2087
    %v2090 = vmul.f32 %v2082, %v2088
    %v2091 = vmul.f32 %v2083, %v2088
    %v2093 = vlaneseq
    %v2094 = vshrl.u32 %v2093, 7
    %v2095 = vsub.s32 0, %v2094
    %v2096 = vrot.slane %v2057, %v2095
    %v2098 = vadd.f32 %v2090, %v2096
    %v2099 = vadd.f32 %v2091, %v2096
    %s2100 = scalar_lea.vmem %s4, 32
    %v2101 = vld [vmem:[%s2100] sm:$0xff]
    %v2102 = vld [vmem:[%s2100 + $0x8] sm:$0xff]
    %v2103 = vld [vmem:[%s2100 + $0x10] sm:$0xff]
    %v2104 = vld [vmem:[%s2100 + $0x18] sm:$0xff]
    %s2105 = scalar_lea.vmem [#allocation7], 1
    %v2106 = vld [vmem:[%s2105] sm:$0x1]
    %s2107 = scalar_lea.vmem %s6, 32
    %v2108 = vld [vmem:[%s2107] sm:$0xff]
    %v2109 = vld [vmem:[%s2107 + $0x8] sm:$0xff]
    %v2110 = vld [vmem:[%s2107 + $0x10] sm:$0xff]
    %v2111 = vld [vmem:[%s2107 + $0x18] sm:$0xff]
    %s2112 = scalar_lea.vmem [#allocation8], 1
    %v2113 = vld [vmem:[%s2112] sm:$0x1]
    %v2115 = vlaneseq
    %v2116 = vshrl.u32 %v2115, 7
    %v2117 = vsub.s32 0, %v2116
    %v2118 = vrot.slane %v2106, %v2117
    %v2121 = vsel %vm237, %v2098, 0
    %v2124 = vsel %vm237, %v2099, 0
    %2126 = vmatprep.subr.mxu0 0.0
    %2127 = vmatpush1.msra.mxu0 %v2101
    %2128 = vmatprep.subr.mxu0 0.0
    %2129 = vmatpush1.msra.mxu0 %v2102
    %2130 = vmatprep.subr.mxu0 0.0
    %2131 = vmatpush1.msra.mxu0 %v2103
    %2132 = vmatprep.subr.mxu0 0.0
    %2133 = vmatpush1.msra.mxu0 %v2104
    %2134 = vmatprep.subr.mxu0 0.0
    %2135 = vmatpush1.msra.mxu0 0.0
    %2136 = vmatprep.subr.mxu0 0.0
    %2137 = vmatpush1.msra.mxu0 0.0
    %2138 = vmatprep.subr.mxu0 0.0
    %2139 = vmatpush1.msra.mxu0 0.0
    %2140 = vmatprep.subr.mxu0 0.0
    %2141 = vmatpush1.msra.mxu0 0.0
    %2142 = vmatprep.subr.mxu0 0.0
    %2143 = vmatpush1.msra.mxu0 0.0
    %2144 = vmatprep.subr.mxu0 0.0
    %2145 = vmatpush1.msra.mxu0 0.0
    %2146 = vmatprep.subr.mxu0 0.0
    %2147 = vmatpush1.msra.mxu0 0.0
    %2148 = vmatprep.subr.mxu0 0.0
    %2149 = vmatpush1.msra.mxu0 0.0
    %2150 = vmatprep.subr.mxu0 0.0
    %2151 = vmatpush1.msra.mxu0 0.0
    %2152 = vmatprep.subr.mxu0 0.0
    %2153 = vmatpush1.msra.mxu0 0.0
    %2154 = vmatprep.subr.mxu0 0.0
    %2155 = vmatpush1.msra.mxu0 0.0
    %2156 = vmatprep.subr.mxu0 0.0
    %2157 = vmatpush1.msra.mxu0 0.0
    %2158 = vmatprep.subr.mxu0 0.0
    %2159 = vmatpush1.msra.mxu0 0.0
    %2160 = vmatprep.subr.mxu0 0.0
    %2161 = vmatpush1.msra.mxu0 0.0
    %2162 = vmatprep.subr.mxu0 0.0
    %2163 = vmatpush1.msra.mxu0 0.0
    %2164 = vmatprep.subr.mxu0 0.0
    %2165 = vmatpush1.msra.mxu0 0.0
    %2166 = vmatprep.subr.mxu0 0.0
    %2167 = vmatpush1.msra.mxu0 0.0
    %2168 = vmatprep.subr.mxu0 0.0
    %2169 = vmatpush1.msra.mxu0 0.0
    %2170 = vmatprep.subr.mxu0 0.0
    %2171 = vmatpush1.msra.mxu0 0.0
    %2172 = vmatprep.subr.mxu0 0.0
    %2173 = vmatpush1.msra.mxu0 0.0
    %2174 = vmatprep.subr.mxu0 0.0
    %2175 = vmatpush1.msra.mxu0 0.0
    %2176 = vmatprep.subr.mxu0 0.0
    %2177 = vmatpush1.msra.mxu0 0.0
    %2178 = vmatprep.subr.mxu0 0.0
    %2179 = vmatpush1.msra.mxu0 0.0
    %2180 = vmatprep.subr.mxu0 0.0
    %2181 = vmatpush1.msra.mxu0 0.0
    %2182 = vmatprep.subr.mxu0 0.0
    %2183 = vmatpush1.msra.mxu0 0.0
    %2184 = vmatprep.subr.mxu0 0.0
    %2185 = vmatpush1.msra.mxu0 0.0
    %2186 = vmatprep.subr.mxu0 0.0
    %2187 = vmatpush1.msra.mxu0 0.0
    %2188 = vmatprep.subr.mxu0 0.0
    %2189 = vmatpush1.msra.mxu0 0.0
    %2190 = vmatprep.mubr.f32.mxu0 0.0
    %2191 = vmatmul.mubr.f32.gmra.mrb[0].mxu0 %v2121
    %v2192 = vpop.f32.mrb[0].mxu0
    %v2193 = vadd.f32 %v2118, %v2192
    %v2194 = vpop.f32.mrb[0].mxu0
    %2195 = vmatprep.mubr.f32.mxu0 0.0
    %2196 = vmatmul.mubr.f32.gmra.mrb[0].mxu0 %v2124
    %v2197 = vpop.f32.mrb[0].mxu0
    %v2198 = vadd.f32 %v2118, %v2197
    %v2199 = vpop.f32.mrb[0].mxu0
    %2200 = vdwg.mxu0
    %v2201 = vmul.f32 %v2193, 0.35355338
    %v2202 = vmul.f32 %v2198, 0.35355338
    %2204 = vrot.lane.b32.xlu0 %v2193, 96
    %v2205 = vpop.permute.xlu0 %2204
    %v2207 = vsel %vm383, %v2201, 0
    %v2209 = vsel %vm383, %v2205, 0
    %2211 = vmatprep.subr.mxu0 0.0
    %2212 = vmatpush1.xpose.msra.mxu0 %v2209
    %2213 = vmatprep.subr.mxu0 0.0
    %2214 = vmatpush1.xpose.msra.mxu0 0.0
    %2215 = vmatprep.subr.mxu0 0.0
    %2216 = vmatpush1.xpose.msra.mxu0 0.0
    %2217 = vmatprep.subr.mxu0 0.0
    %2218 = vmatpush1.xpose.msra.mxu0 0.0
    %2219 = vmatprep.subr.mxu0 0.0
    %2220 = vmatpush1.xpose.msra.mxu0 0.0
    %2221 = vmatprep.subr.mxu0 0.0
    %2222 = vmatpush1.xpose.msra.mxu0 0.0
    %2223 = vmatprep.subr.mxu0 0.0
    %2224 = vmatpush1.xpose.msra.mxu0 0.0
    %2225 = vmatprep.subr.mxu0 0.0
    %2226 = vmatpush1.xpose.msra.mxu0 0.0
    %2227 = vmatprep.subr.mxu0 0.0
    %2228 = vmatpush1.xpose.msra.mxu0 0.0
    %2229 = vmatprep.subr.mxu0 0.0
    %2230 = vmatpush1.xpose.msra.mxu0 0.0
    %2231 = vmatprep.subr.mxu0 0.0
    %2232 = vmatpush1.xpose.msra.mxu0 0.0
    %2233 = vmatprep.subr.mxu0 0.0
    %2234 = vmatpush1.xpose.msra.mxu0 0.0
    %2235 = vmatprep.subr.mxu0 0.0
    %2236 = vmatpush1.xpose.msra.mxu0 0.0
    %2237 = vmatprep.subr.mxu0 0.0
    %2238 = vmatpush1.xpose.msra.mxu0 0.0
    %2239 = vmatprep.subr.mxu0 0.0
    %2240 = vmatpush1.xpose.msra.mxu0 0.0
    %2241 = vmatprep.subr.mxu0 0.0
    %2242 = vmatpush1.xpose.msra.mxu0 0.0
    %2243 = vmatprep.subr.mxu0 0.0
    %2244 = vmatpush1.xpose.msra.mxu0 0.0
    %2245 = vmatprep.subr.mxu0 0.0
    %2246 = vmatpush1.xpose.msra.mxu0 0.0
    %2247 = vmatprep.subr.mxu0 0.0
    %2248 = vmatpush1.xpose.msra.mxu0 0.0
    %2249 = vmatprep.subr.mxu0 0.0
    %2250 = vmatpush1.xpose.msra.mxu0 0.0
    %2251 = vmatprep.subr.mxu0 0.0
    %2252 = vmatpush1.xpose.msra.mxu0 0.0
    %2253 = vmatprep.subr.mxu0 0.0
    %2254 = vmatpush1.xpose.msra.mxu0 0.0
    %2255 = vmatprep.subr.mxu0 0.0
    %2256 = vmatpush1.xpose.msra.mxu0 0.0
    %2257 = vmatprep.subr.mxu0 0.0
    %2258 = vmatpush1.xpose.msra.mxu0 0.0
    %2259 = vmatprep.subr.mxu0 0.0
    %2260 = vmatpush1.xpose.msra.mxu0 0.0
    %2261 = vmatprep.subr.mxu0 0.0
    %2262 = vmatpush1.xpose.msra.mxu0 0.0
    %2263 = vmatprep.subr.mxu0 0.0
    %2264 = vmatpush1.xpose.msra.mxu0 0.0
    %2265 = vmatprep.subr.mxu0 0.0
    %2266 = vmatpush1.xpose.msra.mxu0 0.0
    %2267 = vmatprep.subr.mxu0 0.0
    %2268 = vmatpush1.xpose.msra.mxu0 0.0
    %2269 = vmatprep.subr.mxu0 0.0
    %2270 = vmatpush1.xpose.msra.mxu0 0.0
    %2271 = vmatprep.subr.mxu0 0.0
    %2272 = vmatpush1.xpose.msra.mxu0 0.0
    %2273 = vmatprep.subr.mxu0 0.0
    %2274 = vmatpush1.xpose.msra.mxu0 0.0
    %2275 = vmatprep.mubr.f32.mxu0 0.0
    %2276 = vmatmul.mubr.f32.gmra.mrb[0].mxu0 %v2207
    %v2277 = vpop.f32.mrb[0].mxu0
    %v2278 = vadd.f32 0.0, %v2277
    %v2279 = vpop.f32.mrb[0].mxu0
    %2280 = vdwg.mxu0
    %2282 = vrot.lane.b32.xlu0 %v2198, 96
    %v2283 = vpop.permute.xlu0 %2282
    %v2285 = vsel %vm383, %v2202, 0
    %v2287 = vsel %vm383, %v2283, 0
    %2289 = vmatprep.subr.mxu0 0.0
    %2290 = vmatpush1.xpose.msra.mxu0 %v2287
    %2291 = vmatprep.subr.mxu0 0.0
    %2292 = vmatpush1.xpose.msra.mxu0 0.0
    %2293 = vmatprep.subr.mxu0 0.0
    %2294 = vmatpush1.xpose.msra.mxu0 0.0
    %2295 = vmatprep.subr.mxu0 0.0
    %2296 = vmatpush1.xpose.msra.mxu0 0.0
    %2297 = vmatprep.subr.mxu0 0.0
    %2298 = vmatpush1.xpose.msra.mxu0 0.0
    %2299 = vmatprep.subr.mxu0 0.0
    %2300 = vmatpush1.xpose.msra.mxu0 0.0
    %2301 = vmatprep.subr.mxu0 0.0
    %2302 = vmatpush1.xpose.msra.mxu0 0.0
    %2303 = vmatprep.subr.mxu0 0.0
    %2304 = vmatpush1.xpose.msra.mxu0 0.0
    %2305 = vmatprep.subr.mxu0 0.0
    %2306 = vmatpush1.xpose.msra.mxu0 0.0
    %2307 = vmatprep.subr.mxu0 0.0
    %2308 = vmatpush1.xpose.msra.mxu0 0.0
    %2309 = vmatprep.subr.mxu0 0.0
    %2310 = vmatpush1.xpose.msra.mxu0 0.0
    %2311 = vmatprep.subr.mxu0 0.0
    %2312 = vmatpush1.xpose.msra.mxu0 0.0
    %2313 = vmatprep.subr.mxu0 0.0
    %2314 = vmatpush1.xpose.msra.mxu0 0.0
    %2315 = vmatprep.subr.mxu0 0.0
    %2316 = vmatpush1.xpose.msra.mxu0 0.0
    %2317 = vmatprep.subr.mxu0 0.0
    %2318 = vmatpush1.xpose.msra.mxu0 0.0
    %2319 = vmatprep.subr.mxu0 0.0
    %2320 = vmatpush1.xpose.msra.mxu0 0.0
    %2321 = vmatprep.subr.mxu0 0.0
    %2322 = vmatpush1.xpose.msra.mxu0 0.0
    %2323 = vmatprep.subr.mxu0 0.0
    %2324 = vmatpush1.xpose.msra.mxu0 0.0
    %2325 = vmatprep.subr.mxu0 0.0
    %2326 = vmatpush1.xpose.msra.mxu0 0.0
    %2327 = vmatprep.subr.mxu0 0.0
    %2328 = vmatpush1.xpose.msra.mxu0 0.0
    %2329 = vmatprep.subr.mxu0 0.0
    %2330 = vmatpush1.xpose.msra.mxu0 0.0
    %2331 = vmatprep.subr.mxu0 0.0
    %2332 = vmatpush1.xpose.msra.mxu0 0.0
    %2333 = vmatprep.subr.mxu0 0.0
    %2334 = vmatpush1.xpose.msra.mxu0 0.0
    %2335 = vmatprep.subr.mxu0 0.0
    %2336 = vmatpush1.xpose.msra.mxu0 0.0
    %2337 = vmatprep.subr.mxu0 0.0
    %2338 = vmatpush1.xpose.msra.mxu0 0.0
    %2339 = vmatprep.subr.mxu0 0.0
    %2340 = vmatpush1.xpose.msra.mxu0 0.0
    %2341 = vmatprep.subr.mxu0 0.0
    %2342 = vmatpush1.xpose.msra.mxu0 0.0
    %2343 = vmatprep.subr.mxu0 0.0
    %2344 = vmatpush1.xpose.msra.mxu0 0.0
    %2345 = vmatprep.subr.mxu0 0.0
    %2346 = vmatpush1.xpose.msra.mxu0 0.0
    %2347 = vmatprep.subr.mxu0 0.0
    %2348 = vmatpush1.xpose.msra.mxu0 0.0
    %2349 = vmatprep.subr.mxu0 0.0
    %2350 = vmatpush1.xpose.msra.mxu0 0.0
    %2351 = vmatprep.subr.mxu0 0.0
    %2352 = vmatpush1.xpose.msra.mxu0 0.0
    %2353 = vmatprep.mubr.f32.mxu0 0.0
    %2354 = vmatmul.mubr.f32.gmra.mrb[0].mxu0 %v2285
    %v2355 = vpop.f32.mrb[0].mxu0
    %v2356 = vadd.f32 0.0, %v2355
    %v2357 = vpop.f32.mrb[0].mxu0
    %2358 = vdwg.mxu0
    %v2359 = vsel %vm383, %v2278, -inf
    %2360 = vmax.xlane.f32.xlu0 %v2359
    %v2361 = vpop.xlane.xlu0 %2360
    %v2362 = vsel %vm383, %v2356, -inf
    %2363 = vmax.xlane.f32.xlu0 %v2362
    %v2364 = vpop.xlane.xlu0 %2363
    %v2365 = vsub.f32 %v2278, %v2361
    %v2366 = vsub.f32 %v2356, %v2364
    %v2367 = vmul.f32 %v2365, 1.442695
    %v2368 = vpow.pop %v2367
    %v2369 = vmul.f32 %v2366, 1.442695
    %v2370 = vpow.pop %v2369
    %v2371 = vsel %vm383, %v2368, 0.0
    %2372 = vadd.xlane.f32.xlu0 %v2371
    %v2373 = vpop.xlane.xlu0 %2372
    %v2374 = vsel %vm383, %v2370, 0.0
    %2375 = vadd.xlane.f32.xlu0 %v2374
    %v2376 = vpop.xlane.xlu0 %2375
    %v2377 = vrcp.pop %v2373
    %v2378 = vrcp.pop %v2376
    %v2379 = vmul.f32 %v2368, %v2377
    %v2380 = vmul.f32 %v2370, %v2378
    %2381 = vrot.lane.b32.xlu0 %v2193, 64
    %v2382 = vpop.permute.xlu0 %2381
    %v2385 = vsel %vm383, %v2379, 0
    %2387 = vmatprep.subr.mxu0 0.0
    %2388 = vmatpush1.msra.mxu0 %v2382
    %2389 = vmatprep.subr.mxu0 0.0
    %2390 = vmatpush1.msra.mxu0 0.0
    %2391 = vmatprep.subr.mxu0 0.0
    %2392 = vmatpush1.msra.mxu0 0.0
    %2393 = vmatprep.subr.mxu0 0.0
    %2394 = vmatpush1.msra.mxu0 0.0
    %2395 = vmatprep.subr.mxu0 0.0
    %2396 = vmatpush1.msra.mxu0 0.0
    %2397 = vmatprep.subr.mxu0 0.0
    %2398 = vmatpush1.msra.mxu0 0.0
    %2399 = vmatprep.subr.mxu0 0.0
    %2400 = vmatpush1.msra.mxu0 0.0
    %2401 = vmatprep.subr.mxu0 0.0
    %2402 = vmatpush1.msra.mxu0 0.0
    %2403 = vmatprep.subr.mxu0 0.0
    %2404 = vmatpush1.msra.mxu0 0.0
    %2405 = vmatprep.subr.mxu0 0.0
    %2406 = vmatpush1.msra.mxu0 0.0
    %2407 = vmatprep.subr.mxu0 0.0
    %2408 = vmatpush1.msra.mxu0 0.0
    %2409 = vmatprep.subr.mxu0 0.0
    %2410 = vmatpush1.msra.mxu0 0.0
    %2411 = vmatprep.subr.mxu0 0.0
    %2412 = vmatpush1.msra.mxu0 0.0
    %2413 = vmatprep.subr.mxu0 0.0
    %2414 = vmatpush1.msra.mxu0 0.0
    %2415 = vmatprep.subr.mxu0 0.0
    %2416 = vmatpush1.msra.mxu0 0.0
    %2417 = vmatprep.subr.mxu0 0.0
    %2418 = vmatpush1.msra.mxu0 0.0
    %2419 = vmatprep.subr.mxu0 0.0
    %2420 = vmatpush1.msra.mxu0 0.0
    %2421 = vmatprep.subr.mxu0 0.0
    %2422 = vmatpush1.msra.mxu0 0.0
    %2423 = vmatprep.subr.mxu0 0.0
    %2424 = vmatpush1.msra.mxu0 0.0
    %2425 = vmatprep.subr.mxu0 0.0
    %2426 = vmatpush1.msra.mxu0 0.0
    %2427 = vmatprep.subr.mxu0 0.0
    %2428 = vmatpush1.msra.mxu0 0.0
    %2429 = vmatprep.subr.mxu0 0.0
    %2430 = vmatpush1.msra.mxu0 0.0
    %2431 = vmatprep.subr.mxu0 0.0
    %2432 = vmatpush1.msra.mxu0 0.0
    %2433 = vmatprep.subr.mxu0 0.0
    %2434 = vmatpush1.msra.mxu0 0.0
    %2435 = vmatprep.subr.mxu0 0.0
    %2436 = vmatpush1.msra.mxu0 0.0
    %2437 = vmatprep.subr.mxu0 0.0
    %2438 = vmatpush1.msra.mxu0 0.0
    %2439 = vmatprep.subr.mxu0 0.0
    %2440 = vmatpush1.msra.mxu0 0.0
    %2441 = vmatprep.subr.mxu0 0.0
    %2442 = vmatpush1.msra.mxu0 0.0
    %2443 = vmatprep.subr.mxu0 0.0
    %2444 = vmatpush1.msra.mxu0 0.0
    %2445 = vmatprep.subr.mxu0 0.0
    %2446 = vmatpush1.msra.mxu0 0.0
    %2447 = vmatprep.subr.mxu0 0.0
    %2448 = vmatpush1.msra.mxu0 0.0
    %2449 = vmatprep.subr.mxu0 0.0
    %2450 = vmatpush1.msra.mxu0 0.0
    %2451 = vmatprep.mubr.f32.mxu0 0.0
    %2452 = vmatmul.mubr.f32.gmra.mrb[0].mxu0 %v2385
    %v2453 = vpop.f32.mrb[0].mxu0
    %v2454 = vadd.f32 0.0, %v2453
    %v2455 = vpop.f32.mrb[0].mxu0
    %2456 = vdwg.mxu0
    %2457 = vrot.lane.b32.xlu0 %v2198, 64
    %v2458 = vpop.permute.xlu0 %2457
    %v2461 = vsel %vm383, %v2380, 0
    %2463 = vmatprep.subr.mxu0 0.0
    %2464 = vmatpush1.msra.mxu0 %v2458
    %2465 = vmatprep.subr.mxu0 0.0
    %2466 = vmatpush1.msra.mxu0 0.0
    %2467 = vmatprep.subr.mxu0 0.0
    %2468 = vmatpush1.msra.mxu0 0.0
    %2469 = vmatprep.subr.mxu0 0.0
    %2470 = vmatpush1.msra.mxu0 0.0
    %2471 = vmatprep.subr.mxu0 0.0
    %2472 = vmatpush1.msra.mxu0 0.0
    %2473 = vmatprep.subr.mxu0 0.0
    %2474 = vmatpush1.msra.mxu0 0.0
    %2475 = vmatprep.subr.mxu0 0.0
    %2476 = vmatpush1.msra.mxu0 0.0
    %2477 = vmatprep.subr.mxu0 0.0
    %2478 = vmatpush1.msra.mxu0 0.0
    %2479 = vmatprep.subr.mxu0 0.0
    %2480 = vmatpush1.msra.mxu0 0.0
    %2481 = vmatprep.subr.mxu0 0.0
    %2482 = vmatpush1.msra.mxu0 0.0
    %2483 = vmatprep.subr.mxu0 0.0
    %2484 = vmatpush1.msra.mxu0 0.0
    %2485 = vmatprep.subr.mxu0 0.0
    %2486 = vmatpush1.msra.mxu0 0.0
    %2487 = vmatprep.subr.mxu0 0.0
    %2488 = vmatpush1.msra.mxu0 0.0
    %2489 = vmatprep.subr.mxu0 0.0
    %2490 = vmatpush1.msra.mxu0 0.0
    %2491 = vmatprep.subr.mxu0 0.0
    %2492 = vmatpush1.msra.mxu0 0.0
    %2493 = vmatprep.subr.mxu0 0.0
    %2494 = vmatpush1.msra.mxu0 0.0
    %2495 = vmatprep.subr.mxu0 0.0
    %2496 = vmatpush1.msra.mxu0 0.0
    %2497 = vmatprep.subr.mxu0 0.0
    %2498 = vmatpush1.msra.mxu0 0.0
    %2499 = vmatprep.subr.mxu0 0.0
    %2500 = vmatpush1.msra.mxu0 0.0
    %2501 = vmatprep.subr.mxu0 0.0
    %2502 = vmatpush1.msra.mxu0 0.0
    %2503 = vmatprep.subr.mxu0 0.0
    %2504 = vmatpush1.msra.mxu0 0.0
    %2505 = vmatprep.subr.mxu0 0.0
    %2506 = vmatpush1.msra.mxu0 0.0
    %2507 = vmatprep.subr.mxu0 0.0
    %2508 = vmatpush1.msra.mxu0 0.0
    %2509 = vmatprep.subr.mxu0 0.0
    %2510 = vmatpush1.msra.mxu0 0.0
    %2511 = vmatprep.subr.mxu0 0.0
    %2512 = vmatpush1.msra.mxu0 0.0
    %2513 = vmatprep.subr.mxu0 0.0
    %2514 = vmatpush1.msra.mxu0 0.0
    %2515 = vmatprep.subr.mxu0 0.0
    %2516 = vmatpush1.msra.mxu0 0.0
    %2517 = vmatprep.subr.mxu0 0.0
    %2518 = vmatpush1.msra.mxu0 0.0
    %2519 = vmatprep.subr.mxu0 0.0
    %2520 = vmatpush1.msra.mxu0 0.0
    %2521 = vmatprep.subr.mxu0 0.0
    %2522 = vmatpush1.msra.mxu0 0.0
    %2523 = vmatprep.subr.mxu0 0.0
    %2524 = vmatpush1.msra.mxu0 0.0
    %2525 = vmatprep.subr.mxu0 0.0
    %2526 = vmatpush1.msra.mxu0 0.0
    %2527 = vmatprep.mubr.f32.mxu0 0.0
    %2528 = vmatmul.mubr.f32.gmra.mrb[0].mxu0 %v2461
    %v2529 = vpop.f32.mrb[0].mxu0
    %v2530 = vadd.f32 0.0, %v2529
    %v2531 = vpop.f32.mrb[0].mxu0
    %2532 = vdwg.mxu0
    %2533 = vrot.lane.b32.xlu0 %v2201, 120
    %v2534 = vpop.permute.xlu0 %2533
    %2535 = vrot.lane.b32.xlu0 %v2193, 88
    %v2536 = vpop.permute.xlu0 %2535
    %v2537 = vsel %vm383, %v2534, 0
    %v2539 = vsel %vm383, %v2536, 0
    %2541 = vmatprep.subr.mxu0 0.0
    %2542 = vmatpush1.xpose.msra.mxu0 %v2539
    %2543 = vmatprep.subr.mxu0 0.0
    %2544 = vmatpush1.xpose.msra.mxu0 0.0
    %2545 = vmatprep.subr.mxu0 0.0
    %2546 = vmatpush1.xpose.msra.mxu0 0.0
    %2547 = vmatprep.subr.mxu0 0.0
    %2548 = vmatpush1.xpose.msra.mxu0 0.0
    %2549 = vmatprep.subr.mxu0 0.0
    %2550 = vmatpush1.xpose.msra.mxu0 0.0
    %2551 = vmatprep.subr.mxu0 0.0
    %2552 = vmatpush1.xpose.msra.mxu0 0.0
    %2553 = vmatprep.subr.mxu0 0.0
    %2554 = vmatpush1.xpose.msra.mxu0 0.0
    %2555 = vmatprep.subr.mxu0 0.0
    %2556 = vmatpush1.xpose.msra.mxu0 0.0
    %2557 = vmatprep.subr.mxu0 0.0
    %2558 = vmatpush1.xpose.msra.mxu0 0.0
    %2559 = vmatprep.subr.mxu0 0.0
    %2560 = vmatpush1.xpose.msra.mxu0 0.0
    %2561 = vmatprep.subr.mxu0 0.0
    %2562 = vmatpush1.xpose.msra.mxu0 0.0
    %2563 = vmatprep.subr.mxu0 0.0
    %2564 = vmatpush1.xpose.msra.mxu0 0.0
    %2565 = vmatprep.subr.mxu0 0.0
    %2566 = vmatpush1.xpose.msra.mxu0 0.0
    %2567 = vmatprep.subr.mxu0 0.0
    %2568 = vmatpush1.xpose.msra.mxu0 0.0
    %2569 = vmatprep.subr.mxu0 0.0
    %2570 = vmatpush1.xpose.msra.mxu0 0.0
    %2571 = vmatprep.subr.mxu0 0.0
    %2572 = vmatpush1.xpose.msra.mxu0 0.0
    %2573 = vmatprep.subr.mxu0 0.0
    %2574 = vmatpush1.xpose.msra.mxu0 0.0
    %2575 = vmatprep.subr.mxu0 0.0
    %2576 = vmatpush1.xpose.msra.mxu0 0.0
    %2577 = vmatprep.subr.mxu0 0.0
    %2578 = vmatpush1.xpose.msra.mxu0 0.0
    %2579 = vmatprep.subr.mxu0 0.0
    %2580 = vmatpush1.xpose.msra.mxu0 0.0
    %2581 = vmatprep.subr.mxu0 0.0
    %2582 = vmatpush1.xpose.msra.mxu0 0.0
    %2583 = vmatprep.subr.mxu0 0.0
    %2584 = vmatpush1.xpose.msra.mxu0 0.0
    %2585 = vmatprep.subr.mxu0 0.0
    %2586 = vmatpush1.xpose.msra.mxu0 0.0
    %2587 = vmatprep.subr.mxu0 0.0
    %2588 = vmatpush1.xpose.msra.mxu0 0.0
    %2589 = vmatprep.subr.mxu0 0.0
    %2590 = vmatpush1.xpose.msra.mxu0 0.0
    %2591 = vmatprep.subr.mxu0 0.0
    %2592 = vmatpush1.xpose.msra.mxu0 0.0
    %2593 = vmatprep.subr.mxu0 0.0
    %2594 = vmatpush1.xpose.msra.mxu0 0.0
    %2595 = vmatprep.subr.mxu0 0.0
    %2596 = vmatpush1.xpose.msra.mxu0 0.0
    %2597 = vmatprep.subr.mxu0 0.0
    %2598 = vmatpush1.xpose.msra.mxu0 0.0
    %2599 = vmatprep.subr.mxu0 0.0
    %2600 = vmatpush1.xpose.msra.mxu0 0.0
    %2601 = vmatprep.subr.mxu0 0.0
    %2602 = vmatpush1.xpose.msra.mxu0 0.0
    %2603 = vmatprep.subr.mxu0 0.0
    %2604 = vmatpush1.xpose.msra.mxu0 0.0
    %2605 = vmatprep.mubr.f32.mxu0 0.0
    %2606 = vmatmul.mubr.f32.gmra.mrb[0].mxu0 %v2537
    %v2607 = vpop.f32.mrb[0].mxu0
    %v2608 = vadd.f32 0.0, %v2607
    %v2609 = vpop.f32.mrb[0].mxu0
    %2610 = vdwg.mxu0
    %2611 = vrot.lane.b32.xlu0 %v2202, 120
    %v2612 = vpop.permute.xlu0 %2611
    %2613 = vrot.lane.b32.xlu0 %v2198, 88
    %v2614 = vpop.permute.xlu0 %2613
    %v2615 = vsel %vm383, %v2612, 0
    %v2617 = vsel %vm383, %v2614, 0
    %2619 = vmatprep.subr.mxu0 0.0
    %2620 = vmatpush1.xpose.msra.mxu0 %v2617
    %2621 = vmatprep.subr.mxu0 0.0
    %2622 = vmatpush1.xpose.msra.mxu0 0.0
    %2623 = vmatprep.subr.mxu0 0.0
    %2624 = vmatpush1.xpose.msra.mxu0 0.0
    %2625 = vmatprep.subr.mxu0 0.0
    %2626 = vmatpush1.xpose.msra.mxu0 0.0
    %2627 = vmatprep.subr.mxu0 0.0
    %2628 = vmatpush1.xpose.msra.mxu0 0.0
    %2629 = vmatprep.subr.mxu0 0.0
    %2630 = vmatpush1.xpose.msra.mxu0 0.0
    %2631 = vmatprep.subr.mxu0 0.0
    %2632 = vmatpush1.xpose.msra.mxu0 0.0
    %2633 = vmatprep.subr.mxu0 0.0
    %2634 = vmatpush1.xpose.msra.mxu0 0.0
    %2635 = vmatprep.subr.mxu0 0.0
    %2636 = vmatpush1.xpose.msra.mxu0 0.0
    %2637 = vmatprep.subr.mxu0 0.0
    %2638 = vmatpush1.xpose.msra.mxu0 0.0
    %2639 = vmatprep.subr.mxu0 0.0
    %2640 = vmatpush1.xpose.msra.mxu0 0.0
    %2641 = vmatprep.subr.mxu0 0.0
    %2642 = vmatpush1.xpose.msra.mxu0 0.0
    %2643 = vmatprep.subr.mxu0 0.0
    %2644 = vmatpush1.xpose.msra.mxu0 0.0
    %2645 = vmatprep.subr.mxu0 0.0
    %2646 = vmatpush1.xpose.msra.mxu0 0.0
    %2647 = vmatprep.subr.mxu0 0.0
    %2648 = vmatpush1.xpose.msra.mxu0 0.0
    %2649 = vmatprep.subr.mxu0 0.0
    %2650 = vmatpush1.xpose.msra.mxu0 0.0
    %2651 = vmatprep.subr.mxu0 0.0
    %2652 = vmatpush1.xpose.msra.mxu0 0.0
    %2653 = vmatprep.subr.mxu0 0.0
    %2654 = vmatpush1.xpose.msra.mxu0 0.0
    %2655 = vmatprep.subr.mxu0 0.0
    %2656 = vmatpush1.xpose.msra.mxu0 0.0
    %2657 = vmatprep.subr.mxu0 0.0
    %2658 = vmatpush1.xpose.msra.mxu0 0.0
    %2659 = vmatprep.subr.mxu0 0.0
    %2660 = vmatpush1.xpose.msra.mxu0 0.0
    %2661 = vmatprep.subr.mxu0 0.0
    %2662 = vmatpush1.xpose.msra.mxu0 0.0
    %2663 = vmatprep.subr.mxu0 0.0
    %2664 = vmatpush1.xpose.msra.mxu0 0.0
    %2665 = vmatprep.subr.mxu0 0.0
    %2666 = vmatpush1.xpose.msra.mxu0 0.0
    %2667 = vmatprep.subr.mxu0 0.0
    %2668 = vmatpush1.xpose.msra.mxu0 0.0
    %2669 = vmatprep.subr.mxu0 0.0
    %2670 = vmatpush1.xpose.msra.mxu0 0.0
    %2671 = vmatprep.subr.mxu0 0.0
    %2672 = vmatpush1.xpose.msra.mxu0 0.0
    %2673 = vmatprep.subr.mxu0 0.0
    %2674 = vmatpush1.xpose.msra.mxu0 0.0
    %2675 = vmatprep.subr.mxu0 0.0
    %2676 = vmatpush1.xpose.msra.mxu0 0.0
    %2677 = vmatprep.subr.mxu0 0.0
    %2678 = vmatpush1.xpose.msra.mxu0 0.0
    %2679 = vmatprep.subr.mxu0 0.0
    %2680 = vmatpush1.xpose.msra.mxu0 0.0
    %2681 = vmatprep.subr.mxu0 0.0
    %2682 = vmatpush1.xpose.msra.mxu0 0.0
    %2683 = vmatprep.mubr.f32.mxu0 0.0
    %2684 = vmatmul.mubr.f32.gmra.mrb[0].mxu0 %v2615
    %v2685 = vpop.f32.mrb[0].mxu0
    %v2686 = vadd.f32 0.0, %v2685
    %v2687 = vpop.f32.mrb[0].mxu0
    %2688 = vdwg.mxu0
    %v2689 = vsel %vm383, %v2608, -inf
    %2690 = vmax.xlane.f32.xlu0 %v2689
    %v2691 = vpop.xlane.xlu0 %2690
    %v2692 = vsel %vm383, %v2686, -inf
    %2693 = vmax.xlane.f32.xlu0 %v2692
    %v2694 = vpop.xlane.xlu0 %2693
    %v2695 = vsub.f32 %v2608, %v2691
    %v2696 = vsub.f32 %v2686, %v2694
    %v2697 = vmul.f32 %v2695, 1.442695
    %v2698 = vpow.pop %v2697
    %v2699 = vmul.f32 %v2696, 1.442695
    %v2700 = vpow.pop %v2699
    %v2701 = vsel %vm383, %v2698, 0.0
    %2702 = vadd.xlane.f32.xlu0 %v2701
    %v2703 = vpop.xlane.xlu0 %2702
    %v2704 = vsel %vm383, %v2700, 0.0
    %2705 = vadd.xlane.f32.xlu0 %v2704
    %v2706 = vpop.xlane.xlu0 %2705
    %v2707 = vrcp.pop %v2703
    %v2708 = vrcp.pop %v2706
    %v2709 = vmul.f32 %v2698, %v2707
    %v2710 = vmul.f32 %v2700, %v2708
    %2711 = vrot.lane.b32.xlu0 %v2193, 56
    %v2712 = vpop.permute.xlu0 %2711
    %v2715 = vsel %vm383, %v2709, 0
    %2717 = vmatprep.subr.mxu0 0.0
    %2718 = vmatpush1.msra.mxu0 %v2712
    %2719 = vmatprep.subr.mxu0 0.0
    %2720 = vmatpush1.msra.mxu0 0.0
    %2721 = vmatprep.subr.mxu0 0.0
    %2722 = vmatpush1.msra.mxu0 0.0
    %2723 = vmatprep.subr.mxu0 0.0
    %2724 = vmatpush1.msra.mxu0 0.0
    %2725 = vmatprep.subr.mxu0 0.0
    %2726 = vmatpush1.msra.mxu0 0.0
    %2727 = vmatprep.subr.mxu0 0.0
    %2728 = vmatpush1.msra.mxu0 0.0
    %2729 = vmatprep.subr.mxu0 0.0
    %2730 = vmatpush1.msra.mxu0 0.0
    %2731 = vmatprep.subr.mxu0 0.0
    %2732 = vmatpush1.msra.mxu0 0.0
    %2733 = vmatprep.subr.mxu0 0.0
    %2734 = vmatpush1.msra.mxu0 0.0
    %2735 = vmatprep.subr.mxu0 0.0
    %2736 = vmatpush1.msra.mxu0 0.0
    %2737 = vmatprep.subr.mxu0 0.0
    %2738 = vmatpush1.msra.mxu0 0.0
    %2739 = vmatprep.subr.mxu0 0.0
    %2740 = vmatpush1.msra.mxu0 0.0
    %2741 = vmatprep.subr.mxu0 0.0
    %2742 = vmatpush1.msra.mxu0 0.0
    %2743 = vmatprep.subr.mxu0 0.0
    %2744 = vmatpush1.msra.mxu0 0.0
    %2745 = vmatprep.subr.mxu0 0.0
    %2746 = vmatpush1.msra.mxu0 0.0
    %2747 = vmatprep.subr.mxu0 0.0
    %2748 = vmatpush1.msra.mxu0 0.0
    %2749 = vmatprep.subr.mxu0 0.0
    %2750 = vmatpush1.msra.mxu0 0.0
    %2751 = vmatprep.subr.mxu0 0.0
    %2752 = vmatpush1.msra.mxu0 0.0
    %2753 = vmatprep.subr.mxu0 0.0
    %2754 = vmatpush1.msra.mxu0 0.0
    %2755 = vmatprep.subr.mxu0 0.0
    %2756 = vmatpush1.msra.mxu0 0.0
    %2757 = vmatprep.subr.mxu0 0.0
    %2758 = vmatpush1.msra.mxu0 0.0
    %2759 = vmatprep.subr.mxu0 0.0
    %2760 = vmatpush1.msra.mxu0 0.0
    %2761 = vmatprep.subr.mxu0 0.0
    %2762 = vmatpush1.msra.mxu0 0.0
    %2763 = vmatprep.subr.mxu0 0.0
    %2764 = vmatpush1.msra.mxu0 0.0
    %2765 = vmatprep.subr.mxu0 0.0
    %2766 = vmatpush1.msra.mxu0 0.0
    %2767 = vmatprep.subr.mxu0 0.0
    %2768 = vmatpush1.msra.mxu0 0.0
    %2769 = vmatprep.subr.mxu0 0.0
    %2770 = vmatpush1.msra.mxu0 0.0
    %2771 = vmatprep.subr.mxu0 0.0
    %2772 = vmatpush1.msra.mxu0 0.0
    %2773 = vmatprep.subr.mxu0 0.0
    %2774 = vmatpush1.msra.mxu0 0.0
    %2775 = vmatprep.subr.mxu0 0.0
    %2776 = vmatpush1.msra.mxu0 0.0
    %2777 = vmatprep.subr.mxu0 0.0
    %2778 = vmatpush1.msra.mxu0 0.0
    %2779 = vmatprep.subr.mxu0 0.0
    %2780 = vmatpush1.msra.mxu0 0.0
    %2781 = vmatprep.mubr.f32.mxu0 0.0
    %2782 = vmatmul.mubr.f32.gmra.mrb[0].mxu0 %v2715
    %v2783 = vpop.f32.mrb[0].mxu0
    %v2784 = vadd.f32 0.0, %v2783
    %v2785 = vpop.f32.mrb[0].mxu0
    %2786 = vdwg.mxu0
    %2787 = vrot.lane.b32.xlu0 %v2198, 56
    %v2788 = vpop.permute.xlu0 %2787
    %v2791 = vsel %vm383, %v2710, 0
    %2793 = vmatprep.subr.mxu0 0.0
    %2794 = vmatpush1.msra.mxu0 %v2788
    %2795 = vmatprep.subr.mxu0 0.0
    %2796 = vmatpush1.msra.mxu0 0.0
    %2797 = vmatprep.subr.mxu0 0.0
    %2798 = vmatpush1.msra.mxu0 0.0
    %2799 = vmatprep.subr.mxu0 0.0
    %2800 = vmatpush1.msra.mxu0 0.0
    %2801 = vmatprep.subr.mxu0 0.0
    %2802 = vmatpush1.msra.mxu0 0.0
    %2803 = vmatprep.subr.mxu0 0.0
    %2804 = vmatpush1.msra.mxu0 0.0
    %2805 = vmatprep.subr.mxu0 0.0
    %2806 = vmatpush1.msra.mxu0 0.0
    %2807 = vmatprep.subr.mxu0 0.0
    %2808 = vmatpush1.msra.mxu0 0.0
    %2809 = vmatprep.subr.mxu0 0.0
    %2810 = vmatpush1.msra.mxu0 0.0
    %2811 = vmatprep.subr.mxu0 0.0
    %2812 = vmatpush1.msra.mxu0 0.0
    %2813 = vmatprep.subr.mxu0 0.0
    %2814 = vmatpush1.msra.mxu0 0.0
    %2815 = vmatprep.subr.mxu0 0.0
    %2816 = vmatpush1.msra.mxu0 0.0
    %2817 = vmatprep.subr.mxu0 0.0
    %2818 = vmatpush1.msra.mxu0 0.0
    %2819 = vmatprep.subr.mxu0 0.0
    %2820 = vmatpush1.msra.mxu0 0.0
    %2821 = vmatprep.subr.mxu0 0.0
    %2822 = vmatpush1.msra.mxu0 0.0
    %2823 = vmatprep.subr.mxu0 0.0
    %2824 = vmatpush1.msra.mxu0 0.0
    %2825 = vmatprep.subr.mxu0 0.0
    %2826 = vmatpush1.msra.mxu0 0.0
    %2827 = vmatprep.subr.mxu0 0.0
    %2828 = vmatpush1.msra.mxu0 0.0
    %2829 = vmatprep.subr.mxu0 0.0
    %2830 = vmatpush1.msra.mxu0 0.0
    %2831 = vmatprep.subr.mxu0 0.0
    %2832 = vmatpush1.msra.mxu0 0.0
    %2833 = vmatprep.subr.mxu0 0.0
    %2834 = vmatpush1.msra.mxu0 0.0
    %2835 = vmatprep.subr.mxu0 0.0
    %2836 = vmatpush1.msra.mxu0 0.0
    %2837 = vmatprep.subr.mxu0 0.0
    %2838 = vmatpush1.msra.mxu0 0.0
    %2839 = vmatprep.subr.mxu0 0.0
    %2840 = vmatpush1.msra.mxu0 0.0
    %2841 = vmatprep.subr.mxu0 0.0
    %2842 = vmatpush1.msra.mxu0 0.0
    %2843 = vmatprep.subr.mxu0 0.0
    %2844 = vmatpush1.msra.mxu0 0.0
    %2845 = vmatprep.subr.mxu0 0.0
    %2846 = vmatpush1.msra.mxu0 0.0
    %2847 = vmatprep.subr.mxu0 0.0
    %2848 = vmatpush1.msra.mxu0 0.0
    %2849 = vmatprep.subr.mxu0 0.0
    %2850 = vmatpush1.msra.mxu0 0.0
    %2851 = vmatprep.subr.mxu0 0.0
    %2852 = vmatpush1.msra.mxu0 0.0
    %2853 = vmatprep.subr.mxu0 0.0
    %2854 = vmatpush1.msra.mxu0 0.0
    %2855 = vmatprep.subr.mxu0 0.0
    %2856 = vmatpush1.msra.mxu0 0.0
    %2857 = vmatprep.mubr.f32.mxu0 0.0
    %2858 = vmatmul.mubr.f32.gmra.mrb[0].mxu0 %v2791
    %v2859 = vpop.f32.mrb[0].mxu0
    %v2860 = vadd.f32 0.0, %v2859
    %v2861 = vpop.f32.mrb[0].mxu0
    %2862 = vdwg.mxu0
    %2863 = vrot.lane.b32.xlu0 %v2201, 112
    %v2864 = vpop.permute.xlu0 %2863
    %2865 = vrot.lane.b32.xlu0 %v2193, 80
    %v2866 = vpop.permute.xlu0 %2865
    %v2867 = vsel %vm383, %v2864, 0
    %v2869 = vsel %vm383, %v2866, 0
    %2871 = vmatprep.subr.mxu0 0.0
    %2872 = vmatpush1.xpose.msra.mxu0 %v2869
    %2873 = vmatprep.subr.mxu0 0.0
    %2874 = vmatpush1.xpose.msra.mxu0 0.0
    %2875 = vmatprep.subr.mxu0 0.0
    %2876 = vmatpush1.xpose.msra.mxu0 0.0
    %2877 = vmatprep.subr.mxu0 0.0
    %2878 = vmatpush1.xpose.msra.mxu0 0.0
    %2879 = vmatprep.subr.mxu0 0.0
    %2880 = vmatpush1.xpose.msra.mxu0 0.0
    %2881 = vmatprep.subr.mxu0 0.0
    %2882 = vmatpush1.xpose.msra.mxu0 0.0
    %2883 = vmatprep.subr.mxu0 0.0
    %2884 = vmatpush1.xpose.msra.mxu0 0.0
    %2885 = vmatprep.subr.mxu0 0.0
    %2886 = vmatpush1.xpose.msra.mxu0 0.0
    %2887 = vmatprep.subr.mxu0 0.0
    %2888 = vmatpush1.xpose.msra.mxu0 0.0
    %2889 = vmatprep.subr.mxu0 0.0
    %2890 = vmatpush1.xpose.msra.mxu0 0.0
    %2891 = vmatprep.subr.mxu0 0.0
    %2892 = vmatpush1.xpose.msra.mxu0 0.0
    %2893 = vmatprep.subr.mxu0 0.0
    %2894 = vmatpush1.xpose.msra.mxu0 0.0
    %2895 = vmatprep.subr.mxu0 0.0
    %2896 = vmatpush1.xpose.msra.mxu0 0.0
    %2897 = vmatprep.subr.mxu0 0.0
    %2898 = vmatpush1.xpose.msra.mxu0 0.0
    %2899 = vmatprep.subr.mxu0 0.0
    %2900 = vmatpush1.xpose.msra.mxu0 0.0
    %2901 = vmatprep.subr.mxu0 0.0
    %2902 = vmatpush1.xpose.msra.mxu0 0.0
    %2903 = vmatprep.subr.mxu0 0.0
    %2904 = vmatpush1.xpose.msra.mxu0 0.0
    %2905 = vmatprep.subr.mxu0 0.0
    %2906 = vmatpush1.xpose.msra.mxu0 0.0
    %2907 = vmatprep.subr.mxu0 0.0
    %2908 = vmatpush1.xpose.msra.mxu0 0.0
    %2909 = vmatprep.subr.mxu0 0.0
    %2910 = vmatpush1.xpose.msra.mxu0 0.0
    %2911 = vmatprep.subr.mxu0 0.0
    %2912 = vmatpush1.xpose.msra.mxu0 0.0
    %2913 = vmatprep.subr.mxu0 0.0
    %2914 = vmatpush1.xpose.msra.mxu0 0.0
    %2915 = vmatprep.subr.mxu0 0.0
    %2916 = vmatpush1.xpose.msra.mxu0 0.0
    %2917 = vmatprep.subr.mxu0 0.0
    %2918 = vmatpush1.xpose.msra.mxu0 0.0
    %2919 = vmatprep.subr.mxu0 0.0
    %2920 = vmatpush1.xpose.msra.mxu0 0.0
    %2921 = vmatprep.subr.mxu0 0.0
    %2922 = vmatpush1.xpose.msra.mxu0 0.0
    %2923 = vmatprep.subr.mxu0 0.0
    %2924 = vmatpush1.xpose.msra.mxu0 0.0
    %2925 = vmatprep.subr.mxu0 0.0
    %2926 = vmatpush1.xpose.msra.mxu0 0.0
    %2927 = vmatprep.subr.mxu0 0.0
    %2928 = vmatpush1.xpose.msra.mxu0 0.0
    %2929 = vmatprep.subr.mxu0 0.0
    %2930 = vmatpush1.xpose.msra.mxu0 0.0
    %2931 = vmatprep.subr.mxu0 0.0
    %2932 = vmatpush1.xpose.msra.mxu0 0.0
    %2933 = vmatprep.subr.mxu0 0.0
    %2934 = vmatpush1.xpose.msra.mxu0 0.0
    %2935 = vmatprep.mubr.f32.mxu0 0.0
    %2936 = vmatmul.mubr.f32.gmra.mrb[0].mxu0 %v2867
    %v2937 = vpop.f32.mrb[0].mxu0
    %v2938 = vadd.f32 0.0, %v2937
    %v2939 = vpop.f32.mrb[0].mxu0
    %2940 = vdwg.mxu0
    %2941 = vrot.lane.b32.xlu0 %v2202, 112
    %v2942 = vpop.permute.xlu0 %2941
    %2943 = vrot.lane.b32.xlu0 %v2198, 80
    %v2944 = vpop.permute.xlu0 %2943
    %v2945 = vsel %vm383, %v2942, 0
    %v2947 = vsel %vm383, %v2944, 0
    %2949 = vmatprep.subr.mxu0 0.0
    %2950 = vmatpush1.xpose.msra.mxu0 %v2947
    %2951 = vmatprep.subr.mxu0 0.0
    %2952 = vmatpush1.xpose.msra.mxu0 0.0
    %2953 = vmatprep.subr.mxu0 0.0
    %2954 = vmatpush1.xpose.msra.mxu0 0.0
    %2955 = vmatprep.subr.mxu0 0.0
    %2956 = vmatpush1.xpose.msra.mxu0 0.0
    %2957 = vmatprep.subr.mxu0 0.0
    %2958 = vmatpush1.xpose.msra.mxu0 0.0
    %2959 = vmatprep.subr.mxu0 0.0
    %2960 = vmatpush1.xpose.msra.mxu0 0.0
    %2961 = vmatprep.subr.mxu0 0.0
    %2962 = vmatpush1.xpose.msra.mxu0 0.0
    %2963 = vmatprep.subr.mxu0 0.0
    %2964 = vmatpush1.xpose.msra.mxu0 0.0
    %2965 = vmatprep.subr.mxu0 0.0
    %2966 = vmatpush1.xpose.msra.mxu0 0.0
    %2967 = vmatprep.subr.mxu0 0.0
    %2968 = vmatpush1.xpose.msra.mxu0 0.0
    %2969 = vmatprep.subr.mxu0 0.0
    %2970 = vmatpush1.xpose.msra.mxu0 0.0
    %2971 = vmatprep.subr.mxu0 0.0
    %2972 = vmatpush1.xpose.msra.mxu0 0.0
    %2973 = vmatprep.subr.mxu0 0.0
    %2974 = vmatpush1.xpose.msra.mxu0 0.0
    %2975 = vmatprep.subr.mxu0 0.0
    %2976 = vmatpush1.xpose.msra.mxu0 0.0
    %2977 = vmatprep.subr.mxu0 0.0
    %2978 = vmatpush1.xpose.msra.mxu0 0.0
    %2979 = vmatprep.subr.mxu0 0.0
    %2980 = vmatpush1.xpose.msra.mxu0 0.0
    %2981 = vmatprep.subr.mxu0 0.0
    %2982 = vmatpush1.xpose.msra.mxu0 0.0
    %2983 = vmatprep.subr.mxu0 0.0
    %2984 = vmatpush1.xpose.msra.mxu0 0.0
    %2985 = vmatprep.subr.mxu0 0.0
    %2986 = vmatpush1.xpose.msra.mxu0 0.0
    %2987 = vmatprep.subr.mxu0 0.0
    %2988 = vmatpush1.xpose.msra.mxu0 0.0
    %2989 = vmatprep.subr.mxu0 0.0
    %2990 = vmatpush1.xpose.msra.mxu0 0.0
    %2991 = vmatprep.subr.mxu0 0.0
    %2992 = vmatpush1.xpose.msra.mxu0 0.0
    %2993 = vmatprep.subr.mxu0 0.0
    %2994 = vmatpush1.xpose.msra.mxu0 0.0
    %2995 = vmatprep.subr.mxu0 0.0
    %2996 = vmatpush1.xpose.msra.mxu0 0.0
    %2997 = vmatprep.subr.mxu0 0.0
    %2998 = vmatpush1.xpose.msra.mxu0 0.0
    %2999 = vmatprep.subr.mxu0 0.0
    %3000 = vmatpush1.xpose.msra.mxu0 0.0
    %3001 = vmatprep.subr.mxu0 0.0
    %3002 = vmatpush1.xpose.msra.mxu0 0.0
    %3003 = vmatprep.subr.mxu0 0.0
    %3004 = vmatpush1.xpose.msra.mxu0 0.0
    %3005 = vmatprep.subr.mxu0 0.0
    %3006 = vmatpush1.xpose.msra.mxu0 0.0
    %3007 = vmatprep.subr.mxu0 0.0
    %3008 = vmatpush1.xpose.msra.mxu0 0.0
    %3009 = vmatprep.subr.mxu0 0.0
    %3010 = vmatpush1.xpose.msra.mxu0 0.0
    %3011 = vmatprep.subr.mxu0 0.0
    %3012 = vmatpush1.xpose.msra.mxu0 0.0
    %3013 = vmatprep.mubr.f32.mxu0 0.0
    %3014 = vmatmul.mubr.f32.gmra.mrb[0].mxu0 %v2945
    %v3015 = vpop.f32.mrb[0].mxu0
    %v3016 = vadd.f32 0.0, %v3015
    %v3017 = vpop.f32.mrb[0].mxu0
    %3018 = vdwg.mxu0
    %v3019 = vsel %vm383, %v2938, -inf
    %3020 = vmax.xlane.f32.xlu0 %v3019
    %v3021 = vpop.xlane.xlu0 %3020
    %v3022 = vsel %vm383, %v3016, -inf
    %3023 = vmax.xlane.f32.xlu0 %v3022
    %v3024 = vpop.xlane.xlu0 %3023
    %v3025 = vsub.f32 %v2938, %v3021
    %v3026 = vsub.f32 %v3016, %v3024
    %v3027 = vmul.f32 %v3025, 1.442695
    %v3028 = vpow.pop %v3027
    %v3029 = vmul.f32 %v3026, 1.442695
    %v3030 = vpow.pop %v3029
    %v3031 = vsel %vm383, %v3028, 0.0
    %3032 = vadd.xlane.f32.xlu0 %v3031
    %v3033 = vpop.xlane.xlu0 %3032
    %v3034 = vsel %vm383, %v3030, 0.0
    %3035 = vadd.xlane.f32.xlu0 %v3034
    %v3036 = vpop.xlane.xlu0 %3035
    %v3037 = vrcp.pop %v3033
    %v3038 = vrcp.pop %v3036
    %v3039 = vmul.f32 %v3028, %v3037
    %v3040 = vmul.f32 %v3030, %v3038
    %3041 = vrot.lane.b32.xlu0 %v2193, 48
    %v3042 = vpop.permute.xlu0 %3041
    %v3045 = vsel %vm383, %v3039, 0
    %3047 = vmatprep.subr.mxu0 0.0
    %3048 = vmatpush1.msra.mxu0 %v3042
    %3049 = vmatprep.subr.mxu0 0.0
    %3050 = vmatpush1.msra.mxu0 0.0
    %3051 = vmatprep.subr.mxu0 0.0
    %3052 = vmatpush1.msra.mxu0 0.0
    %3053 = vmatprep.subr.mxu0 0.0
    %3054 = vmatpush1.msra.mxu0 0.0
    %3055 = vmatprep.subr.mxu0 0.0
    %3056 = vmatpush1.msra.mxu0 0.0
    %3057 = vmatprep.subr.mxu0 0.0
    %3058 = vmatpush1.msra.mxu0 0.0
    %3059 = vmatprep.subr.mxu0 0.0
    %3060 = vmatpush1.msra.mxu0 0.0
    %3061 = vmatprep.subr.mxu0 0.0
    %3062 = vmatpush1.msra.mxu0 0.0
    %3063 = vmatprep.subr.mxu0 0.0
    %3064 = vmatpush1.msra.mxu0 0.0
    %3065 = vmatprep.subr.mxu0 0.0
    %3066 = vmatpush1.msra.mxu0 0.0
    %3067 = vmatprep.subr.mxu0 0.0
    %3068 = vmatpush1.msra.mxu0 0.0
    %3069 = vmatprep.subr.mxu0 0.0
    %3070 = vmatpush1.msra.mxu0 0.0
    %3071 = vmatprep.subr.mxu0 0.0
    %3072 = vmatpush1.msra.mxu0 0.0
    %3073 = vmatprep.subr.mxu0 0.0
    %3074 = vmatpush1.msra.mxu0 0.0
    %3075 = vmatprep.subr.mxu0 0.0
    %3076 = vmatpush1.msra.mxu0 0.0
    %3077 = vmatprep.subr.mxu0 0.0
    %3078 = vmatpush1.msra.mxu0 0.0
    %3079 = vmatprep.subr.mxu0 0.0
    %3080 = vmatpush1.msra.mxu0 0.0
    %3081 = vmatprep.subr.mxu0 0.0
    %3082 = vmatpush1.msra.mxu0 0.0
    %3083 = vmatprep.subr.mxu0 0.0
    %3084 = vmatpush1.msra.mxu0 0.0
    %3085 = vmatprep.subr.mxu0 0.0
    %3086 = vmatpush1.msra.mxu0 0.0
    %3087 = vmatprep.subr.mxu0 0.0
    %3088 = vmatpush1.msra.mxu0 0.0
    %3089 = vmatprep.subr.mxu0 0.0
    %3090 = vmatpush1.msra.mxu0 0.0
    %3091 = vmatprep.subr.mxu0 0.0
    %3092 = vmatpush1.msra.mxu0 0.0
    %3093 = vmatprep.subr.mxu0 0.0
    %3094 = vmatpush1.msra.mxu0 0.0
    %3095 = vmatprep.subr.mxu0 0.0
    %3096 = vmatpush1.msra.mxu0 0.0
    %3097 = vmatprep.subr.mxu0 0.0
    %3098 = vmatpush1.msra.mxu0 0.0
    %3099 = vmatprep.subr.mxu0 0.0
    %3100 = vmatpush1.msra.mxu0 0.0
    %3101 = vmatprep.subr.mxu0 0.0
    %3102 = vmatpush1.msra.mxu0 0.0
    %3103 = vmatprep.subr.mxu0 0.0
    %3104 = vmatpush1.msra.mxu0 0.0
    %3105 = vmatprep.subr.mxu0 0.0
    %3106 = vmatpush1.msra.mxu0 0.0
    %3107 = vmatprep.subr.mxu0 0.0
    %3108 = vmatpush1.msra.mxu0 0.0
    %3109 = vmatprep.subr.mxu0 0.0
    %3110 = vmatpush1.msra.mxu0 0.0
    %3111 = vmatprep.mubr.f32.mxu0 0.0
    %3112 = vmatmul.mubr.f32.gmra.mrb[0].mxu0 %v3045
    %v3113 = vpop.f32.mrb[0].mxu0
    %v3114 = vadd.f32 0.0, %v3113
    %v3115 = vpop.f32.mrb[0].mxu0
    %3116 = vdwg.mxu0
    %3117 = vrot.lane.b32.xlu0 %v2198, 48
    %v3118 = vpop.permute.xlu0 %3117
    %v3121 = vsel %vm383, %v3040, 0
    %3123 = vmatprep.subr.mxu0 0.0
    %3124 = vmatpush1.msra.mxu0 %v3118
    %3125 = vmatprep.subr.mxu0 0.0
    %3126 = vmatpush1.msra.mxu0 0.0
    %3127 = vmatprep.subr.mxu0 0.0
    %3128 = vmatpush1.msra.mxu0 0.0
    %3129 = vmatprep.subr.mxu0 0.0
    %3130 = vmatpush1.msra.mxu0 0.0
    %3131 = vmatprep.subr.mxu0 0.0
    %3132 = vmatpush1.msra.mxu0 0.0
    %3133 = vmatprep.subr.mxu0 0.0
    %3134 = vmatpush1.msra.mxu0 0.0
    %3135 = vmatprep.subr.mxu0 0.0
    %3136 = vmatpush1.msra.mxu0 0.0
    %3137 = vmatprep.subr.mxu0 0.0
    %3138 = vmatpush1.msra.mxu0 0.0
    %3139 = vmatprep.subr.mxu0 0.0
    %3140 = vmatpush1.msra.mxu0 0.0
    %3141 = vmatprep.subr.mxu0 0.0
    %3142 = vmatpush1.msra.mxu0 0.0
    %3143 = vmatprep.subr.mxu0 0.0
    %3144 = vmatpush1.msra.mxu0 0.0
    %3145 = vmatprep.subr.mxu0 0.0
    %3146 = vmatpush1.msra.mxu0 0.0
    %3147 = vmatprep.subr.mxu0 0.0
    %3148 = vmatpush1.msra.mxu0 0.0
    %3149 = vmatprep.subr.mxu0 0.0
    %3150 = vmatpush1.msra.mxu0 0.0
    %3151 = vmatprep.subr.mxu0 0.0
    %3152 = vmatpush1.msra.mxu0 0.0
    %3153 = vmatprep.subr.mxu0 0.0
    %3154 = vmatpush1.msra.mxu0 0.0
    %3155 = vmatprep.subr.mxu0 0.0
    %3156 = vmatpush1.msra.mxu0 0.0
    %3157 = vmatprep.subr.mxu0 0.0
    %3158 = vmatpush1.msra.mxu0 0.0
    %3159 = vmatprep.subr.mxu0 0.0
    %3160 = vmatpush1.msra.mxu0 0.0
    %3161 = vmatprep.subr.mxu0 0.0
    %3162 = vmatpush1.msra.mxu0 0.0
    %3163 = vmatprep.subr.mxu0 0.0
    %3164 = vmatpush1.msra.mxu0 0.0
    %3165 = vmatprep.subr.mxu0 0.0
    %3166 = vmatpush1.msra.mxu0 0.0
    %3167 = vmatprep.subr.mxu0 0.0
    %3168 = vmatpush1.msra.mxu0 0.0
    %3169 = vmatprep.subr.mxu0 0.0
    %3170 = vmatpush1.msra.mxu0 0.0
    %3171 = vmatprep.subr.mxu0 0.0
    %3172 = vmatpush1.msra.mxu0 0.0
    %3173 = vmatprep.subr.mxu0 0.0
    %3174 = vmatpush1.msra.mxu0 0.0
    %3175 = vmatprep.subr.mxu0 0.0
    %3176 = vmatpush1.msra.mxu0 0.0
    %3177 = vmatprep.subr.mxu0 0.0
    %3178 = vmatpush1.msra.mxu0 0.0
    %3179 = vmatprep.subr.mxu0 0.0
    %3180 = vmatpush1.msra.mxu0 0.0
    %3181 = vmatprep.subr.mxu0 0.0
    %3182 = vmatpush1.msra.mxu0 0.0
    %3183 = vmatprep.subr.mxu0 0.0
    %3184 = vmatpush1.msra.mxu0 0.0
    %3185 = vmatprep.subr.mxu0 0.0
    %3186 = vmatpush1.msra.mxu0 0.0
    %3187 = vmatprep.mubr.f32.mxu0 0.0
    %3188 = vmatmul.mubr.f32.gmra.mrb[0].mxu0 %v3121
    %v3189 = vpop.f32.mrb[0].mxu0
    %v3190 = vadd.f32 0.0, %v3189
    %v3191 = vpop.f32.mrb[0].mxu0
    %3192 = vdwg.mxu0
    %3193 = vrot.lane.b32.xlu0 %v2201, 104
    %v3194 = vpop.permute.xlu0 %3193
    %3195 = vrot.lane.b32.xlu0 %v2193, 72
    %v3196 = vpop.permute.xlu0 %3195
    %v3197 = vsel %vm383, %v3194, 0
    %v3199 = vsel %vm383, %v3196, 0
    %3201 = vmatprep.subr.mxu0 0.0
    %3202 = vmatpush1.xpose.msra.mxu0 %v3199
    %3203 = vmatprep.subr.mxu0 0.0
    %3204 = vmatpush1.xpose.msra.mxu0 0.0
    %3205 = vmatprep.subr.mxu0 0.0
    %3206 = vmatpush1.xpose.msra.mxu0 0.0
    %3207 = vmatprep.subr.mxu0 0.0
    %3208 = vmatpush1.xpose.msra.mxu0 0.0
    %3209 = vmatprep.subr.mxu0 0.0
    %3210 = vmatpush1.xpose.msra.mxu0 0.0
    %3211 = vmatprep.subr.mxu0 0.0
    %3212 = vmatpush1.xpose.msra.mxu0 0.0
    %3213 = vmatprep.subr.mxu0 0.0
    %3214 = vmatpush1.xpose.msra.mxu0 0.0
    %3215 = vmatprep.subr.mxu0 0.0
    %3216 = vmatpush1.xpose.msra.mxu0 0.0
    %3217 = vmatprep.subr.mxu0 0.0
    %3218 = vmatpush1.xpose.msra.mxu0 0.0
    %3219 = vmatprep.subr.mxu0 0.0
    %3220 = vmatpush1.xpose.msra.mxu0 0.0
    %3221 = vmatprep.subr.mxu0 0.0
    %3222 = vmatpush1.xpose.msra.mxu0 0.0
    %3223 = vmatprep.subr.mxu0 0.0
    %3224 = vmatpush1.xpose.msra.mxu0 0.0
    %3225 = vmatprep.subr.mxu0 0.0
    %3226 = vmatpush1.xpose.msra.mxu0 0.0
    %3227 = vmatprep.subr.mxu0 0.0
    %3228 = vmatpush1.xpose.msra.mxu0 0.0
    %3229 = vmatprep.subr.mxu0 0.0
    %3230 = vmatpush1.xpose.msra.mxu0 0.0
    %3231 = vmatprep.subr.mxu0 0.0
    %3232 = vmatpush1.xpose.msra.mxu0 0.0
    %3233 = vmatprep.subr.mxu0 0.0
    %3234 = vmatpush1.xpose.msra.mxu0 0.0
    %3235 = vmatprep.subr.mxu0 0.0
    %3236 = vmatpush1.xpose.msra.mxu0 0.0
    %3237 = vmatprep.subr.mxu0 0.0
    %3238 = vmatpush1.xpose.msra.mxu0 0.0
    %3239 = vmatprep.subr.mxu0 0.0
    %3240 = vmatpush1.xpose.msra.mxu0 0.0
    %3241 = vmatprep.subr.mxu0 0.0
    %3242 = vmatpush1.xpose.msra.mxu0 0.0
    %3243 = vmatprep.subr.mxu0 0.0
    %3244 = vmatpush1.xpose.msra.mxu0 0.0
    %3245 = vmatprep.subr.mxu0 0.0
    %3246 = vmatpush1.xpose.msra.mxu0 0.0
    %3247 = vmatprep.subr.mxu0 0.0
    %3248 = vmatpush1.xpose.msra.mxu0 0.0
    %3249 = vmatprep.subr.mxu0 0.0
    %3250 = vmatpush1.xpose.msra.mxu0 0.0
    %3251 = vmatprep.subr.mxu0 0.0
    %3252 = vmatpush1.xpose.msra.mxu0 0.0
    %3253 = vmatprep.subr.mxu0 0.0
    %3254 = vmatpush1.xpose.msra.mxu0 0.0
    %3255 = vmatprep.subr.mxu0 0.0
    %3256 = vmatpush1.xpose.msra.mxu0 0.0
    %3257 = vmatprep.subr.mxu0 0.0
    %3258 = vmatpush1.xpose.msra.mxu0 0.0
    %3259 = vmatprep.subr.mxu0 0.0
    %3260 = vmatpush1.xpose.msra.mxu0 0.0
    %3261 = vmatprep.subr.mxu0 0.0
    %3262 = vmatpush1.xpose.msra.mxu0 0.0
    %3263 = vmatprep.subr.mxu0 0.0
    %3264 = vmatpush1.xpose.msra.mxu0 0.0
    %3265 = vmatprep.mubr.f32.mxu0 0.0
    %3266 = vmatmul.mubr.f32.gmra.mrb[0].mxu0 %v3197
    %v3267 = vpop.f32.mrb[0].mxu0
    %v3268 = vadd.f32 0.0, %v3267
    %v3269 = vpop.f32.mrb[0].mxu0
    %3270 = vdwg.mxu0
    %3271 = vrot.lane.b32.xlu0 %v2202, 104
    %v3272 = vpop.permute.xlu0 %3271
    %3273 = vrot.lane.b32.xlu0 %v2198, 72
    %v3274 = vpop.permute.xlu0 %3273
    %v3275 = vsel %vm383, %v3272, 0
    %v3277 = vsel %vm383, %v3274, 0
    %3279 = vmatprep.subr.mxu0 0.0
    %3280 = vmatpush1.xpose.msra.mxu0 %v3277
    %3281 = vmatprep.subr.mxu0 0.0
    %3282 = vmatpush1.xpose.msra.mxu0 0.0
    %3283 = vmatprep.subr.mxu0 0.0
    %3284 = vmatpush1.xpose.msra.mxu0 0.0
    %3285 = vmatprep.subr.mxu0 0.0
    %3286 = vmatpush1.xpose.msra.mxu0 0.0
    %3287 = vmatprep.subr.mxu0 0.0
    %3288 = vmatpush1.xpose.msra.mxu0 0.0
    %3289 = vmatprep.subr.mxu0 0.0
    %3290 = vmatpush1.xpose.msra.mxu0 0.0
    %3291 = vmatprep.subr.mxu0 0.0
    %3292 = vmatpush1.xpose.msra.mxu0 0.0
    %3293 = vmatprep.subr.mxu0 0.0
    %3294 = vmatpush1.xpose.msra.mxu0 0.0
    %3295 = vmatprep.subr.mxu0 0.0
    %3296 = vmatpush1.xpose.msra.mxu0 0.0
    %3297 = vmatprep.subr.mxu0 0.0
    %3298 = vmatpush1.xpose.msra.mxu0 0.0
    %3299 = vmatprep.subr.mxu0 0.0
    %3300 = vmatpush1.xpose.msra.mxu0 0.0
    %3301 = vmatprep.subr.mxu0 0.0
    %3302 = vmatpush1.xpose.msra.mxu0 0.0
    %3303 = vmatprep.subr.mxu0 0.0
    %3304 = vmatpush1.xpose.msra.mxu0 0.0
    %3305 = vmatprep.subr.mxu0 0.0
    %3306 = vmatpush1.xpose.msra.mxu0 0.0
    %3307 = vmatprep.subr.mxu0 0.0
    %3308 = vmatpush1.xpose.msra.mxu0 0.0
    %3309 = vmatprep.subr.mxu0 0.0
    %3310 = vmatpush1.xpose.msra.mxu0 0.0
    %3311 = vmatprep.subr.mxu0 0.0
    %3312 = vmatpush1.xpose.msra.mxu0 0.0
    %3313 = vmatprep.subr.mxu0 0.0
    %3314 = vmatpush1.xpose.msra.mxu0 0.0
    %3315 = vmatprep.subr.mxu0 0.0
    %3316 = vmatpush1.xpose.msra.mxu0 0.0
    %3317 = vmatprep.subr.mxu0 0.0
    %3318 = vmatpush1.xpose.msra.mxu0 0.0
    %3319 = vmatprep.subr.mxu0 0.0
    %3320 = vmatpush1.xpose.msra.mxu0 0.0
    %3321 = vmatprep.subr.mxu0 0.0
    %3322 = vmatpush1.xpose.msra.mxu0 0.0
    %3323 = vmatprep.subr.mxu0 0.0
    %3324 = vmatpush1.xpose.msra.mxu0 0.0
    %3325 = vmatprep.subr.mxu0 0.0
    %3326 = vmatpush1.xpose.msra.mxu0 0.0
    %3327 = vmatprep.subr.mxu0 0.0
    %3328 = vmatpush1.xpose.msra.mxu0 0.0
    %3329 = vmatprep.subr.mxu0 0.0
    %3330 = vmatpush1.xpose.msra.mxu0 0.0
    %3331 = vmatprep.subr.mxu0 0.0
    %3332 = vmatpush1.xpose.msra.mxu0 0.0
    %3333 = vmatprep.subr.mxu0 0.0
    %3334 = vmatpush1.xpose.msra.mxu0 0.0
    %3335 = vmatprep.subr.mxu0 0.0
    %3336 = vmatpush1.xpose.msra.mxu0 0.0
    %3337 = vmatprep.subr.mxu0 0.0
    %3338 = vmatpush1.xpose.msra.mxu0 0.0
    %3339 = vmatprep.subr.mxu0 0.0
    %3340 = vmatpush1.xpose.msra.mxu0 0.0
    %3341 = vmatprep.subr.mxu0 0.0
    %3342 = vmatpush1.xpose.msra.mxu0 0.0
    %3343 = vmatprep.mubr.f32.mxu0 0.0
    %3344 = vmatmul.mubr.f32.gmra.mrb[0].mxu0 %v3275
    %v3345 = vpop.f32.mrb[0].mxu0
    %v3346 = vadd.f32 0.0, %v3345
    %v3347 = vpop.f32.mrb[0].mxu0
    %3348 = vdwg.mxu0
    %v3349 = vsel %vm383, %v3268, -inf
    %3350 = vmax.xlane.f32.xlu0 %v3349
    %v3351 = vpop.xlane.xlu0 %3350
    %v3352 = vsel %vm383, %v3346, -inf
    %3353 = vmax.xlane.f32.xlu0 %v3352
    %v3354 = vpop.xlane.xlu0 %3353
    %v3355 = vsub.f32 %v3268, %v3351
    %v3356 = vsub.f32 %v3346, %v3354
    %v3357 = vmul.f32 %v3355, 1.442695
    %v3358 = vpow.pop %v3357
    %v3359 = vmul.f32 %v3356, 1.442695
    %v3360 = vpow.pop %v3359
    %v3361 = vsel %vm383, %v3358, 0.0
    %3362 = vadd.xlane.f32.xlu0 %v3361
    %v3363 = vpop.xlane.xlu0 %3362
    %v3364 = vsel %vm383, %v3360, 0.0
    %3365 = vadd.xlane.f32.xlu0 %v3364
    %v3366 = vpop.xlane.xlu0 %3365
    %v3367 = vrcp.pop %v3363
    %v3368 = vrcp.pop %v3366
    %v3369 = vmul.f32 %v3358, %v3367
    %v3370 = vmul.f32 %v3360, %v3368
    %3371 = vrot.lane.b32.xlu0 %v2193, 40
    %v3372 = vpop.permute.xlu0 %3371
    %v3375 = vsel %vm383, %v3369, 0
    %3377 = vmatprep.subr.mxu0 0.0
    %3378 = vmatpush1.msra.mxu0 %v3372
    %3379 = vmatprep.subr.mxu0 0.0
    %3380 = vmatpush1.msra.mxu0 0.0
    %3381 = vmatprep.subr.mxu0 0.0
    %3382 = vmatpush1.msra.mxu0 0.0
    %3383 = vmatprep.subr.mxu0 0.0
    %3384 = vmatpush1.msra.mxu0 0.0
    %3385 = vmatprep.subr.mxu0 0.0
    %3386 = vmatpush1.msra.mxu0 0.0
    %3387 = vmatprep.subr.mxu0 0.0
    %3388 = vmatpush1.msra.mxu0 0.0
    %3389 = vmatprep.subr.mxu0 0.0
    %3390 = vmatpush1.msra.mxu0 0.0
    %3391 = vmatprep.subr.mxu0 0.0
    %3392 = vmatpush1.msra.mxu0 0.0
    %3393 = vmatprep.subr.mxu0 0.0
    %3394 = vmatpush1.msra.mxu0 0.0
    %3395 = vmatprep.subr.mxu0 0.0
    %3396 = vmatpush1.msra.mxu0 0.0
    %3397 = vmatprep.subr.mxu0 0.0
    %3398 = vmatpush1.msra.mxu0 0.0
    %3399 = vmatprep.subr.mxu0 0.0
    %3400 = vmatpush1.msra.mxu0 0.0
    %3401 = vmatprep.subr.mxu0 0.0
    %3402 = vmatpush1.msra.mxu0 0.0
    %3403 = vmatprep.subr.mxu0 0.0
    %3404 = vmatpush1.msra.mxu0 0.0
    %3405 = vmatprep.subr.mxu0 0.0
    %3406 = vmatpush1.msra.mxu0 0.0
    %3407 = vmatprep.subr.mxu0 0.0
    %3408 = vmatpush1.msra.mxu0 0.0
    %3409 = vmatprep.subr.mxu0 0.0
    %3410 = vmatpush1.msra.mxu0 0.0
    %3411 = vmatprep.subr.mxu0 0.0
    %3412 = vmatpush1.msra.mxu0 0.0
    %3413 = vmatprep.subr.mxu0 0.0
    %3414 = vmatpush1.msra.mxu0 0.0
    %3415 = vmatprep.subr.mxu0 0.0
    %3416 = vmatpush1.msra.mxu0 0.0
    %3417 = vmatprep.subr.mxu0 0.0
    %3418 = vmatpush1.msra.mxu0 0.0
    %3419 = vmatprep.subr.mxu0 0.0
    %3420 = vmatpush1.msra.mxu0 0.0
    %3421 = vmatprep.subr.mxu0 0.0
    %3422 = vmatpush1.msra.mxu0 0.0
    %3423 = vmatprep.subr.mxu0 0.0
    %3424 = vmatpush1.msra.mxu0 0.0
    %3425 = vmatprep.subr.mxu0 0.0
    %3426 = vmatpush1.msra.mxu0 0.0
    %3427 = vmatprep.subr.mxu0 0.0
    %3428 = vmatpush1.msra.mxu0 0.0
    %3429 = vmatprep.subr.mxu0 0.0
    %3430 = vmatpush1.msra.mxu0 0.0
    %3431 = vmatprep.subr.mxu0 0.0
    %3432 = vmatpush1.msra.mxu0 0.0
    %3433 = vmatprep.subr.mxu0 0.0
    %3434 = vmatpush1.msra.mxu0 0.0
    %3435 = vmatprep.subr.mxu0 0.0
    %3436 = vmatpush1.msra.mxu0 0.0
    %3437 = vmatprep.subr.mxu0 0.0
    %3438 = vmatpush1.msra.mxu0 0.0
    %3439 = vmatprep.subr.mxu0 0.0
    %3440 = vmatpush1.msra.mxu0 0.0
    %3441 = vmatprep.mubr.f32.mxu0 0.0
    %3442 = vmatmul.mubr.f32.gmra.mrb[0].mxu0 %v3375
    %v3443 = vpop.f32.mrb[0].mxu0
    %v3444 = vadd.f32 0.0, %v3443
    %v3445 = vpop.f32.mrb[0].mxu0
    %3446 = vdwg.mxu0
    %3447 = vrot.lane.b32.xlu0 %v2198, 40
    %v3448 = vpop.permute.xlu0 %3447
    %v3451 = vsel %vm383, %v3370, 0
    %3453 = vmatprep.subr.mxu0 0.0
    %3454 = vmatpush1.msra.mxu0 %v3448
    %3455 = vmatprep.subr.mxu0 0.0
    %3456 = vmatpush1.msra.mxu0 0.0
    %3457 = vmatprep.subr.mxu0 0.0
    %3458 = vmatpush1.msra.mxu0 0.0
    %3459 = vmatprep.subr.mxu0 0.0
    %3460 = vmatpush1.msra.mxu0 0.0
    %3461 = vmatprep.subr.mxu0 0.0
    %3462 = vmatpush1.msra.mxu0 0.0
    %3463 = vmatprep.subr.mxu0 0.0
    %3464 = vmatpush1.msra.mxu0 0.0
    %3465 = vmatprep.subr.mxu0 0.0
    %3466 = vmatpush1.msra.mxu0 0.0
    %3467 = vmatprep.subr.mxu0 0.0
    %3468 = vmatpush1.msra.mxu0 0.0
    %3469 = vmatprep.subr.mxu0 0.0
    %3470 = vmatpush1.msra.mxu0 0.0
    %3471 = vmatprep.subr.mxu0 0.0
    %3472 = vmatpush1.msra.mxu0 0.0
    %3473 = vmatprep.subr.mxu0 0.0
    %3474 = vmatpush1.msra.mxu0 0.0
    %3475 = vmatprep.subr.mxu0 0.0
    %3476 = vmatpush1.msra.mxu0 0.0
    %3477 = vmatprep.subr.mxu0 0.0
    %3478 = vmatpush1.msra.mxu0 0.0
    %3479 = vmatprep.subr.mxu0 0.0
    %3480 = vmatpush1.msra.mxu0 0.0
    %3481 = vmatprep.subr.mxu0 0.0
    %3482 = vmatpush1.msra.mxu0 0.0
    %3483 = vmatprep.subr.mxu0 0.0
    %3484 = vmatpush1.msra.mxu0 0.0
    %3485 = vmatprep.subr.mxu0 0.0
    %3486 = vmatpush1.msra.mxu0 0.0
    %3487 = vmatprep.subr.mxu0 0.0
    %3488 = vmatpush1.msra.mxu0 0.0
    %3489 = vmatprep.subr.mxu0 0.0
    %3490 = vmatpush1.msra.mxu0 0.0
    %3491 = vmatprep.subr.mxu0 0.0
    %3492 = vmatpush1.msra.mxu0 0.0
    %3493 = vmatprep.subr.mxu0 0.0
    %3494 = vmatpush1.msra.mxu0 0.0
    %3495 = vmatprep.subr.mxu0 0.0
    %3496 = vmatpush1.msra.mxu0 0.0
    %3497 = vmatprep.subr.mxu0 0.0
    %3498 = vmatpush1.msra.mxu0 0.0
    %3499 = vmatprep.subr.mxu0 0.0
    %3500 = vmatpush1.msra.mxu0 0.0
    %3501 = vmatprep.subr.mxu0 0.0
    %3502 = vmatpush1.msra.mxu0 0.0
    %3503 = vmatprep.subr.mxu0 0.0
    %3504 = vmatpush1.msra.mxu0 0.0
    %3505 = vmatprep.subr.mxu0 0.0
    %3506 = vmatpush1.msra.mxu0 0.0
    %3507 = vmatprep.subr.mxu0 0.0
    %3508 = vmatpush1.msra.mxu0 0.0
    %3509 = vmatprep.subr.mxu0 0.0
    %3510 = vmatpush1.msra.mxu0 0.0
    %3511 = vmatprep.subr.mxu0 0.0
    %3512 = vmatpush1.msra.mxu0 0.0
    %3513 = vmatprep.subr.mxu0 0.0
    %3514 = vmatpush1.msra.mxu0 0.0
    %3515 = vmatprep.subr.mxu0 0.0
    %3516 = vmatpush1.msra.mxu0 0.0
    %3517 = vmatprep.mubr.f32.mxu0 0.0
    %3518 = vmatmul.mubr.f32.gmra.mrb[0].mxu0 %v3451
    %v3519 = vpop.f32.mrb[0].mxu0
    %v3520 = vadd.f32 0.0, %v3519
    %v3521 = vpop.f32.mrb[0].mxu0
    %3522 = vdwg.mxu0
    %3525 = vrot.lane.b32.xlu0 %v2784, 8
    %v3526 = vpop.permute.xlu0 %3525
    %3527 = vrot.lane.b32.xlu0 %v2860, 8
    %v3528 = vpop.permute.xlu0 %3527
    %3533 = vrot.lane.b32.xlu0 %v3114, 16
    %v3534 = vpop.permute.xlu0 %3533
    %3535 = vrot.lane.b32.xlu0 %v3190, 16
    %v3536 = vpop.permute.xlu0 %3535
    %3541 = vrot.lane.b32.xlu0 %v3444, 24
    %v3542 = vpop.permute.xlu0 %3541
    %3543 = vrot.lane.b32.xlu0 %v3520, 24
    %v3544 = vpop.permute.xlu0 %3543
    %v3547 = vsel %vm383, %v2454, %v3526
    %v3548 = vsel %vm383, %v2530, %v3528
    %v3549 = vsel %vm1727, %v3547, %v3534
    %v3550 = vsel %vm1727, %v3548, %v3536
    %v3551 = vsel %vm1730, %v3549, %v3542
    %v3552 = vsel %vm1730, %v3550, %v3544
    %v3554 = vlaneseq
    %v3555 = vshrl.u32 %v3554, 7
    %v3556 = vsub.s32 0, %v3555
    %v3557 = vrot.slane %v2113, %v3556
    %v3560 = vsel %vm237, %v3551, 0
    %v3563 = vsel %vm237, %v3552, 0
    %3565 = vmatprep.subr.mxu0 0.0
    %3566 = vmatpush1.msra.mxu0 %v2108
    %3567 = vmatprep.subr.mxu0 0.0
    %3568 = vmatpush1.msra.mxu0 %v2109
    %3569 = vmatprep.subr.mxu0 0.0
    %3570 = vmatpush1.msra.mxu0 %v2110
    %3571 = vmatprep.subr.mxu0 0.0
    %3572 = vmatpush1.msra.mxu0 %v2111
    %3573 = vmatprep.subr.mxu0 0.0
    %3574 = vmatpush1.msra.mxu0 0.0
    %3575 = vmatprep.subr.mxu0 0.0
    %3576 = vmatpush1.msra.mxu0 0.0
    %3577 = vmatprep.subr.mxu0 0.0
    %3578 = vmatpush1.msra.mxu0 0.0
    %3579 = vmatprep.subr.mxu0 0.0
    %3580 = vmatpush1.msra.mxu0 0.0
    %3581 = vmatprep.subr.mxu0 0.0
    %3582 = vmatpush1.msra.mxu0 0.0
    %3583 = vmatprep.subr.mxu0 0.0
    %3584 = vmatpush1.msra.mxu0 0.0
    %3585 = vmatprep.subr.mxu0 0.0
    %3586 = vmatpush1.msra.mxu0 0.0
    %3587 = vmatprep.subr.mxu0 0.0
    %3588 = vmatpush1.msra.mxu0 0.0
    %3589 = vmatprep.subr.mxu0 0.0
    %3590 = vmatpush1.msra.mxu0 0.0
    %3591 = vmatprep.subr.mxu0 0.0
    %3592 = vmatpush1.msra.mxu0 0.0
    %3593 = vmatprep.subr.mxu0 0.0
    %3594 = vmatpush1.msra.mxu0 0.0
    %3595 = vmatprep.subr.mxu0 0.0
    %3596 = vmatpush1.msra.mxu0 0.0
    %3597 = vmatprep.subr.mxu0 0.0
    %3598 = vmatpush1.msra.mxu0 0.0
    %3599 = vmatprep.subr.mxu0 0.0
    %3600 = vmatpush1.msra.mxu0 0.0
    %3601 = vmatprep.subr.mxu0 0.0
    %3602 = vmatpush1.msra.mxu0 0.0
    %3603 = vmatprep.subr.mxu0 0.0
    %3604 = vmatpush1.msra.mxu0 0.0
    %3605 = vmatprep.subr.mxu0 0.0
    %3606 = vmatpush1.msra.mxu0 0.0
    %3607 = vmatprep.subr.mxu0 0.0
    %3608 = vmatpush1.msra.mxu0 0.0
    %3609 = vmatprep.subr.mxu0 0.0
    %3610 = vmatpush1.msra.mxu0 0.0
    %3611 = vmatprep.subr.mxu0 0.0
    %3612 = vmatpush1.msra.mxu0 0.0
    %3613 = vmatprep.subr.mxu0 0.0
    %3614 = vmatpush1.msra.mxu0 0.0
    %3615 = vmatprep.subr.mxu0 0.0
    %3616 = vmatpush1.msra.mxu0 0.0
    %3617 = vmatprep.subr.mxu0 0.0
    %3618 = vmatpush1.msra.mxu0 0.0
    %3619 = vmatprep.subr.mxu0 0.0
    %3620 = vmatpush1.msra.mxu0 0.0
    %3621 = vmatprep.subr.mxu0 0.0
    %3622 = vmatpush1.msra.mxu0 0.0
    %3623 = vmatprep.subr.mxu0 0.0
    %3624 = vmatpush1.msra.mxu0 0.0
    %3625 = vmatprep.subr.mxu0 0.0
    %3626 = vmatpush1.msra.mxu0 0.0
    %3627 = vmatprep.subr.mxu0 0.0
    %3628 = vmatpush1.msra.mxu0 0.0
    %3629 = vmatprep.mubr.f32.mxu0 0.0
    %3630 = vmatmul.mubr.f32.gmra.mrb[0].mxu0 %v3560
    %v3631 = vpop.f32.mrb[0].mxu0
    %v3632 = vadd.f32 %v3557, %v3631
    %v3633 = vpop.f32.mrb[0].mxu0
    %3634 = vmatprep.mubr.f32.mxu0 0.0
    %3635 = vmatmul.mubr.f32.gmra.mrb[0].mxu0 %v3563
    %v3636 = vpop.f32.mrb[0].mxu0
    %v3637 = vadd.f32 %v3557, %v3636
    %v3638 = vpop.f32.mrb[0].mxu0
    %3639 = vdwg.mxu0
    %v3640 = vadd.f32 %v3632, %v2098
    %v3641 = vadd.f32 %v3637, %v2099
    %s3642 = scalar_lea.vmem [#allocation10], 1
    %v3643 = vld [vmem:[%s3642] sm:$0x1]
    %s3644 = scalar_lea.vmem [#allocation11], 1
    %v3645 = vld [vmem:[%s3644] sm:$0x1]
    %v3646 = vsel %vm237, %v3640, 0.0
    %3647 = vadd.xlane.f32.xlu0 %v3646
    %v3648 = vpop.xlane.xlu0 %3647
    %v3649 = vsel %vm237, %v3641, 0.0
    %3650 = vadd.xlane.f32.xlu0 %v3649
    %v3651 = vpop.xlane.xlu0 %3650
    %v3652 = vmul.f32 %v3648, %v244
    %v3653 = vmul.f32 %v3651, %v244
    %v3654 = vsub.f32 %v3640, %v3652
    %v3655 = vsub.f32 %v3641, %v3653
    %v3656 = vmul.f32 %v3654, %v3654
    %v3657 = vmul.f32 %v3655, %v3655
    %v3658 = vsel %vm237, %v3656, 0.0
    %3659 = vadd.xlane.f32.xlu0 %v3658
    %v3660 = vpop.xlane.xlu0 %3659
    %v3661 = vsel %vm237, %v3657, 0.0
    %3662 = vadd.xlane.f32.xlu0 %v3661
    %v3663 = vpop.xlane.xlu0 %3662
    %v3664 = vmul.f32 %v3660, %v244
    %v3665 = vmul.f32 %v3663, %v244
    %v3666 = vadd.f32 %v3664, 1e-05
    %v3667 = vadd.f32 %v3665, 1e-05
    %v3668 = vrsqrt.pop %v3666
    %v3669 = vrsqrt.pop %v3667
    %v3670 = vmul.f32 %v3654, %v3668
    %v3671 = vmul.f32 %v3655, %v3669
    %v3673 = vlaneseq
    %v3674 = vshrl.u32 %v3673, 7
    %v3675 = vsub.s32 0, %v3674
    %v3676 = vrot.slane %v3643, %v3675
    %v3678 = vmul.f32 %v3670, %v3676
    %v3679 = vmul.f32 %v3671, %v3676
    %v3681 = vlaneseq
    %v3682 = vshrl.u32 %v3681, 7
    %v3683 = vsub.s32 0, %v3682
    %v3684 = vrot.slane %v3645, %v3683
    %v3686 = vadd.f32 %v3678, %v3684
    %v3687 = vadd.f32 %v3679, %v3684
    %s3688 = scalar_lea.vmem [#allocation13], 32
    %v3689 = vld [vmem:[%s3688] sm:$0xff]
    %v3690 = vld [vmem:[%s3688 + $0x8] sm:$0xff]
    %v3691 = vld [vmem:[%s3688 + $0x10] sm:$0xff]
    %v3692 = vld [vmem:[%s3688 + $0x18] sm:$0xff]
    %s3693 = scalar_lea.vmem [#allocation14], 1
    %v3694 = vld [vmem:[%s3693] sm:$0x1]
    %v3696 = vlaneseq
    %v3697 = vshrl.u32 %v3696, 7
    %v3698 = vsub.s32 0, %v3697
    %v3699 = vrot.slane %v3694, %v3698
    %v3702 = vsel %vm237, %v3686, 0
    %v3705 = vsel %vm237, %v3687, 0
    %3707 = vmatprep.subr.mxu0 0.0
    %3708 = vmatpush1.msra.mxu0 %v3689
    %3709 = vmatprep.subr.mxu0 0.0
    %3710 = vmatpush1.msra.mxu0 %v3690
    %3711 = vmatprep.subr.mxu0 0.0
    %3712 = vmatpush1.msra.mxu0 %v3691
    %3713 = vmatprep.subr.mxu0 0.0
    %3714 = vmatpush1.msra.mxu0 %v3692
    %3715 = vmatprep.subr.mxu0 0.0
    %3716 = vmatpush1.msra.mxu0 0.0
    %3717 = vmatprep.subr.mxu0 0.0
    %3718 = vmatpush1.msra.mxu0 0.0
    %3719 = vmatprep.subr.mxu0 0.0
    %3720 = vmatpush1.msra.mxu0 0.0
    %3721 = vmatprep.subr.mxu0 0.0
    %3722 = vmatpush1.msra.mxu0 0.0
    %3723 = vmatprep.subr.mxu0 0.0
    %3724 = vmatpush1.msra.mxu0 0.0
    %3725 = vmatprep.subr.mxu0 0.0
    %3726 = vmatpush1.msra.mxu0 0.0
    %3727 = vmatprep.subr.mxu0 0.0
    %3728 = vmatpush1.msra.mxu0 0.0
    %3729 = vmatprep.subr.mxu0 0.0
    %3730 = vmatpush1.msra.mxu0 0.0
    %3731 = vmatprep.subr.mxu0 0.0
    %3732 = vmatpush1.msra.mxu0 0.0
    %3733 = vmatprep.subr.mxu0 0.0
    %3734 = vmatpush1.msra.mxu0 0.0
    %3735 = vmatprep.subr.mxu0 0.0
    %3736 = vmatpush1.msra.mxu0 0.0
    %3737 = vmatprep.subr.mxu0 0.0
    %3738 = vmatpush1.msra.mxu0 0.0
    %3739 = vmatprep.subr.mxu0 0.0
    %3740 = vmatpush1.msra.mxu0 0.0
    %3741 = vmatprep.subr.mxu0 0.0
    %3742 = vmatpush1.msra.mxu0 0.0
    %3743 = vmatprep.subr.mxu0 0.0
    %3744 = vmatpush1.msra.mxu0 0.0
    %3745 = vmatprep.subr.mxu0 0.0
    %3746 = vmatpush1.msra.mxu0 0.0
    %3747 = vmatprep.subr.mxu0 0.0
    %3748 = vmatpush1.msra.mxu0 0.0
    %3749 = vmatprep.subr.mxu0 0.0
    %3750 = vmatpush1.msra.mxu0 0.0
    %3751 = vmatprep.subr.mxu0 0.0
    %3752 = vmatpush1.msra.mxu0 0.0
    %3753 = vmatprep.subr.mxu0 0.0
    %3754 = vmatpush1.msra.mxu0 0.0
    %3755 = vmatprep.subr.mxu0 0.0
    %3756 = vmatpush1.msra.mxu0 0.0
    %3757 = vmatprep.subr.mxu0 0.0
    %3758 = vmatpush1.msra.mxu0 0.0
    %3759 = vmatprep.subr.mxu0 0.0
    %3760 = vmatpush1.msra.mxu0 0.0
    %3761 = vmatprep.subr.mxu0 0.0
    %3762 = vmatpush1.msra.mxu0 0.0
    %3763 = vmatprep.subr.mxu0 0.0
    %3764 = vmatpush1.msra.mxu0 0.0
    %3765 = vmatprep.subr.mxu0 0.0
    %3766 = vmatpush1.msra.mxu0 0.0
    %3767 = vmatprep.subr.mxu0 0.0
    %3768 = vmatpush1.msra.mxu0 0.0
    %3769 = vmatprep.subr.mxu0 0.0
    %3770 = vmatpush1.msra.mxu0 0.0
    %3771 = vmatprep.mubr.f32.mxu0 0.0
    %3772 = vmatmul.mubr.f32.gmra.mrb[0].mxu0 %v3702
    %v3773 = vpop.f32.mrb[0].mxu0
    %v3774 = vadd.f32 %v3699, %v3773
    %v3775 = vpop.f32.mrb[0].mxu0
    %3776 = vmatprep.mubr.f32.mxu0 0.0
    %3777 = vmatmul.mubr.f32.gmra.mrb[0].mxu0 %v3705
    %v3778 = vpop.f32.mrb[0].mxu0
    %v3779 = vadd.f32 %v3699, %v3778
    %v3780 = vpop.f32.mrb[0].mxu0
    %3781 = vdwg.mxu0
    %v3782 = vmax.f32 %v3774, 0.0
    %v3783 = vmax.f32 %v3779, 0.0
    %s3784 = scalar_lea.vmem [#allocation16], 32
    %v3785 = vld [vmem:[%s3784] sm:$0xff]
    %v3786 = vld [vmem:[%s3784 + $0x8] sm:$0xff]
    %v3787 = vld [vmem:[%s3784 + $0x10] sm:$0xff]
    %v3788 = vld [vmem:[%s3784 + $0x18] sm:$0xff]
    %s3789 = scalar_lea.vmem [#allocation17], 1
    %v3790 = vld [vmem:[%s3789] sm:$0x1]
    %v3792 = vlaneseq
    %v3793 = vshrl.u32 %v3792, 7
    %v3794 = vsub.s32 0, %v3793
    %v3795 = vrot.slane %v3790, %v3794
    %v3798 = vsel %vm237, %v3782, 0
    %v3801 = vsel %vm237, %v3783, 0
    %3803 = vmatprep.subr.mxu0 0.0
    %3804 = vmatpush1.msra.mxu0 %v3785
    %3805 = vmatprep.subr.mxu0 0.0
    %3806 = vmatpush1.msra.mxu0 %v3786
    %3807 = vmatprep.subr.mxu0 0.0
    %3808 = vmatpush1.msra.mxu0 %v3787
    %3809 = vmatprep.subr.mxu0 0.0
    %3810 = vmatpush1.msra.mxu0 %v3788
    %3811 = vmatprep.subr.mxu0 0.0
    %3812 = vmatpush1.msra.mxu0 0.0
    %3813 = vmatprep.subr.mxu0 0.0
    %3814 = vmatpush1.msra.mxu0 0.0
    %3815 = vmatprep.subr.mxu0 0.0
    %3816 = vmatpush1.msra.mxu0 0.0
    %3817 = vmatprep.subr.mxu0 0.0
    %3818 = vmatpush1.msra.mxu0 0.0
    %3819 = vmatprep.subr.mxu0 0.0
    %3820 = vmatpush1.msra.mxu0 0.0
    %3821 = vmatprep.subr.mxu0 0.0
    %3822 = vmatpush1.msra.mxu0 0.0
    %3823 = vmatprep.subr.mxu0 0.0
    %3824 = vmatpush1.msra.mxu0 0.0
    %3825 = vmatprep.subr.mxu0 0.0
    %3826 = vmatpush1.msra.mxu0 0.0
    %3827 = vmatprep.subr.mxu0 0.0
    %3828 = vmatpush1.msra.mxu0 0.0
    %3829 = vmatprep.subr.mxu0 0.0
    %3830 = vmatpush1.msra.mxu0 0.0
    %3831 = vmatprep.subr.mxu0 0.0
    %3832 = vmatpush1.msra.mxu0 0.0
    %3833 = vmatprep.subr.mxu0 0.0
    %3834 = vmatpush1.msra.mxu0 0.0
    %3835 = vmatprep.subr.mxu0 0.0
    %3836 = vmatpush1.msra.mxu0 0.0
    %3837 = vmatprep.subr.mxu0 0.0
    %3838 = vmatpush1.msra.mxu0 0.0
    %3839 = vmatprep.subr.mxu0 0.0
    %3840 = vmatpush1.msra.mxu0 0.0
    %3841 = vmatprep.subr.mxu0 0.0
    %3842 = vmatpush1.msra.mxu0 0.0
    %3843 = vmatprep.subr.mxu0 0.0
    %3844 = vmatpush1.msra.mxu0 0.0
    %3845 = vmatprep.subr.mxu0 0.0
    %3846 = vmatpush1.msra.mxu0 0.0
    %3847 = vmatprep.subr.mxu0 0.0
    %3848 = vmatpush1.msra.mxu0 0.0
    %3849 = vmatprep.subr.mxu0 0.0
    %3850 = vmatpush1.msra.mxu0 0.0
    %3851 = vmatprep.subr.mxu0 0.0
    %3852 = vmatpush1.msra.mxu0 0.0
    %3853 = vmatprep.subr.mxu0 0.0
    %3854 = vmatpush1.msra.mxu0 0.0
    %3855 = vmatprep.subr.mxu0 0.0
    %3856 = vmatpush1.msra.mxu0 0.0
    %3857 = vmatprep.subr.mxu0 0.0
    %3858 = vmatpush1.msra.mxu0 0.0
    %3859 = vmatprep.subr.mxu0 0.0
    %3860 = vmatpush1.msra.mxu0 0.0
    %3861 = vmatprep.subr.mxu0 0.0
    %3862 = vmatpush1.msra.mxu0 0.0
    %3863 = vmatprep.subr.mxu0 0.0
    %3864 = vmatpush1.msra.mxu0 0.0
    %3865 = vmatprep.subr.mxu0 0.0
    %3866 = vmatpush1.msra.mxu0 0.0
    %3867 = vmatprep.mubr.f32.mxu0 0.0
    %3868 = vmatmul.mubr.f32.gmra.mrb[0].mxu0 %v3798
    %v3869 = vpop.f32.mrb[0].mxu0
    %v3870 = vadd.f32 %v3795, %v3869
    %v3871 = vpop.f32.mrb[0].mxu0
    %3872 = vmatprep.mubr.f32.mxu0 0.0
    %3873 = vmatmul.mubr.f32.gmra.mrb[0].mxu0 %v3801
    %v3874 = vpop.f32.mrb[0].mxu0
    %v3875 = vadd.f32 %v3795, %v3874
    %v3876 = vpop.f32.mrb[0].mxu0
    %3877 = vdwg.mxu0
    %v3878 = vmax.f32 %v3870, 0.0
    %v3879 = vmax.f32 %v3875, 0.0
    %v3880 = vadd.f32 %v3686, %v3878
    %v3881 = vadd.f32 %v3687, %v3879
    %s3882 = scalar_lea.vmem [#allocation19], 1
    %v3883 = vld [vmem:[%s3882] sm:$0x1]
    %s3884 = scalar_lea.vmem [#allocation20], 1
    %v3885 = vld [vmem:[%s3884] sm:$0x1]
    %v3886 = vsel %vm237, %v3880, 0.0
    %3887 = vadd.xlane.f32.xlu0 %v3886
    %v3888 = vpop.xlane.xlu0 %3887
    %v3889 = vsel %vm237, %v3881, 0.0
    %3890 = vadd.xlane.f32.xlu0 %v3889
    %v3891 = vpop.xlane.xlu0 %3890
    %v3892 = vmul.f32 %v3888, %v244
    %v3893 = vmul.f32 %v3891, %v244
    %v3894 = vsub.f32 %v3880, %v3892
    %v3895 = vsub.f32 %v3881, %v3893
    %v3896 = vmul.f32 %v3894, %v3894
    %v3897 = vmul.f32 %v3895, %v3895
    %v3898 = vsel %vm237, %v3896, 0.0
    %3899 = vadd.xlane.f32.xlu0 %v3898
    %v3900 = vpop.xlane.xlu0 %3899
    %v3901 = vsel %vm237, %v3897, 0.0
    %3902 = vadd.xlane.f32.xlu0 %v3901
    %v3903 = vpop.xlane.xlu0 %3902
    %v3904 = vmul.f32 %v3900, %v244
    %v3905 = vmul.f32 %v3903, %v244
    %v3906 = vadd.f32 %v3904, 1e-05
    %v3907 = vadd.f32 %v3905, 1e-05
    %v3908 = vrsqrt.pop %v3906
    %v3909 = vrsqrt.pop %v3907
    %v3910 = vmul.f32 %v3894, %v3908
    %v3911 = vmul.f32 %v3895, %v3909
    %v3913 = vlaneseq
    %v3914 = vshrl.u32 %v3913, 7
    %v3915 = vsub.s32 0, %v3914
    %v3916 = vrot.slane %v3883, %v3915
    %v3918 = vmul.f32 %v3910, %v3916
    %v3919 = vmul.f32 %v3911, %v3916
    %v3921 = vlaneseq
    %v3922 = vshrl.u32 %v3921, 7
    %v3923 = vsub.s32 0, %v3922
    %v3924 = vrot.slane %v3885, %v3923
    %v3926 = vadd.f32 %v3918, %v3924
    %v3927 = vadd.f32 %v3919, %v3924
    %v3928 = vmax.f32 %v3926, %v3927
    %v3929 = vld [vmem:[%s16] sm:$0xff]
    %v3930 = vld [vmem:[%s16 + $0x8] sm:$0xff]
    %v3931 = vld [vmem:[%s16 + $0x10] sm:$0xff]
    %v3932 = vld [vmem:[%s16 + $0x18] sm:$0xff]
    %v3933 = vld [vmem:[#allocation22] sm:$0x1]
    %v3935 = vlaneseq
    %v3936 = vshrl.u32 %v3935, 7
    %v3937 = vsub.s32 0, %v3936
    %v3938 = vrot.slane %v3933, %v3937
    %v3941 = vsel %vm237, %v3928, 0
    %3943 = vmatprep.subr.mxu0 0.0
    %3944 = vmatpush1.msra.mxu0 %v3929
    %3945 = vmatprep.subr.mxu0 0.0
    %3946 = vmatpush1.msra.mxu0 %v3930
    %3947 = vmatprep.subr.mxu0 0.0
    %3948 = vmatpush1.msra.mxu0 %v3931
    %3949 = vmatprep.subr.mxu0 0.0
    %3950 = vmatpush1.msra.mxu0 %v3932
    %3951 = vmatprep.subr.mxu0 0.0
    %3952 = vmatpush1.msra.mxu0 0.0
    %3953 = vmatprep.subr.mxu0 0.0
    %3954 = vmatpush1.msra.mxu0 0.0
    %3955 = vmatprep.subr.mxu0 0.0
    %3956 = vmatpush1.msra.mxu0 0.0
    %3957 = vmatprep.subr.mxu0 0.0
    %3958 = vmatpush1.msra.mxu0 0.0
    %3959 = vmatprep.subr.mxu0 0.0
    %3960 = vmatpush1.msra.mxu0 0.0
    %3961 = vmatprep.subr.mxu0 0.0
    %3962 = vmatpush1.msra.mxu0 0.0
    %3963 = vmatprep.subr.mxu0 0.0
    %3964 = vmatpush1.msra.mxu0 0.0
    %3965 = vmatprep.subr.mxu0 0.0
    %3966 = vmatpush1.msra.mxu0 0.0
    %3967 = vmatprep.subr.mxu0 0.0
    %3968 = vmatpush1.msra.mxu0 0.0
    %3969 = vmatprep.subr.mxu0 0.0
    %3970 = vmatpush1.msra.mxu0 0.0
    %3971 = vmatprep.subr.mxu0 0.0
    %3972 = vmatpush1.msra.mxu0 0.0
    %3973 = vmatprep.subr.mxu0 0.0
    %3974 = vmatpush1.msra.mxu0 0.0
    %3975 = vmatprep.subr.mxu0 0.0
    %3976 = vmatpush1.msra.mxu0 0.0
    %3977 = vmatprep.subr.mxu0 0.0
    %3978 = vmatpush1.msra.mxu0 0.0
    %3979 = vmatprep.subr.mxu0 0.0
    %3980 = vmatpush1.msra.mxu0 0.0
    %3981 = vmatprep.subr.mxu0 0.0
    %3982 = vmatpush1.msra.mxu0 0.0
    %3983 = vmatprep.subr.mxu0 0.0
    %3984 = vmatpush1.msra.mxu0 0.0
    %3985 = vmatprep.subr.mxu0 0.0
    %3986 = vmatpush1.msra.mxu0 0.0
    %3987 = vmatprep.subr.mxu0 0.0
    %3988 = vmatpush1.msra.mxu0 0.0
    %3989 = vmatprep.subr.mxu0 0.0
    %3990 = vmatpush1.msra.mxu0 0.0
    %3991 = vmatprep.subr.mxu0 0.0
    %3992 = vmatpush1.msra.mxu0 0.0
    %3993 = vmatprep.subr.mxu0 0.0
    %3994 = vmatpush1.msra.mxu0 0.0
    %3995 = vmatprep.subr.mxu0 0.0
    %3996 = vmatpush1.msra.mxu0 0.0
    %3997 = vmatprep.subr.mxu0 0.0
    %3998 = vmatpush1.msra.mxu0 0.0
    %3999 = vmatprep.subr.mxu0 0.0
    %4000 = vmatpush1.msra.mxu0 0.0
    %4001 = vmatprep.subr.mxu0 0.0
    %4002 = vmatpush1.msra.mxu0 0.0
    %4003 = vmatprep.subr.mxu0 0.0
    %4004 = vmatpush1.msra.mxu0 0.0
    %4005 = vmatprep.subr.mxu0 0.0
    %4006 = vmatpush1.msra.mxu0 0.0
    %4007 = vmatprep.mubr.f32.mxu0 0.0
    %4008 = vmatmul.mubr.f32.gmra.mrb[0].mxu0 %v3941
    %v4009 = vpop.f32.mrb[0].mxu0
    %v4010 = vadd.f32 %v3938, %v4009
    %v4011 = vpop.f32.mrb[0].mxu0
    %4012 = vdwg.mxu0
    %v4013 = vsel %vm383, %v4010, -inf
    %4014 = vmax.xlane.f32.xlu0 %v4013
    %v4015 = vpop.xlane.xlu0 %4014
    %v4016 = vsub.f32 %v4010, %v4015
    %v4017 = vmul.f32 %v4016, 1.442695
    %v4018 = vpow.pop %v4017
    %v4019 = vsel %vm383, %v4018, 0.0
    %4020 = vadd.xlane.f32.xlu0 %v4019
    %v4021 = vpop.xlane.xlu0 %4020
    %v4022 = vlog2.pop %v4021
    %v4023 = vmul.f32 %v4022, 0.6931472
    %v4024 = vsub.f32 %v4016, %v4023
    %4025 = vst.msk [vmem:[#allocation23] sm:$0xff] %vm383, %v4024
    // Predicated region
    $region126: #{transformer_encoder_forward.1} parent=1 // pred_check
      _
    $region127: #{transformer_encoder_forward.1} parent=1 // pred_check_branch
      %4027 = sbr.rel (0) target = $region129
    $region128: #{transformer_encoder_forward.1} parent=1 // pred_region
      %s4029 = ssub.s32 128, 128
      %4030 = vsyncadd [#allocation4], %s4029
      %s4032 = sshll.u32 [#allocation23], 4
      %s4033 = int_to_ptr.vmem [resolvable:$true] %s4032
      %4035 = dma.vmem_to_hbm [thread:$0]  %s4033, 128, %s18, [#allocation4]
    $region129: #{transformer_encoder_forward.1} parent=1 // pred_fallthru
      _
    // Predicated region
    $region130: #{transformer_encoder_forward.1} parent=1 // pred_check
      _
    $region131: #{transformer_encoder_forward.1} parent=1 // pred_check_branch
      %4037 = sbr.rel (0) target = $region133
    $region132: #{transformer_encoder_forward.1} parent=1 // pred_region
      %4038 = dma.done [#allocation4], 128
    $region133: #{transformer_encoder_forward.1} parent=1 // pred_fallthru
      _
    %4039 = vsyncpa [#allocation3], 1
    %4040 = vsyncpa [#allocation6], 1
    %4041 = vsyncpa [#allocation9], 1
    %4042 = vsyncpa [#allocation12], 1
    %4043 = vsyncpa [#allocation15], 1
    %4044 = vsyncpa [#allocation18], 1
    %4045 = vsyncpa [#allocation21], 1
    %4046 = vsyncpa [#allocation4], 1

</llo_original>
